<compile_context>
chip_gen: v7x
topology: tpu7x:2x2x1
jax: 0.10.0
libtpu: 0.0.40
codegen_flags: <defaults>
</compile_context>

<pallas_src>
import jax
import jax.numpy as jnp
from jax.experimental import pallas as pl
from jax.experimental.pallas import tpu as pltpu

INPUT_CH = 3
INPUT_CH_VIEWS = 3
IN_FEAT = INPUT_CH + INPUT_CH_VIEWS   # 6
IN_PAD = 8                            # feature dim padded to 8 sublanes
HIDDEN_DIM = 64
GEO_FEAT_DIM = 15
OUT_CH = 4                            # [rgb(3), sigma(1)]
OUT_PAD = 8                           # output rows padded to 8 sublanes


def _nerf_small_kernel(xT_ref, win_ref, ws1_ref, wgeo_ref,
                       wc1_ref, wc2_ref, wfin_ref, out_ref):
    f32, bf16 = jnp.float32, jnp.bfloat16

    xT = xT_ref[...]                                                    # (8, tm) bf16

    # Fused input layer: rows 0..63 = (pts @ ws0)^T, rows 64..127 = (views @ wcv)^T.
    h0 = jnp.dot(win_ref[...], xT, preferred_element_type=f32)          # (128, tm)
    h1 = jnp.maximum(h0[:HIDDEN_DIM, :], 0.0)                           # relu(pts@ws0)^T
    hv = h0[HIDDEN_DIM:, :]                                             # (views@wcv)^T

    # Sigma-net hidden layer.
    h2 = jnp.maximum(jnp.dot(ws1_ref[...], h1.astype(bf16),
                             preferred_element_type=f32), 0.0)          # (64, tm)
    h2b = h2.astype(bf16)

    # Fused geo path: c = relu(views@wcv + h2 @ (ws2[:,1:] @ wcg)), transposed.
    c = jnp.maximum(hv + jnp.dot(wgeo_ref[...], h2b,
                                 preferred_element_type=f32), 0.0)      # (64, tm)
    c = jnp.maximum(jnp.dot(wc1_ref[...], c.astype(bf16),
                            preferred_element_type=f32), 0.0)
    c = jnp.maximum(jnp.dot(wc2_ref[...], c.astype(bf16),
                            preferred_element_type=f32), 0.0)

    # Single merged output matmul: rgb from c (cols 0..63 of W_fin^T), sigma from h2
    # (cols 64..127). Rows 4..7 of the result are zero padding.
    ch = jnp.concatenate([c.astype(bf16), h2b], axis=0)                 # (128, tm) bf16
    out_ref[...] = jnp.dot(wfin_ref[...], ch,
                           preferred_element_type=f32)                  # (8, tm) unmasked


def make_params(key):
    """Deterministic (in_dim, out_dim) weight matrices, no biases (as in PyTorch)."""
    dims_sigma = [(INPUT_CH, HIDDEN_DIM),
                  (HIDDEN_DIM, HIDDEN_DIM),
                  (HIDDEN_DIM, 1 + GEO_FEAT_DIM)]
    dims_color = [(INPUT_CH_VIEWS + GEO_FEAT_DIM, HIDDEN_DIM),
                  (HIDDEN_DIM, HIDDEN_DIM),
                  (HIDDEN_DIM, HIDDEN_DIM),
                  (HIDDEN_DIM, 3)]
    keys = jax.random.split(key, len(dims_sigma) + len(dims_color))
    sigma_w = [jax.random.normal(k, d, jnp.float32) * 0.1
               for k, d in zip(keys[:3], dims_sigma)]
    color_w = [jax.random.normal(k, d, jnp.float32) * 0.1
               for k, d in zip(keys[3:], dims_color)]
    return sigma_w, color_w


def _prepare_fused_weights(sigma_w, color_w):
    """Wrapper-side algebraic fusion, transposition (feature-major) and bf16 cast."""
    ws0, ws1, ws2 = sigma_w                 # (3,64) (64,64) (64,16)
    wc0, wc1, wc2, wc3 = color_w            # (18,64) (64,64) (64,64) (64,3)
    wcv = wc0[:INPUT_CH_VIEWS, :]           # (3, 64)
    wcg = wc0[INPUT_CH_VIEWS:, :]           # (15, 64)
    f32 = jnp.float32

    # Transposed block-diagonal input weight (128, 8): [pts;views] handled in one matmul.
    w_inT = jnp.zeros((2 * HIDDEN_DIM, IN_PAD), f32)
    w_inT = w_inT.at[:HIDDEN_DIM, :INPUT_CH].set(ws0.T)
    w_inT = w_inT.at[HIDDEN_DIM:, INPUT_CH:IN_FEAT].set(wcv.T)

    # Exact fusion of sigma layer 2 (geo slice) with color layer 0 (geo slice).
    # NOTE: computed in f32 then cast once to bf16 -> slightly different rounding than
    # two separate matmuls; this dominates the (loose) comparison tolerance.
    w_geoT = (ws2[:, 1:] @ wcg).T           # (64, 64)

    # Merged output weight (8, 128): rows 0..2 <- rgb head (wc3^T on cols 0..63),
    # row 3 <- sigma head (ws2[:,0] on cols 64..127), rows 4..7 zero.
    w_finT = jnp.zeros((OUT_PAD, 2 * HIDDEN_DIM), f32)
    w_finT = w_finT.at[:3, :HIDDEN_DIM].set(wc3.T)
    w_finT = w_finT.at[3, HIDDEN_DIM:].set(ws2[:, 0])

    bf = jnp.bfloat16
    return (w_inT.astype(bf), ws1.T.astype(bf), w_geoT.astype(bf),
            wc1.T.astype(bf), wc2.T.astype(bf), w_finT.astype(bf))


def nerf_small_forward(x, sigma_w, color_w, *, tm=2048):
    N, F = x.shape
    assert F == IN_FEAT

    weights = _prepare_fused_weights(sigma_w, color_w)

    # Feature-major input: (8, N) bf16 (rows 6,7 zero). Single fused XLA
    # cast+transpose+pad; no (n_pad, F) zero-padded copy of x.
    xT = jnp.pad(x.T.astype(jnp.bfloat16), ((0, IN_PAD - IN_FEAT), (0, 0)))

    # Keep tile a multiple of 128 lanes; don't let it wildly exceed the array.
    # (On v7x prefer tm that yields an even tile count for 2-TC balance.)
    tm = min(tm, max(128, pl.cdiv(N, 128) * 128))
    grid = (pl.cdiv(N, tm),)   # ragged final block handled by Pallas (masked on write)

    def wspec(shape):
        return pl.BlockSpec(shape, lambda i: (0, 0))

    outT = pl.pallas_call(
        _nerf_small_kernel,
        out_shape=jax.ShapeDtypeStruct((OUT_PAD, N), jnp.float32),
        grid_spec=pltpu.PrefetchScalarGridSpec(
            num_scalar_prefetch=0,
            grid=grid,
            in_specs=[pl.BlockSpec((IN_PAD, tm), lambda i: (0, i))]
                     + [wspec(w.shape) for w in weights],
            out_specs=pl.BlockSpec((OUT_PAD, tm), lambda i: (0, i)),
        ),
        compiler_params=pltpu.CompilerParams(
            dimension_semantics=("parallel",),
            vmem_limit_bytes=48 * 1024 * 1024),
    )(xT, *weights)

    # (8, N) -> (N, 4): rgb rows 0..2, sigma row 3.
    return outT[:OUT_CH, :].T


def nerf_small_reference(x, sigma_w, color_w):
    """Pure-JAX f32 reference mirroring the PyTorch forward exactly."""
    pts, views = x[:, :INPUT_CH], x[:, INPUT_CH:]
    h = pts
    for l, w in enumerate(sigma_w):
        h = h @ w
        if l != len(sigma_w) - 1:
            h = jnp.maximum(h, 0.0)
    sigma, geo = h[:, :1], h[:, 1:]
    h = jnp.concatenate([views, geo], axis=-1)
    for l, w in enumerate(color_w):
        h = h @ w
        if l != len(color_w) - 1:
            h = jnp.maximum(h, 0.0)
    return jnp.concatenate([h, sigma], axis=-1)


if __name__ == "__main__":
    key = jax.random.PRNGKey(0)
    k_x, k_w = jax.random.split(key)

    N = 2500  # not a multiple of the tile -> exercises ragged final block + grid of 2
    x = jax.random.normal(k_x, (N, IN_FEAT), jnp.float32)
    sigma_w, color_w = make_params(k_w)

    out = nerf_small_forward(x, sigma_w, color_w, tm=2048)
    out = jax.block_until_ready(out)

    ref = nerf_small_reference(x, sigma_w, color_w)
    assert out.shape == (N, OUT_CH)

    # bf16 dot operands + exact algebraic fusions -> compare with loose tolerance.
    err = float(jnp.max(jnp.abs(out - ref)))
    scale = float(jnp.max(jnp.abs(ref)))
    assert err <= 5e-3 + 3e-2 * scale, (err, scale)
    print("KERNEL_OK")
</pallas_src>

<mosaic_0001>
module attributes {stable_mosaic.version = 11 : i64} {
  func.func @_nerf_small_kernel(%arg0: i32, %arg1: memref<8x2048xbf16, #tpu.memory_space<vmem>>, %arg2: memref<128x8xbf16, #tpu.memory_space<vmem>>, %arg3: memref<64x64xbf16, #tpu.memory_space<vmem>>, %arg4: memref<64x64xbf16, #tpu.memory_space<vmem>>, %arg5: memref<64x64xbf16, #tpu.memory_space<vmem>>, %arg6: memref<64x64xbf16, #tpu.memory_space<vmem>>, %arg7: memref<8x128xbf16, #tpu.memory_space<vmem>>, %arg8: memref<8x2048xf32, #tpu.memory_space<vmem>>) attributes {dimension_semantics = [#tpu.dimension_semantics<parallel>], iteration_bounds = array<i64: 2>, scalar_prefetch = 0 : i64, scratch_operands = 0 : i64, tpu.core_type = #tpu.core_type<tc>, window_params = [{transform_indices = @transform_0, window_bounds = array<i64: 8, 2048>}, {pipeline_mode = #tpu.pipeline_mode<synchronous>, transform_indices = @transform_1, window_bounds = array<i64: 128, 8>}, {pipeline_mode = #tpu.pipeline_mode<synchronous>, transform_indices = @transform_2, window_bounds = array<i64: 64, 64>}, {pipeline_mode = #tpu.pipeline_mode<synchronous>, transform_indices = @transform_3, window_bounds = array<i64: 64, 64>}, {pipeline_mode = #tpu.pipeline_mode<synchronous>, transform_indices = @transform_4, window_bounds = array<i64: 64, 64>}, {pipeline_mode = #tpu.pipeline_mode<synchronous>, transform_indices = @transform_5, window_bounds = array<i64: 64, 64>}, {pipeline_mode = #tpu.pipeline_mode<synchronous>, transform_indices = @transform_6, window_bounds = array<i64: 8, 128>}, {transform_indices = @transform_7, window_bounds = array<i64: 8, 2048>}]} {
    %c0 = arith.constant 0 : index
    %c0_0 = arith.constant 0 : index
    %0 = vector.load %arg1[%c0, %c0_0] : memref<8x2048xbf16, #tpu.memory_space<vmem>>, vector<8x2048xbf16>
    %c0_1 = arith.constant 0 : index
    %c0_2 = arith.constant 0 : index
    %1 = vector.load %arg2[%c0_1, %c0_2] : memref<128x8xbf16, #tpu.memory_space<vmem>>, vector<128x8xbf16>
    %cst = arith.constant dense<0.000000e+00> : vector<128x2048xf32>
    %2 = tpu.matmul %1, %0, %cst {dimension_numbers = #tpu.dot_dimension_numbers<[1], [0], [0], [1], [0, 0, 1, 1], [], []>} : vector<128x8xbf16>, vector<8x2048xbf16>, vector<128x2048xf32> -> vector<128x2048xf32>
    %3 = vector.extract_strided_slice %2 {offsets = [0, 0], sizes = [64, 2048], strides = [1, 1]} : vector<128x2048xf32> to vector<64x2048xf32>
    %cst_3 = arith.constant 0.000000e+00 : f32
    %4 = vector.broadcast %cst_3 : f32 to vector<64x2048xf32>
    %5 = arith.maximumf %3, %4 : vector<64x2048xf32>
    %6 = vector.extract_strided_slice %2 {offsets = [64, 0], sizes = [64, 2048], strides = [1, 1]} : vector<128x2048xf32> to vector<64x2048xf32>
    %c0_4 = arith.constant 0 : index
    %c0_5 = arith.constant 0 : index
    %7 = vector.load %arg3[%c0_4, %c0_5] : memref<64x64xbf16, #tpu.memory_space<vmem>>, vector<64x64xbf16>
    %8 = arith.truncf %5 : vector<64x2048xf32> to vector<64x2048xbf16>
    %cst_6 = arith.constant dense<0.000000e+00> : vector<64x2048xf32>
    %9 = tpu.matmul %7, %8, %cst_6 {dimension_numbers = #tpu.dot_dimension_numbers<[1], [0], [0], [1], [0, 0, 1, 1], [], []>} : vector<64x64xbf16>, vector<64x2048xbf16>, vector<64x2048xf32> -> vector<64x2048xf32>
    %cst_7 = arith.constant 0.000000e+00 : f32
    %10 = vector.broadcast %cst_7 : f32 to vector<64x2048xf32>
    %11 = arith.maximumf %9, %10 : vector<64x2048xf32>
    %12 = arith.truncf %11 : vector<64x2048xf32> to vector<64x2048xbf16>
    %c0_8 = arith.constant 0 : index
    %c0_9 = arith.constant 0 : index
    %13 = vector.load %arg4[%c0_8, %c0_9] : memref<64x64xbf16, #tpu.memory_space<vmem>>, vector<64x64xbf16>
    %cst_10 = arith.constant dense<0.000000e+00> : vector<64x2048xf32>
    %14 = tpu.matmul %13, %12, %cst_10 {dimension_numbers = #tpu.dot_dimension_numbers<[1], [0], [0], [1], [0, 0, 1, 1], [], []>} : vector<64x64xbf16>, vector<64x2048xbf16>, vector<64x2048xf32> -> vector<64x2048xf32>
    %15 = arith.addf %6, %14 : vector<64x2048xf32>
    %cst_11 = arith.constant 0.000000e+00 : f32
    %16 = vector.broadcast %cst_11 : f32 to vector<64x2048xf32>
    %17 = arith.maximumf %15, %16 : vector<64x2048xf32>
    %c0_12 = arith.constant 0 : index
    %c0_13 = arith.constant 0 : index
    %18 = vector.load %arg5[%c0_12, %c0_13] : memref<64x64xbf16, #tpu.memory_space<vmem>>, vector<64x64xbf16>
    %19 = arith.truncf %17 : vector<64x2048xf32> to vector<64x2048xbf16>
    %cst_14 = arith.constant dense<0.000000e+00> : vector<64x2048xf32>
    %20 = tpu.matmul %18, %19, %cst_14 {dimension_numbers = #tpu.dot_dimension_numbers<[1], [0], [0], [1], [0, 0, 1, 1], [], []>} : vector<64x64xbf16>, vector<64x2048xbf16>, vector<64x2048xf32> -> vector<64x2048xf32>
    %cst_15 = arith.constant 0.000000e+00 : f32
    %21 = vector.broadcast %cst_15 : f32 to vector<64x2048xf32>
    %22 = arith.maximumf %20, %21 : vector<64x2048xf32>
    %c0_16 = arith.constant 0 : index
    %c0_17 = arith.constant 0 : index
    %23 = vector.load %arg6[%c0_16, %c0_17] : memref<64x64xbf16, #tpu.memory_space<vmem>>, vector<64x64xbf16>
    %24 = arith.truncf %22 : vector<64x2048xf32> to vector<64x2048xbf16>
    %cst_18 = arith.constant dense<0.000000e+00> : vector<64x2048xf32>
    %25 = tpu.matmul %23, %24, %cst_18 {dimension_numbers = #tpu.dot_dimension_numbers<[1], [0], [0], [1], [0, 0, 1, 1], [], []>} : vector<64x64xbf16>, vector<64x2048xbf16>, vector<64x2048xf32> -> vector<64x2048xf32>
    %cst_19 = arith.constant 0.000000e+00 : f32
    %26 = vector.broadcast %cst_19 : f32 to vector<64x2048xf32>
    %27 = arith.maximumf %25, %26 : vector<64x2048xf32>
    %28 = arith.truncf %27 : vector<64x2048xf32> to vector<64x2048xbf16>
    %29 = tpu.concatenate %28, %12 in 0 : vector<64x2048xbf16>, vector<64x2048xbf16> -> vector<128x2048xbf16>
    %c0_20 = arith.constant 0 : index
    %c0_21 = arith.constant 0 : index
    %30 = vector.load %arg7[%c0_20, %c0_21] : memref<8x128xbf16, #tpu.memory_space<vmem>>, vector<8x128xbf16>
    %cst_22 = arith.constant dense<0.000000e+00> : vector<8x2048xf32>
    %31 = tpu.matmul %30, %29, %cst_22 {dimension_numbers = #tpu.dot_dimension_numbers<[1], [0], [0], [1], [0, 0, 1, 1], [], []>} : vector<8x128xbf16>, vector<128x2048xbf16>, vector<8x2048xf32> -> vector<8x2048xf32>
    %c0_23 = arith.constant 0 : index
    %c0_24 = arith.constant 0 : index
    %32 = vector.load %arg8[%c0_23, %c0_24] : memref<8x2048xf32, #tpu.memory_space<vmem>>, vector<8x2048xf32>
    tpu.vector_store %arg8[%c0_23, %c0_24], %31 {strides = array<i32>} : memref<8x2048xf32, #tpu.memory_space<vmem>>, vector<8x2048xf32>,
    return
  }
  func.func @transform_0(%arg0: i32) -> (i32, i32) {
    %c0_i32 = arith.constant 0 : i32
    %c0_i32_0 = arith.constant 0 : i32
    return %c0_i32, %arg0 : i32, i32
  }
  func.func @transform_1(%arg0: i32) -> (i32, i32) {
    %c0_i32 = arith.constant 0 : i32
    %c0_i32_0 = arith.constant 0 : i32
    %c0_i32_1 = arith.constant 0 : i32
    return %c0_i32, %c0_i32_0 : i32, i32
  }
  func.func @transform_2(%arg0: i32) -> (i32, i32) {
    %c0_i32 = arith.constant 0 : i32
    %c0_i32_0 = arith.constant 0 : i32
    %c0_i32_1 = arith.constant 0 : i32
    return %c0_i32, %c0_i32_0 : i32, i32
  }
  func.func @transform_3(%arg0: i32) -> (i32, i32) {
    %c0_i32 = arith.constant 0 : i32
    %c0_i32_0 = arith.constant 0 : i32
    %c0_i32_1 = arith.constant 0 : i32
    return %c0_i32, %c0_i32_0 : i32, i32
  }
  func.func @transform_4(%arg0: i32) -> (i32, i32) {
    %c0_i32 = arith.constant 0 : i32
    %c0_i32_0 = arith.constant 0 : i32
    %c0_i32_1 = arith.constant 0 : i32
    return %c0_i32, %c0_i32_0 : i32, i32
  }
  func.func @transform_5(%arg0: i32) -> (i32, i32) {
    %c0_i32 = arith.constant 0 : i32
    %c0_i32_0 = arith.constant 0 : i32
    %c0_i32_1 = arith.constant 0 : i32
    return %c0_i32, %c0_i32_0 : i32, i32
  }
  func.func @transform_6(%arg0: i32) -> (i32, i32) {
    %c0_i32 = arith.constant 0 : i32
    %c0_i32_0 = arith.constant 0 : i32
    %c0_i32_1 = arith.constant 0 : i32
    return %c0_i32, %c0_i32_0 : i32, i32
  }
  func.func @transform_7(%arg0: i32) -> (i32, i32) {
    %c0_i32 = arith.constant 0 : i32
    %c0_i32_0 = arith.constant 0 : i32
    return %c0_i32, %arg0 : i32, i32
  }
}

</mosaic_0001>

<llo_original>
// kernel: tpu_custom_call.1
$region0: #{tpu_custom_call.1}
  #allocation0 [shape = 'u32[]', space=smem, size = 0x4, offset = 0x4, fixed_abs, tag = 'smem constant byte address 0x4 - core index']
  #allocation1 [shape = 'u32[144,128]{1,0:T(1,128)}', space=vmem, size = 0x12000, scoped, tag = 'internal scratch']
  %s0 = inlined_call_operand.hbm [shape: bf16[8,2500], index: 0, kind: input, shape index: {}]
  %s1 = inlined_call_operand.vmem [shape: bf16[128,8], index: 1, kind: input, shape index: {}]
  %s2 = inlined_call_operand.vmem [shape: bf16[64,64], index: 2, kind: input, shape index: {}]
  %s3 = inlined_call_operand.vmem [shape: bf16[64,64], index: 3, kind: input, shape index: {}]
  %s4 = inlined_call_operand.hbm [shape: bf16[64,64], index: 4, kind: input, shape index: {}]
  %s5 = inlined_call_operand.hbm [shape: bf16[64,64], index: 5, kind: input, shape index: {}]
  %s6 = inlined_call_operand.vmem [shape: bf16[8,128], index: 6, kind: input, shape index: {}]
  %s7 = inlined_call_operand.hbm [shape: f32[8,2500], index: 7, kind: output, shape index: {}]
  %s8 = sld [smem:[#allocation0]]
  $region73: #{tpu_custom_call.1} parent=0
    _
  %s10 = ssub.s32 1, %s8
  %s11 = scalar_select 0, %s10, %s8
  $region1: #{tpu_custom_call.1} parent=0
    #allocation2 [shape = 'u8[65536]{0}', space=vmem, size = 0x10000, scoped, tag = 'input window, operand 0']
    #allocation3 [shape = 's32[2]{0}', space=sflag, size = 0x8, scoped, tag = 'scoped memory for tpu_custom_call.1']
    #allocation4 [shape = 's32[2]{0}', space=sflag, size = 0x8, scoped, tag = 'scoped memory for tpu_custom_call.1']
    #allocation5 [shape = 'u8[16384]{0}', space=vmem, size = 0x4000, scoped, tag = 'input window, operand 4, single buffered']
    #allocation6 [shape = 's32[1]{0}', space=sflag, size = 0x4, scoped, tag = 'scoped memory for tpu_custom_call.1']
    #allocation7 [shape = 'u8[16384]{0}', space=vmem, size = 0x4000, scoped, tag = 'input window, operand 5, single buffered']
    #allocation8 [shape = 'u8[131072]{0}', space=vmem, size = 0x20000, scoped, tag = 'output window, operand 0']
    %12 = vsyncpa [#allocation3], 0
    %s13 = scalar_lea.sflag [#allocation3], 1
    %14 = vsyncpa %s13, 0
    %15 = vsyncpa [#allocation6], 0
    %16 = vsyncpa [#allocation4], 0
    %s17 = scalar_lea.sflag [#allocation4], 1
    %18 = vsyncpa %s17, 0
    loop: start=0, step=1, limit=4
    $region2: #{tpu_custom_call.1} parent=1 // loop_pre_header
      _
    $region3: #{tpu_custom_call.1} parent=1 // loop_header
      %s20 = sphi 0, %s24
      %p21 = scmp.ge.s32.totalorder %s20, 4
      %s30 = sphi 0, %s32
      %s33 = sphi 0, %s30
      %s34 = sphi 0, %s33
      %s50 = sphi 0, %s34
      %s54 = sphi 0, %s54
      %s56 = sphi 0, %s54
      %s57 = sphi 0, %s56
      %s71 = sphi 0, %s57
      %s75 = sphi 0, %s75
      %s77 = sphi 0, %s75
      %s78 = sphi 0, %s77
      %s92 = sphi 0, %s78
      %s96 = sphi 0, %s96
      %s98 = sphi 0, %s96
      %s99 = sphi 0, %s98
      %s113 = sphi 0, %s99
      %s117 = sphi 0, %s117
      %s119 = sphi 0, %s117
      %s120 = sphi 0, %s119
      %s134 = sphi 0, %s120
      %s138 = sphi 0, %s138
      %s140 = sphi 0, %s138
      %s141 = sphi 0, %s140
      %s155 = sphi 0, %s141
      %s159 = sphi 0, %s159
      %s161 = sphi 0, %s159
      %s162 = sphi 0, %s161
      %s176 = sphi 0, %s162
      %s182 = sphi 0, %s184
      %s185 = sphi 0, %s182
      %s186 = sphi 0, %s185
      %s202 = sphi 0, %s186
    $region4: #{tpu_custom_call.1} parent=1 // loop_header_branch
      %23 = sbr.rel (%p21) target = $region8
    $region5: #{tpu_custom_call.1} parent=1 // loop_body
      %s25 = ssub.s32 %s20, 1
      %s26 = ssub.s32 %s20, 2
      %s27 = sadd.s32 %s20, 1
      %s28 = ssub.s32 %s20, %s27
      %p29 = scmp.eq.s32.totalorder %s28, 0
      %s31 = sadd.s32 %s30, 1
      %s32 = scalar_select %p29, %s30, %s31
      %p35 = pneg %p29
      %p36 = scmp.eq.s32.totalorder %s20, 1
      %p37 = por %p35, %p36
      %p38 = scmp.ne.s32.totalorder %s30, %s33
      %p39 = scmp.eq.s32.totalorder %s20, 0
      %p40 = por %p38, %p39
      %p41 = scmp.ne.s32.totalorder %s30, %s33
      %p42 = scmp.eq.s32.totalorder %s25, 1
      %p43 = por %p41, %p42
      %p44 = scmp.ne.s32.totalorder %s33, %s34
      %p45 = scmp.eq.s32.totalorder %s25, 0
      %p46 = por %p44, %p45
      %p47 = scmp.ne.s32.totalorder %s33, %s34
      %p48 = scmp.eq.s32.totalorder %s26, 1
      %p49 = por %p47, %p48
      %p51 = scmp.ne.s32.totalorder %s34, %s50
      %p52 = scmp.eq.s32.totalorder %s26, 0
      %p53 = por %p51, %p52
      %s55 = sadd.s32 %s54, 1
      %p58 = scmp.eq.s32.totalorder %s20, 1
      %p59 = scmp.ne.s32.totalorder %s54, %s56
      %p60 = scmp.eq.s32.totalorder %s20, 0
      %p61 = por %p59, %p60
      %p62 = scmp.ne.s32.totalorder %s54, %s56
      %p63 = scmp.eq.s32.totalorder %s25, 1
      %p64 = por %p62, %p63
      %p65 = scmp.ne.s32.totalorder %s56, %s57
      %p66 = scmp.eq.s32.totalorder %s25, 0
      %p67 = por %p65, %p66
      %p68 = scmp.ne.s32.totalorder %s56, %s57
      %p69 = scmp.eq.s32.totalorder %s26, 1
      %p70 = por %p68, %p69
      %p72 = scmp.ne.s32.totalorder %s57, %s71
      %p73 = scmp.eq.s32.totalorder %s26, 0
      %p74 = por %p72, %p73
      %s76 = sadd.s32 %s75, 1
      %p79 = scmp.eq.s32.totalorder %s20, 1
      %p80 = scmp.ne.s32.totalorder %s75, %s77
      %p81 = scmp.eq.s32.totalorder %s20, 0
      %p82 = por %p80, %p81
      %p83 = scmp.ne.s32.totalorder %s75, %s77
      %p84 = scmp.eq.s32.totalorder %s25, 1
      %p85 = por %p83, %p84
      %p86 = scmp.ne.s32.totalorder %s77, %s78
      %p87 = scmp.eq.s32.totalorder %s25, 0
      %p88 = por %p86, %p87
      %p89 = scmp.ne.s32.totalorder %s77, %s78
      %p90 = scmp.eq.s32.totalorder %s26, 1
      %p91 = por %p89, %p90
      %p93 = scmp.ne.s32.totalorder %s78, %s92
      %p94 = scmp.eq.s32.totalorder %s26, 0
      %p95 = por %p93, %p94
      %s97 = sadd.s32 %s96, 1
      %p100 = scmp.eq.s32.totalorder %s20, 1
      %p101 = scmp.ne.s32.totalorder %s96, %s98
      %p102 = scmp.eq.s32.totalorder %s20, 0
      %p103 = por %p101, %p102
      %p104 = scmp.ne.s32.totalorder %s96, %s98
      %p105 = scmp.eq.s32.totalorder %s25, 1
      %p106 = por %p104, %p105
      %p107 = scmp.ne.s32.totalorder %s98, %s99
      %p108 = scmp.eq.s32.totalorder %s25, 0
      %p109 = por %p107, %p108
      %p110 = scmp.ne.s32.totalorder %s98, %s99
      %p111 = scmp.eq.s32.totalorder %s26, 1
      %p112 = por %p110, %p111
      %p114 = scmp.ne.s32.totalorder %s99, %s113
      %p115 = scmp.eq.s32.totalorder %s26, 0
      %p116 = por %p114, %p115
      %s118 = sadd.s32 %s117, 1
      %p121 = scmp.eq.s32.totalorder %s20, 1
      %p122 = scmp.ne.s32.totalorder %s117, %s119
      %p123 = scmp.eq.s32.totalorder %s20, 0
      %p124 = por %p122, %p123
      %p125 = scmp.ne.s32.totalorder %s117, %s119
      %p126 = scmp.eq.s32.totalorder %s25, 1
      %p127 = por %p125, %p126
      %p128 = scmp.ne.s32.totalorder %s119, %s120
      %p129 = scmp.eq.s32.totalorder %s25, 0
      %p130 = por %p128, %p129
      %p131 = scmp.ne.s32.totalorder %s119, %s120
      %p132 = scmp.eq.s32.totalorder %s26, 1
      %p133 = por %p131, %p132
      %p135 = scmp.ne.s32.totalorder %s120, %s134
      %p136 = scmp.eq.s32.totalorder %s26, 0
      %p137 = por %p135, %p136
      %s139 = sadd.s32 %s138, 1
      %p142 = scmp.eq.s32.totalorder %s20, 1
      %p143 = scmp.ne.s32.totalorder %s138, %s140
      %p144 = scmp.eq.s32.totalorder %s20, 0
      %p145 = por %p143, %p144
      %p146 = scmp.ne.s32.totalorder %s138, %s140
      %p147 = scmp.eq.s32.totalorder %s25, 1
      %p148 = por %p146, %p147
      %p149 = scmp.ne.s32.totalorder %s140, %s141
      %p150 = scmp.eq.s32.totalorder %s25, 0
      %p151 = por %p149, %p150
      %p152 = scmp.ne.s32.totalorder %s140, %s141
      %p153 = scmp.eq.s32.totalorder %s26, 1
      %p154 = por %p152, %p153
      %p156 = scmp.ne.s32.totalorder %s141, %s155
      %p157 = scmp.eq.s32.totalorder %s26, 0
      %p158 = por %p156, %p157
      %s160 = sadd.s32 %s159, 1
      %p163 = scmp.eq.s32.totalorder %s20, 1
      %p164 = scmp.ne.s32.totalorder %s159, %s161
      %p165 = scmp.eq.s32.totalorder %s20, 0
      %p166 = por %p164, %p165
      %p167 = scmp.ne.s32.totalorder %s159, %s161
      %p168 = scmp.eq.s32.totalorder %s25, 1
      %p169 = por %p167, %p168
      %p170 = scmp.ne.s32.totalorder %s161, %s162
      %p171 = scmp.eq.s32.totalorder %s25, 0
      %p172 = por %p170, %p171
      %p173 = scmp.ne.s32.totalorder %s161, %s162
      %p174 = scmp.eq.s32.totalorder %s26, 1
      %p175 = por %p173, %p174
      %p177 = scmp.ne.s32.totalorder %s162, %s176
      %p178 = scmp.eq.s32.totalorder %s26, 0
      %p179 = por %p177, %p178
      %s180 = ssub.s32 %s20, %s27
      %p181 = scmp.eq.s32.totalorder %s180, 0
      %s183 = sadd.s32 %s182, 1
      %s184 = scalar_select %p181, %s182, %s183
      %p187 = pneg %p181
      %p188 = scmp.eq.s32.totalorder %s20, 1
      %p189 = por %p187, %p188
      %p190 = scmp.ne.s32.totalorder %s182, %s185
      %p191 = scmp.eq.s32.totalorder %s20, 0
      %p192 = por %p190, %p191
      %p193 = scmp.ne.s32.totalorder %s182, %s185
      %p194 = scmp.eq.s32.totalorder %s25, 1
      %p195 = por %p193, %p194
      %p196 = scmp.ne.s32.totalorder %s185, %s186
      %p197 = scmp.eq.s32.totalorder %s25, 0
      %p198 = por %p196, %p197
      %p199 = scmp.ne.s32.totalorder %s185, %s186
      %p200 = scmp.eq.s32.totalorder %s26, 1
      %p201 = por %p199, %p200
      %p203 = scmp.ne.s32.totalorder %s186, %s202
      %p204 = scmp.eq.s32.totalorder %s26, 0
      %p205 = por %p203, %p204
      %p206 = scmp.le.s32.totalorder 1, %s20
      %p207 = scmp.lt.s32.totalorder %s20, 3
      %p208 = pnand %p206, %p207
      %p209 = pneg %p208
      // Predicated region
      $region9: #{tpu_custom_call.1} parent=5 // pred_check
        _
      $region10: #{tpu_custom_call.1} parent=5 // pred_check_branch
        %211 = sbr.rel (%p208) target = $region12
      $region11: #{tpu_custom_call.1} parent=5 // pred_region
        %s212 = ssub.s32 %s20, 1
        // Predicated region
        $region13: #{tpu_custom_call.1} parent=11 // pred_check
          %p213 = pneg %p67
        $region14: #{tpu_custom_call.1} parent=11 // pred_check_branch
          %215 = sbr.rel (%p213) target = $region16
        $region15: #{tpu_custom_call.1} parent=11 // pred_region
          _
        $region16: #{tpu_custom_call.1} parent=11 // pred_fallthru
          _
        // Predicated region
        $region17: #{tpu_custom_call.1} parent=11 // pred_check
          %p216 = pneg %p88
        $region18: #{tpu_custom_call.1} parent=11 // pred_check_branch
          %218 = sbr.rel (%p216) target = $region20
        $region19: #{tpu_custom_call.1} parent=11 // pred_region
          _
        $region20: #{tpu_custom_call.1} parent=11 // pred_fallthru
          _
        // Predicated region
        $region21: #{tpu_custom_call.1} parent=11 // pred_check
          %p219 = pneg %p109
        $region22: #{tpu_custom_call.1} parent=11 // pred_check_branch
          %221 = sbr.rel (%p219) target = $region24
        $region23: #{tpu_custom_call.1} parent=11 // pred_region
          _
        $region24: #{tpu_custom_call.1} parent=11 // pred_fallthru
          _
        // Predicated region
        $region25: #{tpu_custom_call.1} parent=11 // pred_check
          %p222 = pneg %p130
        $region26: #{tpu_custom_call.1} parent=11 // pred_check_branch
          %224 = sbr.rel (%p222) target = $region28
        $region27: #{tpu_custom_call.1} parent=11 // pred_region
          %s226 = ssub.s32 512, 512
          %227 = vsyncadd [#allocation6], %s226
          %s228 = sshll.u32 [#allocation5], 4
          %s229 = int_to_ptr.vmem [resolvable:$true] %s228
          %234 = dma.hbm_to_vmem [thread:$0]  %s4, 512, %s229, [#allocation6], 64, 64, 4
        $region28: #{tpu_custom_call.1} parent=11 // pred_fallthru
          _
        // Predicated region
        $region29: #{tpu_custom_call.1} parent=11 // pred_check
          %p235 = pneg %p151
        $region30: #{tpu_custom_call.1} parent=11 // pred_check_branch
          %237 = sbr.rel (%p235) target = $region32
        $region31: #{tpu_custom_call.1} parent=11 // pred_region
          %s239 = ssub.s32 512, 512
          %240 = vsyncadd [#allocation6], %s239
          %s241 = sshll.u32 [#allocation7], 4
          %s242 = int_to_ptr.vmem [resolvable:$true] %s241
          %247 = dma.hbm_to_vmem [thread:$0]  %s5, 512, %s242, [#allocation6], 64, 64, 4
        $region32: #{tpu_custom_call.1} parent=11 // pred_fallthru
          _
        // Predicated region
        $region33: #{tpu_custom_call.1} parent=11 // pred_check
          %p248 = pneg %p172
        $region34: #{tpu_custom_call.1} parent=11 // pred_check_branch
          %250 = sbr.rel (%p248) target = $region36
        $region35: #{tpu_custom_call.1} parent=11 // pred_region
          _
        $region36: #{tpu_custom_call.1} parent=11 // pred_fallthru
          _
      $region12: #{tpu_custom_call.1} parent=5 // pred_fallthru
        _
      %p251 = scmp.lt.s32.totalorder %s20, 2
      // Predicated region
      $region37: #{tpu_custom_call.1} parent=5 // pred_check
        %p252 = pneg %p251
      $region38: #{tpu_custom_call.1} parent=5 // pred_check_branch
        %254 = sbr.rel (%p252) target = $region40
      $region39: #{tpu_custom_call.1} parent=5 // pred_region
        // Predicated region
        $region41: #{tpu_custom_call.1} parent=39 // pred_check
          %p255 = pneg %p40
        $region42: #{tpu_custom_call.1} parent=39 // pred_check_branch
          %257 = sbr.rel (%p255) target = $region44
        $region43: #{tpu_custom_call.1} parent=39 // pred_region
          %s258 = sand.u32 %s30, 1
          %s259 = scalar_lea.sflag [#allocation3], %s258
          %s260 = sand.u32 %s30, 1
          %s261 = smul.addr %s260, 64
          %s262 = scalar_lea.vmem [#allocation2], %s261
          %s263 = smul.u32 16, %s20
          %s264 = ssub.s32 20, %s263
          %p265 = scmp.lt.s32.totalorder %s264, 16
          %s266 = scalar_select %p265, %s264, 16
          %s267 = smul.u32 64, %s266
          %s269 = ssub.s32 1024, %s267
          %270 = vsyncadd %s259, %s269
          %p271 = scmp.ne.s32.totalorder 0, %s267
          %s272 = smul.addr %s263, 64
          %s273 = scalar_lea.hbm %s0, %s272
          %s274 = smul.u32 %s266, 4
          %s275 = sshll.u32 %s274, 4
          %s276 = sshll.u32 %s262, 4
          %s277 = int_to_ptr.vmem [resolvable:$true] %s276
          %279 = dma.hbm_to_vmem [thread:$0]  (%p271), %s273, %s275, %s277, %s259
        $region44: #{tpu_custom_call.1} parent=39 // pred_fallthru
          _
      $region40: #{tpu_custom_call.1} parent=5 // pred_fallthru
        _
      %p280 = scmp.le.s32.totalorder 1, %s20
      %p281 = scmp.lt.s32.totalorder %s20, 3
      %p282 = pnand %p280, %p281
      %p283 = pneg %p282
      // Predicated region
      $region45: #{tpu_custom_call.1} parent=5 // pred_check
        _
      $region46: #{tpu_custom_call.1} parent=5 // pred_check_branch
        %285 = sbr.rel (%p282) target = $region48
      $region47: #{tpu_custom_call.1} parent=5 // pred_region
        %s286 = ssub.s32 %s20, 1
        %s287 = sand.u32 %s33, 1
        %s288 = scalar_lea.sflag [#allocation3], %s287
        %s289 = sand.u32 %s33, 1
        %s290 = smul.addr %s289, 64
        %s291 = scalar_lea.vmem [#allocation2], %s290
        // Predicated region
        $region49: #{tpu_custom_call.1} parent=47 // pred_check
          %p292 = pneg %p46
        $region50: #{tpu_custom_call.1} parent=47 // pred_check_branch
          %294 = sbr.rel (%p292) target = $region52
        $region51: #{tpu_custom_call.1} parent=47 // pred_region
          %295 = dma.done %s288, 1024
        $region52: #{tpu_custom_call.1} parent=47 // pred_fallthru
          _
        // Predicated region
        $region53: #{tpu_custom_call.1} parent=47 // pred_check
          %p296 = pneg %p130
        $region54: #{tpu_custom_call.1} parent=47 // pred_check_branch
          %298 = sbr.rel (%p296) target = $region56
        $region55: #{tpu_custom_call.1} parent=47 // pred_region
          %299 = dma.done [#allocation6], 512
        $region56: #{tpu_custom_call.1} parent=47 // pred_fallthru
          _
        // Predicated region
        $region57: #{tpu_custom_call.1} parent=47 // pred_check
          %p300 = pneg %p151
        $region58: #{tpu_custom_call.1} parent=47 // pred_check_branch
          %302 = sbr.rel (%p300) target = $region60
        $region59: #{tpu_custom_call.1} parent=47 // pred_region
          %303 = dma.done [#allocation6], 512
        $region60: #{tpu_custom_call.1} parent=47 // pred_fallthru
          _
        %s304 = sand.u32 %s33, 1
        %s305 = scalar_lea.sflag [#allocation3], %s304
        %s306 = sand.u32 %s33, 1
        %s307 = smul.addr %s306, 64
        %s308 = scalar_lea.vmem [#allocation2], %s307
        %p309 = pneg %p46
        %p310 = pneg %p43
        %p311 = pneg %p67
        %p312 = pneg %p64
        %p313 = pneg %p88
        %p314 = pneg %p85
        %p315 = pneg %p109
        %p316 = pneg %p106
        %p317 = pneg %p130
        %p318 = pneg %p127
        %p319 = pneg %p151
        %p320 = pneg %p148
        %p321 = pneg %p172
        %p322 = pneg %p169
        %p323 = pneg %p198
        %p324 = pneg %p195
        %s325 = sand.u32 %s185, 1
        %s326 = scalar_lea.sflag [#allocation4], %s325
        %s327 = sand.u32 %s185, 1
        %s328 = smul.addr %s327, 128
        %s329 = scalar_lea.vmem [#allocation8], %s328
        %s330 = smul.u32 16, %s25
        %s331 = ssub.s32 20, %s330
        %p332 = scmp.lt.s32.totalorder %s331, 16
        %s333 = scalar_select %p332, %s331, 16
        %s334 = smul.u32 64, %s333
        %s335 = smul.u32 16, %s25
        %s336 = ssub.s32 20, %s335
        %p337 = scmp.lt.s32.totalorder %s336, 16
        %s338 = scalar_select %p337, %s336, 16
        %s339 = smul.u32 128, %s338
        %v341 = vld [vmem:[%s291] sm:$0xff]
        %v342 = vld [vmem:[%s291 + $0x8] sm:$0xff]
        %v343 = vld [vmem:[%s291 + $0x10] sm:$0xff]
        %v344 = vld [vmem:[%s291 + $0x18] sm:$0xff]
        %v345 = vld [vmem:[%s291 + $0x20] sm:$0xff]
        %v346 = vld [vmem:[%s291 + $0x28] sm:$0xff]
        %v347 = vld [vmem:[%s291 + $0x30] sm:$0xff]
        %v348 = vld [vmem:[%s291 + $0x38] sm:$0xff]
        %v349 = vld [vmem:[%s1] sm:$0xf]
        %v350 = vld [vmem:[%s1 + $0x4] sm:$0xf]
        %v351 = vld [vmem:[%s1 + $0x8] sm:$0xf]
        %v352 = vld [vmem:[%s1 + $0xc] sm:$0xf]
        %v353 = vld [vmem:[%s1 + $0x10] sm:$0xf]
        %v354 = vld [vmem:[%s1 + $0x14] sm:$0xf]
        %v355 = vld [vmem:[%s1 + $0x18] sm:$0xf]
        %v356 = vld [vmem:[%s1 + $0x1c] sm:$0xf]
        %v357 = vld [vmem:[%s1 + $0x20] sm:$0xf]
        %v358 = vld [vmem:[%s1 + $0x24] sm:$0xf]
        %v359 = vld [vmem:[%s1 + $0x28] sm:$0xf]
        %v360 = vld [vmem:[%s1 + $0x2c] sm:$0xf]
        %v361 = vld [vmem:[%s1 + $0x30] sm:$0xf]
        %v362 = vld [vmem:[%s1 + $0x34] sm:$0xf]
        %v363 = vld [vmem:[%s1 + $0x38] sm:$0xf]
        %v364 = vld [vmem:[%s1 + $0x3c] sm:$0xf]
        %v381 = vunpack.c.l.b16 %v349
        %v382 = vunpack.c.l.b16 %v350
        %v383 = vunpack.c.l.b16 %v351
        %v384 = vunpack.c.l.b16 %v352
        %v385 = vunpack.c.l.b16 %v353
        %v386 = vunpack.c.l.b16 %v354
        %v387 = vunpack.c.l.b16 %v355
        %v388 = vunpack.c.l.b16 %v356
        %v389 = vunpack.c.l.b16 %v357
        %v390 = vunpack.c.l.b16 %v358
        %v391 = vunpack.c.l.b16 %v359
        %v392 = vunpack.c.l.b16 %v360
        %v393 = vunpack.c.l.b16 %v361
        %v394 = vunpack.c.l.b16 %v362
        %v395 = vunpack.c.l.b16 %v363
        %v396 = vunpack.c.l.b16 %v364
        %v397 = vpack.c.b16 %v382, %v381
        %v398 = vpack.c.b16 %v384, %v383
        %v399 = vpack.c.b16 %v386, %v385
        %v400 = vpack.c.b16 %v388, %v387
        %v401 = vpack.c.b16 %v390, %v389
        %v402 = vpack.c.b16 %v392, %v391
        %v403 = vpack.c.b16 %v394, %v393
        %v404 = vpack.c.b16 %v396, %v395
        %v413 = vunpack.c.l.b16 %v341
        %v414 = vunpack.c.h.b16 %v341
        %v415 = vunpack.c.l.b16 %v342
        %v416 = vunpack.c.h.b16 %v342
        %v417 = vunpack.c.l.b16 %v343
        %v418 = vunpack.c.h.b16 %v343
        %v419 = vunpack.c.l.b16 %v344
        %v420 = vunpack.c.h.b16 %v344
        %v421 = vunpack.c.l.b16 %v345
        %v422 = vunpack.c.h.b16 %v345
        %v423 = vunpack.c.l.b16 %v346
        %v424 = vunpack.c.h.b16 %v346
        %v425 = vunpack.c.l.b16 %v347
        %v426 = vunpack.c.h.b16 %v347
        %v427 = vunpack.c.l.b16 %v348
        %v428 = vunpack.c.h.b16 %v348
        %v429 = vpack.c.b16 %v413, %v413
        %v430 = vpack.c.b16 %v414, %v414
        %v431 = vpack.c.b16 %v415, %v415
        %v432 = vpack.c.b16 %v416, %v416
        %v433 = vpack.c.b16 %v417, %v417
        %v434 = vpack.c.b16 %v418, %v418
        %v435 = vpack.c.b16 %v419, %v419
        %v436 = vpack.c.b16 %v420, %v420
        %v437 = vpack.c.b16 %v421, %v421
        %v438 = vpack.c.b16 %v422, %v422
        %v439 = vpack.c.b16 %v423, %v423
        %v440 = vpack.c.b16 %v424, %v424
        %v441 = vpack.c.b16 %v425, %v425
        %v442 = vpack.c.b16 %v426, %v426
        %v443 = vpack.c.b16 %v427, %v427
        %v444 = vpack.c.b16 %v428, %v428
        %vm445 = vcmask 64512
        %v447 = vsel %vm445, %v397, 0
        %v450 = vsel %vm445, %v398, 0
        %v453 = vsel %vm445, %v399, 0
        %v456 = vsel %vm445, %v400, 0
        %v459 = vsel %vm445, %v401, 0
        %v462 = vsel %vm445, %v402, 0
        %v465 = vsel %vm445, %v403, 0
        %v468 = vsel %vm445, %v404, 0
        %vm470 = vcmask 1043456
        %v472 = vsel %vm470, %v429, 0
        %v475 = vsel %vm470, %v430, 0
        %v478 = vsel %vm470, %v431, 0
        %v481 = vsel %vm470, %v432, 0
        %v484 = vsel %vm470, %v433, 0
        %v487 = vsel %vm470, %v434, 0
        %v490 = vsel %vm470, %v435, 0
        %v493 = vsel %vm470, %v436, 0
        %v496 = vsel %vm470, %v437, 0
        %v499 = vsel %vm470, %v438, 0
        %v502 = vsel %vm470, %v439, 0
        %v505 = vsel %vm470, %v440, 0
        %v508 = vsel %vm470, %v441, 0
        %v511 = vsel %vm470, %v442, 0
        %v514 = vsel %vm470, %v443, 0
        %v517 = vsel %vm470, %v444, 0
        %519 = vmatprep.subr.bf16.mxu0 %v475
        %520 = vmatpush1.bf16.msra.mxu0 %v472
        %521 = vmatprep.subr.bf16.mxu0 0
        %522 = vmatpush1.bf16.msra.mxu0 0
        %523 = vmatprep.subr.bf16.mxu0 0
        %524 = vmatpush1.bf16.msra.mxu0 0
        %525 = vmatprep.subr.bf16.mxu0 0
        %526 = vmatpush1.bf16.msra.mxu0 0
        %527 = vmatprep.subr.bf16.mxu0 0
        %528 = vmatpush1.bf16.msra.mxu0 0
        %529 = vmatprep.subr.bf16.mxu0 0
        %530 = vmatpush1.bf16.msra.mxu0 0
        %531 = vmatprep.subr.bf16.mxu0 0
        %532 = vmatpush1.bf16.msra.mxu0 0
        %533 = vmatprep.subr.bf16.mxu0 0
        %534 = vmatpush1.bf16.msra.mxu0 0
        %535 = vmatprep.subr.bf16.mxu0 0
        %536 = vmatpush1.bf16.msra.mxu0 0
        %537 = vmatprep.subr.bf16.mxu0 0
        %538 = vmatpush1.bf16.msra.mxu0 0
        %539 = vmatprep.subr.bf16.mxu0 0
        %540 = vmatpush1.bf16.msra.mxu0 0
        %541 = vmatprep.subr.bf16.mxu0 0
        %542 = vmatpush1.bf16.msra.mxu0 0
        %543 = vmatprep.subr.bf16.mxu0 0
        %544 = vmatpush1.bf16.msra.mxu0 0
        %545 = vmatprep.subr.bf16.mxu0 0
        %546 = vmatpush1.bf16.msra.mxu0 0
        %547 = vmatprep.subr.bf16.mxu0 0
        %548 = vmatpush1.bf16.msra.mxu0 0
        %549 = vmatprep.subr.bf16.mxu0 0
        %550 = vmatpush1.bf16.msra.mxu0 0
        %551 = vmatprep.mubr.bf16.mxu0 0
        %552 = vmatmul.mubr.bf16.gmra.mrb[0].mxu0 %v447
        %v553 = vpop.f32.mrb[0].mxu0
        %v554 = vadd.f32 0.0, %v553
        %v555 = vpop.f32.mrb[0].mxu0
        %v556 = vadd.f32 0.0, %v555
        %v557 = vpop.f32.mrb[0].mxu0
        %v558 = vadd.f32 0.0, %v557
        %v559 = vpop.f32.mrb[0].mxu0
        %v560 = vadd.f32 0.0, %v559
        %561 = vmatprep.mubr.bf16.mxu0 0
        %562 = vmatmul.mubr.bf16.gmra.mrb[0].mxu0 %v450
        %v563 = vpop.f32.mrb[0].mxu0
        %v564 = vadd.f32 0.0, %v563
        %v565 = vpop.f32.mrb[0].mxu0
        %v566 = vadd.f32 0.0, %v565
        %v567 = vpop.f32.mrb[0].mxu0
        %v568 = vadd.f32 0.0, %v567
        %v569 = vpop.f32.mrb[0].mxu0
        %v570 = vadd.f32 0.0, %v569
        %571 = vmatprep.mubr.bf16.mxu0 0
        %572 = vmatmul.mubr.bf16.gmra.mrb[0].mxu0 %v453
        %v573 = vpop.f32.mrb[0].mxu0
        %v574 = vadd.f32 0.0, %v573
        %v575 = vpop.f32.mrb[0].mxu0
        %v576 = vadd.f32 0.0, %v575
        %v577 = vpop.f32.mrb[0].mxu0
        %v578 = vadd.f32 0.0, %v577
        %v579 = vpop.f32.mrb[0].mxu0
        %v580 = vadd.f32 0.0, %v579
        %581 = vmatprep.mubr.bf16.mxu0 0
        %582 = vmatmul.mubr.bf16.gmra.mrb[0].mxu0 %v456
        %v583 = vpop.f32.mrb[0].mxu0
        %v584 = vadd.f32 0.0, %v583
        %v585 = vpop.f32.mrb[0].mxu0
        %v586 = vadd.f32 0.0, %v585
        %v587 = vpop.f32.mrb[0].mxu0
        %v588 = vadd.f32 0.0, %v587
        %v589 = vpop.f32.mrb[0].mxu0
        %v590 = vadd.f32 0.0, %v589
        %591 = vmatprep.mubr.bf16.mxu0 0
        %592 = vmatmul.mubr.bf16.gmra.mrb[0].mxu0 %v459
        %v593 = vpop.f32.mrb[0].mxu0
        %v594 = vadd.f32 0.0, %v593
        %v595 = vpop.f32.mrb[0].mxu0
        %v596 = vadd.f32 0.0, %v595
        %v597 = vpop.f32.mrb[0].mxu0
        %v598 = vadd.f32 0.0, %v597
        %v599 = vpop.f32.mrb[0].mxu0
        %v600 = vadd.f32 0.0, %v599
        %601 = vmatprep.mubr.bf16.mxu0 0
        %602 = vmatmul.mubr.bf16.gmra.mrb[0].mxu0 %v462
        %v603 = vpop.f32.mrb[0].mxu0
        %v604 = vadd.f32 0.0, %v603
        %v605 = vpop.f32.mrb[0].mxu0
        %v606 = vadd.f32 0.0, %v605
        %v607 = vpop.f32.mrb[0].mxu0
        %v608 = vadd.f32 0.0, %v607
        %v609 = vpop.f32.mrb[0].mxu0
        %v610 = vadd.f32 0.0, %v609
        %611 = vmatprep.mubr.bf16.mxu0 0
        %612 = vmatmul.mubr.bf16.gmra.mrb[0].mxu0 %v465
        %v613 = vpop.f32.mrb[0].mxu0
        %v614 = vadd.f32 0.0, %v613
        %v615 = vpop.f32.mrb[0].mxu0
        %v616 = vadd.f32 0.0, %v615
        %v617 = vpop.f32.mrb[0].mxu0
        %v618 = vadd.f32 0.0, %v617
        %v619 = vpop.f32.mrb[0].mxu0
        %v620 = vadd.f32 0.0, %v619
        %621 = vmatprep.mubr.bf16.mxu0 0
        %622 = vmatmul.mubr.bf16.gmra.mrb[0].mxu0 %v468
        %v623 = vpop.f32.mrb[0].mxu0
        %v624 = vadd.f32 0.0, %v623
        %v625 = vpop.f32.mrb[0].mxu0
        %v626 = vadd.f32 0.0, %v625
        %v627 = vpop.f32.mrb[0].mxu0
        %v628 = vadd.f32 0.0, %v627
        %v629 = vpop.f32.mrb[0].mxu0
        %v630 = vadd.f32 0.0, %v629
        %631 = vdwg.mxu0
        %632 = vmatprep.subr.bf16.mxu0 %v481
        %633 = vmatpush1.bf16.msra.mxu0 %v478
        %634 = vmatprep.subr.bf16.mxu0 0
        %635 = vmatpush1.bf16.msra.mxu0 0
        %636 = vmatprep.subr.bf16.mxu0 0
        %637 = vmatpush1.bf16.msra.mxu0 0
        %638 = vmatprep.subr.bf16.mxu0 0
        %639 = vmatpush1.bf16.msra.mxu0 0
        %640 = vmatprep.subr.bf16.mxu0 0
        %641 = vmatpush1.bf16.msra.mxu0 0
        %642 = vmatprep.subr.bf16.mxu0 0
        %643 = vmatpush1.bf16.msra.mxu0 0
        %644 = vmatprep.subr.bf16.mxu0 0
        %645 = vmatpush1.bf16.msra.mxu0 0
        %646 = vmatprep.subr.bf16.mxu0 0
        %647 = vmatpush1.bf16.msra.mxu0 0
        %648 = vmatprep.subr.bf16.mxu0 0
        %649 = vmatpush1.bf16.msra.mxu0 0
        %650 = vmatprep.subr.bf16.mxu0 0
        %651 = vmatpush1.bf16.msra.mxu0 0
        %652 = vmatprep.subr.bf16.mxu0 0
        %653 = vmatpush1.bf16.msra.mxu0 0
        %654 = vmatprep.subr.bf16.mxu0 0
        %655 = vmatpush1.bf16.msra.mxu0 0
        %656 = vmatprep.subr.bf16.mxu0 0
        %657 = vmatpush1.bf16.msra.mxu0 0
        %658 = vmatprep.subr.bf16.mxu0 0
        %659 = vmatpush1.bf16.msra.mxu0 0
        %660 = vmatprep.subr.bf16.mxu0 0
        %661 = vmatpush1.bf16.msra.mxu0 0
        %662 = vmatprep.subr.bf16.mxu0 0
        %663 = vmatpush1.bf16.msra.mxu0 0
        %664 = vmatprep.mubr.bf16.mxu0 0
        %665 = vmatmul.mubr.bf16.gmra.mrb[0].mxu0 %v447
        %v666 = vpop.f32.mrb[0].mxu0
        %v667 = vadd.f32 0.0, %v666
        %v668 = vpop.f32.mrb[0].mxu0
        %v669 = vadd.f32 0.0, %v668
        %v670 = vpop.f32.mrb[0].mxu0
        %v671 = vadd.f32 0.0, %v670
        %v672 = vpop.f32.mrb[0].mxu0
        %v673 = vadd.f32 0.0, %v672
        %674 = vmatprep.mubr.bf16.mxu0 0
        %675 = vmatmul.mubr.bf16.gmra.mrb[0].mxu0 %v450
        %v676 = vpop.f32.mrb[0].mxu0
        %v677 = vadd.f32 0.0, %v676
        %v678 = vpop.f32.mrb[0].mxu0
        %v679 = vadd.f32 0.0, %v678
        %v680 = vpop.f32.mrb[0].mxu0
        %v681 = vadd.f32 0.0, %v680
        %v682 = vpop.f32.mrb[0].mxu0
        %v683 = vadd.f32 0.0, %v682
        %684 = vmatprep.mubr.bf16.mxu0 0
        %685 = vmatmul.mubr.bf16.gmra.mrb[0].mxu0 %v453
        %v686 = vpop.f32.mrb[0].mxu0
        %v687 = vadd.f32 0.0, %v686
        %v688 = vpop.f32.mrb[0].mxu0
        %v689 = vadd.f32 0.0, %v688
        %v690 = vpop.f32.mrb[0].mxu0
        %v691 = vadd.f32 0.0, %v690
        %v692 = vpop.f32.mrb[0].mxu0
        %v693 = vadd.f32 0.0, %v692
        %694 = vmatprep.mubr.bf16.mxu0 0
        %695 = vmatmul.mubr.bf16.gmra.mrb[0].mxu0 %v456
        %v696 = vpop.f32.mrb[0].mxu0
        %v697 = vadd.f32 0.0, %v696
        %v698 = vpop.f32.mrb[0].mxu0
        %v699 = vadd.f32 0.0, %v698
        %v700 = vpop.f32.mrb[0].mxu0
        %v701 = vadd.f32 0.0, %v700
        %v702 = vpop.f32.mrb[0].mxu0
        %v703 = vadd.f32 0.0, %v702
        %704 = vmatprep.mubr.bf16.mxu0 0
        %705 = vmatmul.mubr.bf16.gmra.mrb[0].mxu0 %v459
        %v706 = vpop.f32.mrb[0].mxu0
        %v707 = vadd.f32 0.0, %v706
        %v708 = vpop.f32.mrb[0].mxu0
        %v709 = vadd.f32 0.0, %v708
        %v710 = vpop.f32.mrb[0].mxu0
        %v711 = vadd.f32 0.0, %v710
        %v712 = vpop.f32.mrb[0].mxu0
        %v713 = vadd.f32 0.0, %v712
        %714 = vmatprep.mubr.bf16.mxu0 0
        %715 = vmatmul.mubr.bf16.gmra.mrb[0].mxu0 %v462
        %v716 = vpop.f32.mrb[0].mxu0
        %v717 = vadd.f32 0.0, %v716
        %v718 = vpop.f32.mrb[0].mxu0
        %v719 = vadd.f32 0.0, %v718
        %v720 = vpop.f32.mrb[0].mxu0
        %v721 = vadd.f32 0.0, %v720
        %v722 = vpop.f32.mrb[0].mxu0
        %v723 = vadd.f32 0.0, %v722
        %724 = vmatprep.mubr.bf16.mxu0 0
        %725 = vmatmul.mubr.bf16.gmra.mrb[0].mxu0 %v465
        %v726 = vpop.f32.mrb[0].mxu0
        %v727 = vadd.f32 0.0, %v726
        %v728 = vpop.f32.mrb[0].mxu0
        %v729 = vadd.f32 0.0, %v728
        %v730 = vpop.f32.mrb[0].mxu0
        %v731 = vadd.f32 0.0, %v730
        %v732 = vpop.f32.mrb[0].mxu0
        %v733 = vadd.f32 0.0, %v732
        %734 = vmatprep.mubr.bf16.mxu0 0
        %735 = vmatmul.mubr.bf16.gmra.mrb[0].mxu0 %v468
        %v736 = vpop.f32.mrb[0].mxu0
        %v737 = vadd.f32 0.0, %v736
        %v738 = vpop.f32.mrb[0].mxu0
        %v739 = vadd.f32 0.0, %v738
        %v740 = vpop.f32.mrb[0].mxu0
        %v741 = vadd.f32 0.0, %v740
        %v742 = vpop.f32.mrb[0].mxu0
        %v743 = vadd.f32 0.0, %v742
        %744 = vdwg.mxu0
        %745 = vmatprep.subr.bf16.mxu0 %v487
        %746 = vmatpush1.bf16.msra.mxu0 %v484
        %747 = vmatprep.subr.bf16.mxu0 0
        %748 = vmatpush1.bf16.msra.mxu0 0
        %749 = vmatprep.subr.bf16.mxu0 0
        %750 = vmatpush1.bf16.msra.mxu0 0
        %751 = vmatprep.subr.bf16.mxu0 0
        %752 = vmatpush1.bf16.msra.mxu0 0
        %753 = vmatprep.subr.bf16.mxu0 0
        %754 = vmatpush1.bf16.msra.mxu0 0
        %755 = vmatprep.subr.bf16.mxu0 0
        %756 = vmatpush1.bf16.msra.mxu0 0
        %757 = vmatprep.subr.bf16.mxu0 0
        %758 = vmatpush1.bf16.msra.mxu0 0
        %759 = vmatprep.subr.bf16.mxu0 0
        %760 = vmatpush1.bf16.msra.mxu0 0
        %761 = vmatprep.subr.bf16.mxu0 0
        %762 = vmatpush1.bf16.msra.mxu0 0
        %763 = vmatprep.subr.bf16.mxu0 0
        %764 = vmatpush1.bf16.msra.mxu0 0
        %765 = vmatprep.subr.bf16.mxu0 0
        %766 = vmatpush1.bf16.msra.mxu0 0
        %767 = vmatprep.subr.bf16.mxu0 0
        %768 = vmatpush1.bf16.msra.mxu0 0
        %769 = vmatprep.subr.bf16.mxu0 0
        %770 = vmatpush1.bf16.msra.mxu0 0
        %771 = vmatprep.subr.bf16.mxu0 0
        %772 = vmatpush1.bf16.msra.mxu0 0
        %773 = vmatprep.subr.bf16.mxu0 0
        %774 = vmatpush1.bf16.msra.mxu0 0
        %775 = vmatprep.subr.bf16.mxu0 0
        %776 = vmatpush1.bf16.msra.mxu0 0
        %777 = vmatprep.mubr.bf16.mxu0 0
        %778 = vmatmul.mubr.bf16.gmra.mrb[0].mxu0 %v447
        %v779 = vpop.f32.mrb[0].mxu0
        %v780 = vadd.f32 0.0, %v779
        %v781 = vpop.f32.mrb[0].mxu0
        %v782 = vadd.f32 0.0, %v781
        %v783 = vpop.f32.mrb[0].mxu0
        %v784 = vadd.f32 0.0, %v783
        %v785 = vpop.f32.mrb[0].mxu0
        %v786 = vadd.f32 0.0, %v785
        %787 = vmatprep.mubr.bf16.mxu0 0
        %788 = vmatmul.mubr.bf16.gmra.mrb[0].mxu0 %v450
        %v789 = vpop.f32.mrb[0].mxu0
        %v790 = vadd.f32 0.0, %v789
        %v791 = vpop.f32.mrb[0].mxu0
        %v792 = vadd.f32 0.0, %v791
        %v793 = vpop.f32.mrb[0].mxu0
        %v794 = vadd.f32 0.0, %v793
        %v795 = vpop.f32.mrb[0].mxu0
        %v796 = vadd.f32 0.0, %v795
        %797 = vmatprep.mubr.bf16.mxu0 0
        %798 = vmatmul.mubr.bf16.gmra.mrb[0].mxu0 %v453
        %v799 = vpop.f32.mrb[0].mxu0
        %v800 = vadd.f32 0.0, %v799
        %v801 = vpop.f32.mrb[0].mxu0
        %v802 = vadd.f32 0.0, %v801
        %v803 = vpop.f32.mrb[0].mxu0
        %v804 = vadd.f32 0.0, %v803
        %v805 = vpop.f32.mrb[0].mxu0
        %v806 = vadd.f32 0.0, %v805
        %807 = vmatprep.mubr.bf16.mxu0 0
        %808 = vmatmul.mubr.bf16.gmra.mrb[0].mxu0 %v456
        %v809 = vpop.f32.mrb[0].mxu0
        %v810 = vadd.f32 0.0, %v809
        %v811 = vpop.f32.mrb[0].mxu0
        %v812 = vadd.f32 0.0, %v811
        %v813 = vpop.f32.mrb[0].mxu0
        %v814 = vadd.f32 0.0, %v813
        %v815 = vpop.f32.mrb[0].mxu0
        %v816 = vadd.f32 0.0, %v815
        %817 = vmatprep.mubr.bf16.mxu0 0
        %818 = vmatmul.mubr.bf16.gmra.mrb[0].mxu0 %v459
        %v819 = vpop.f32.mrb[0].mxu0
        %v820 = vadd.f32 0.0, %v819
        %v821 = vpop.f32.mrb[0].mxu0
        %v822 = vadd.f32 0.0, %v821
        %v823 = vpop.f32.mrb[0].mxu0
        %v824 = vadd.f32 0.0, %v823
        %v825 = vpop.f32.mrb[0].mxu0
        %v826 = vadd.f32 0.0, %v825
        %827 = vmatprep.mubr.bf16.mxu0 0
        %828 = vmatmul.mubr.bf16.gmra.mrb[0].mxu0 %v462
        %v829 = vpop.f32.mrb[0].mxu0
        %v830 = vadd.f32 0.0, %v829
        %v831 = vpop.f32.mrb[0].mxu0
        %v832 = vadd.f32 0.0, %v831
        %v833 = vpop.f32.mrb[0].mxu0
        %v834 = vadd.f32 0.0, %v833
        %v835 = vpop.f32.mrb[0].mxu0
        %v836 = vadd.f32 0.0, %v835
        %837 = vmatprep.mubr.bf16.mxu0 0
        %838 = vmatmul.mubr.bf16.gmra.mrb[0].mxu0 %v465
        %v839 = vpop.f32.mrb[0].mxu0
        %v840 = vadd.f32 0.0, %v839
        %v841 = vpop.f32.mrb[0].mxu0
        %v842 = vadd.f32 0.0, %v841
        %v843 = vpop.f32.mrb[0].mxu0
        %v844 = vadd.f32 0.0, %v843
        %v845 = vpop.f32.mrb[0].mxu0
        %v846 = vadd.f32 0.0, %v845
        %847 = vmatprep.mubr.bf16.mxu0 0
        %848 = vmatmul.mubr.bf16.gmra.mrb[0].mxu0 %v468
        %v849 = vpop.f32.mrb[0].mxu0
        %v850 = vadd.f32 0.0, %v849
        %v851 = vpop.f32.mrb[0].mxu0
        %v852 = vadd.f32 0.0, %v851
        %v853 = vpop.f32.mrb[0].mxu0
        %v854 = vadd.f32 0.0, %v853
        %v855 = vpop.f32.mrb[0].mxu0
        %v856 = vadd.f32 0.0, %v855
        %857 = vdwg.mxu0
        %858 = vmatprep.subr.bf16.mxu0 %v493
        %859 = vmatpush1.bf16.msra.mxu0 %v490
        %860 = vmatprep.subr.bf16.mxu0 0
        %861 = vmatpush1.bf16.msra.mxu0 0
        %862 = vmatprep.subr.bf16.mxu0 0
        %863 = vmatpush1.bf16.msra.mxu0 0
        %864 = vmatprep.subr.bf16.mxu0 0
        %865 = vmatpush1.bf16.msra.mxu0 0
        %866 = vmatprep.subr.bf16.mxu0 0
        %867 = vmatpush1.bf16.msra.mxu0 0
        %868 = vmatprep.subr.bf16.mxu0 0
        %869 = vmatpush1.bf16.msra.mxu0 0
        %870 = vmatprep.subr.bf16.mxu0 0
        %871 = vmatpush1.bf16.msra.mxu0 0
        %872 = vmatprep.subr.bf16.mxu0 0
        %873 = vmatpush1.bf16.msra.mxu0 0
        %874 = vmatprep.subr.bf16.mxu0 0
        %875 = vmatpush1.bf16.msra.mxu0 0
        %876 = vmatprep.subr.bf16.mxu0 0
        %877 = vmatpush1.bf16.msra.mxu0 0
        %878 = vmatprep.subr.bf16.mxu0 0
        %879 = vmatpush1.bf16.msra.mxu0 0
        %880 = vmatprep.subr.bf16.mxu0 0
        %881 = vmatpush1.bf16.msra.mxu0 0
        %882 = vmatprep.subr.bf16.mxu0 0
        %883 = vmatpush1.bf16.msra.mxu0 0
        %884 = vmatprep.subr.bf16.mxu0 0
        %885 = vmatpush1.bf16.msra.mxu0 0
        %886 = vmatprep.subr.bf16.mxu0 0
        %887 = vmatpush1.bf16.msra.mxu0 0
        %888 = vmatprep.subr.bf16.mxu0 0
        %889 = vmatpush1.bf16.msra.mxu0 0
        %890 = vmatprep.mubr.bf16.mxu0 0
        %891 = vmatmul.mubr.bf16.gmra.mrb[0].mxu0 %v447
        %v892 = vpop.f32.mrb[0].mxu0
        %v893 = vadd.f32 0.0, %v892
        %v894 = vpop.f32.mrb[0].mxu0
        %v895 = vadd.f32 0.0, %v894
        %v896 = vpop.f32.mrb[0].mxu0
        %v897 = vadd.f32 0.0, %v896
        %v898 = vpop.f32.mrb[0].mxu0
        %v899 = vadd.f32 0.0, %v898
        %900 = vmatprep.mubr.bf16.mxu0 0
        %901 = vmatmul.mubr.bf16.gmra.mrb[0].mxu0 %v450
        %v902 = vpop.f32.mrb[0].mxu0
        %v903 = vadd.f32 0.0, %v902
        %v904 = vpop.f32.mrb[0].mxu0
        %v905 = vadd.f32 0.0, %v904
        %v906 = vpop.f32.mrb[0].mxu0
        %v907 = vadd.f32 0.0, %v906
        %v908 = vpop.f32.mrb[0].mxu0
        %v909 = vadd.f32 0.0, %v908
        %910 = vmatprep.mubr.bf16.mxu0 0
        %911 = vmatmul.mubr.bf16.gmra.mrb[0].mxu0 %v453
        %v912 = vpop.f32.mrb[0].mxu0
        %v913 = vadd.f32 0.0, %v912
        %v914 = vpop.f32.mrb[0].mxu0
        %v915 = vadd.f32 0.0, %v914
        %v916 = vpop.f32.mrb[0].mxu0
        %v917 = vadd.f32 0.0, %v916
        %v918 = vpop.f32.mrb[0].mxu0
        %v919 = vadd.f32 0.0, %v918
        %920 = vmatprep.mubr.bf16.mxu0 0
        %921 = vmatmul.mubr.bf16.gmra.mrb[0].mxu0 %v456
        %v922 = vpop.f32.mrb[0].mxu0
        %v923 = vadd.f32 0.0, %v922
        %v924 = vpop.f32.mrb[0].mxu0
        %v925 = vadd.f32 0.0, %v924
        %v926 = vpop.f32.mrb[0].mxu0
        %v927 = vadd.f32 0.0, %v926
        %v928 = vpop.f32.mrb[0].mxu0
        %v929 = vadd.f32 0.0, %v928
        %930 = vmatprep.mubr.bf16.mxu0 0
        %931 = vmatmul.mubr.bf16.gmra.mrb[0].mxu0 %v459
        %v932 = vpop.f32.mrb[0].mxu0
        %v933 = vadd.f32 0.0, %v932
        %v934 = vpop.f32.mrb[0].mxu0
        %v935 = vadd.f32 0.0, %v934
        %v936 = vpop.f32.mrb[0].mxu0
        %v937 = vadd.f32 0.0, %v936
        %v938 = vpop.f32.mrb[0].mxu0
        %v939 = vadd.f32 0.0, %v938
        %940 = vmatprep.mubr.bf16.mxu0 0
        %941 = vmatmul.mubr.bf16.gmra.mrb[0].mxu0 %v462
        %v942 = vpop.f32.mrb[0].mxu0
        %v943 = vadd.f32 0.0, %v942
        %v944 = vpop.f32.mrb[0].mxu0
        %v945 = vadd.f32 0.0, %v944
        %v946 = vpop.f32.mrb[0].mxu0
        %v947 = vadd.f32 0.0, %v946
        %v948 = vpop.f32.mrb[0].mxu0
        %v949 = vadd.f32 0.0, %v948
        %950 = vmatprep.mubr.bf16.mxu0 0
        %951 = vmatmul.mubr.bf16.gmra.mrb[0].mxu0 %v465
        %v952 = vpop.f32.mrb[0].mxu0
        %v953 = vadd.f32 0.0, %v952
        %v954 = vpop.f32.mrb[0].mxu0
        %v955 = vadd.f32 0.0, %v954
        %v956 = vpop.f32.mrb[0].mxu0
        %v957 = vadd.f32 0.0, %v956
        %v958 = vpop.f32.mrb[0].mxu0
        %v959 = vadd.f32 0.0, %v958
        %960 = vmatprep.mubr.bf16.mxu0 0
        %961 = vmatmul.mubr.bf16.gmra.mrb[0].mxu0 %v468
        %v962 = vpop.f32.mrb[0].mxu0
        %v963 = vadd.f32 0.0, %v962
        %v964 = vpop.f32.mrb[0].mxu0
        %v965 = vadd.f32 0.0, %v964
        %v966 = vpop.f32.mrb[0].mxu0
        %v967 = vadd.f32 0.0, %v966
        %v968 = vpop.f32.mrb[0].mxu0
        %v969 = vadd.f32 0.0, %v968
        %970 = vdwg.mxu0
        %971 = vmatprep.subr.bf16.mxu0 %v499
        %972 = vmatpush1.bf16.msra.mxu0 %v496
        %973 = vmatprep.subr.bf16.mxu0 0
        %974 = vmatpush1.bf16.msra.mxu0 0
        %975 = vmatprep.subr.bf16.mxu0 0
        %976 = vmatpush1.bf16.msra.mxu0 0
        %977 = vmatprep.subr.bf16.mxu0 0
        %978 = vmatpush1.bf16.msra.mxu0 0
        %979 = vmatprep.subr.bf16.mxu0 0
        %980 = vmatpush1.bf16.msra.mxu0 0
        %981 = vmatprep.subr.bf16.mxu0 0
        %982 = vmatpush1.bf16.msra.mxu0 0
        %983 = vmatprep.subr.bf16.mxu0 0
        %984 = vmatpush1.bf16.msra.mxu0 0
        %985 = vmatprep.subr.bf16.mxu0 0
        %986 = vmatpush1.bf16.msra.mxu0 0
        %987 = vmatprep.subr.bf16.mxu0 0
        %988 = vmatpush1.bf16.msra.mxu0 0
        %989 = vmatprep.subr.bf16.mxu0 0
        %990 = vmatpush1.bf16.msra.mxu0 0
        %991 = vmatprep.subr.bf16.mxu0 0
        %992 = vmatpush1.bf16.msra.mxu0 0
        %993 = vmatprep.subr.bf16.mxu0 0
        %994 = vmatpush1.bf16.msra.mxu0 0
        %995 = vmatprep.subr.bf16.mxu0 0
        %996 = vmatpush1.bf16.msra.mxu0 0
        %997 = vmatprep.subr.bf16.mxu0 0
        %998 = vmatpush1.bf16.msra.mxu0 0
        %999 = vmatprep.subr.bf16.mxu0 0
        %1000 = vmatpush1.bf16.msra.mxu0 0
        %1001 = vmatprep.subr.bf16.mxu0 0
        %1002 = vmatpush1.bf16.msra.mxu0 0
        %1003 = vmatprep.mubr.bf16.mxu0 0
        %1004 = vmatmul.mubr.bf16.gmra.mrb[0].mxu0 %v447
        %v1005 = vpop.f32.mrb[0].mxu0
        %v1006 = vadd.f32 0.0, %v1005
        %v1007 = vpop.f32.mrb[0].mxu0
        %v1008 = vadd.f32 0.0, %v1007
        %v1009 = vpop.f32.mrb[0].mxu0
        %v1010 = vadd.f32 0.0, %v1009
        %v1011 = vpop.f32.mrb[0].mxu0
        %v1012 = vadd.f32 0.0, %v1011
        %1013 = vmatprep.mubr.bf16.mxu0 0
        %1014 = vmatmul.mubr.bf16.gmra.mrb[0].mxu0 %v450
        %v1015 = vpop.f32.mrb[0].mxu0
        %v1016 = vadd.f32 0.0, %v1015
        %v1017 = vpop.f32.mrb[0].mxu0
        %v1018 = vadd.f32 0.0, %v1017
        %v1019 = vpop.f32.mrb[0].mxu0
        %v1020 = vadd.f32 0.0, %v1019
        %v1021 = vpop.f32.mrb[0].mxu0
        %v1022 = vadd.f32 0.0, %v1021
        %1023 = vmatprep.mubr.bf16.mxu0 0
        %1024 = vmatmul.mubr.bf16.gmra.mrb[0].mxu0 %v453
        %v1025 = vpop.f32.mrb[0].mxu0
        %v1026 = vadd.f32 0.0, %v1025
        %v1027 = vpop.f32.mrb[0].mxu0
        %v1028 = vadd.f32 0.0, %v1027
        %v1029 = vpop.f32.mrb[0].mxu0
        %v1030 = vadd.f32 0.0, %v1029
        %v1031 = vpop.f32.mrb[0].mxu0
        %v1032 = vadd.f32 0.0, %v1031
        %1033 = vmatprep.mubr.bf16.mxu0 0
        %1034 = vmatmul.mubr.bf16.gmra.mrb[0].mxu0 %v456
        %v1035 = vpop.f32.mrb[0].mxu0
        %v1036 = vadd.f32 0.0, %v1035
        %v1037 = vpop.f32.mrb[0].mxu0
        %v1038 = vadd.f32 0.0, %v1037
        %v1039 = vpop.f32.mrb[0].mxu0
        %v1040 = vadd.f32 0.0, %v1039
        %v1041 = vpop.f32.mrb[0].mxu0
        %v1042 = vadd.f32 0.0, %v1041
        %1043 = vmatprep.mubr.bf16.mxu0 0
        %1044 = vmatmul.mubr.bf16.gmra.mrb[0].mxu0 %v459
        %v1045 = vpop.f32.mrb[0].mxu0
        %v1046 = vadd.f32 0.0, %v1045
        %v1047 = vpop.f32.mrb[0].mxu0
        %v1048 = vadd.f32 0.0, %v1047
        %v1049 = vpop.f32.mrb[0].mxu0
        %v1050 = vadd.f32 0.0, %v1049
        %v1051 = vpop.f32.mrb[0].mxu0
        %v1052 = vadd.f32 0.0, %v1051
        %1053 = vmatprep.mubr.bf16.mxu0 0
        %1054 = vmatmul.mubr.bf16.gmra.mrb[0].mxu0 %v462
        %v1055 = vpop.f32.mrb[0].mxu0
        %v1056 = vadd.f32 0.0, %v1055
        %v1057 = vpop.f32.mrb[0].mxu0
        %v1058 = vadd.f32 0.0, %v1057
        %v1059 = vpop.f32.mrb[0].mxu0
        %v1060 = vadd.f32 0.0, %v1059
        %v1061 = vpop.f32.mrb[0].mxu0
        %v1062 = vadd.f32 0.0, %v1061
        %1063 = vmatprep.mubr.bf16.mxu0 0
        %1064 = vmatmul.mubr.bf16.gmra.mrb[0].mxu0 %v465
        %v1065 = vpop.f32.mrb[0].mxu0
        %v1066 = vadd.f32 0.0, %v1065
        %v1067 = vpop.f32.mrb[0].mxu0
        %v1068 = vadd.f32 0.0, %v1067
        %v1069 = vpop.f32.mrb[0].mxu0
        %v1070 = vadd.f32 0.0, %v1069
        %v1071 = vpop.f32.mrb[0].mxu0
        %v1072 = vadd.f32 0.0, %v1071
        %1073 = vmatprep.mubr.bf16.mxu0 0
        %1074 = vmatmul.mubr.bf16.gmra.mrb[0].mxu0 %v468
        %v1075 = vpop.f32.mrb[0].mxu0
        %v1076 = vadd.f32 0.0, %v1075
        %v1077 = vpop.f32.mrb[0].mxu0
        %v1078 = vadd.f32 0.0, %v1077
        %v1079 = vpop.f32.mrb[0].mxu0
        %v1080 = vadd.f32 0.0, %v1079
        %v1081 = vpop.f32.mrb[0].mxu0
        %v1082 = vadd.f32 0.0, %v1081
        %1083 = vdwg.mxu0
        %1084 = vmatprep.subr.bf16.mxu0 %v505
        %1085 = vmatpush1.bf16.msra.mxu0 %v502
        %1086 = vmatprep.subr.bf16.mxu0 0
        %1087 = vmatpush1.bf16.msra.mxu0 0
        %1088 = vmatprep.subr.bf16.mxu0 0
        %1089 = vmatpush1.bf16.msra.mxu0 0
        %1090 = vmatprep.subr.bf16.mxu0 0
        %1091 = vmatpush1.bf16.msra.mxu0 0
        %1092 = vmatprep.subr.bf16.mxu0 0
        %1093 = vmatpush1.bf16.msra.mxu0 0
        %1094 = vmatprep.subr.bf16.mxu0 0
        %1095 = vmatpush1.bf16.msra.mxu0 0
        %1096 = vmatprep.subr.bf16.mxu0 0
        %1097 = vmatpush1.bf16.msra.mxu0 0
        %1098 = vmatprep.subr.bf16.mxu0 0
        %1099 = vmatpush1.bf16.msra.mxu0 0
        %1100 = vmatprep.subr.bf16.mxu0 0
        %1101 = vmatpush1.bf16.msra.mxu0 0
        %1102 = vmatprep.subr.bf16.mxu0 0
        %1103 = vmatpush1.bf16.msra.mxu0 0
        %1104 = vmatprep.subr.bf16.mxu0 0
        %1105 = vmatpush1.bf16.msra.mxu0 0
        %1106 = vmatprep.subr.bf16.mxu0 0
        %1107 = vmatpush1.bf16.msra.mxu0 0
        %1108 = vmatprep.subr.bf16.mxu0 0
        %1109 = vmatpush1.bf16.msra.mxu0 0
        %1110 = vmatprep.subr.bf16.mxu0 0
        %1111 = vmatpush1.bf16.msra.mxu0 0
        %1112 = vmatprep.subr.bf16.mxu0 0
        %1113 = vmatpush1.bf16.msra.mxu0 0
        %1114 = vmatprep.subr.bf16.mxu0 0
        %1115 = vmatpush1.bf16.msra.mxu0 0
        %1116 = vmatprep.mubr.bf16.mxu0 0
        %1117 = vmatmul.mubr.bf16.gmra.mrb[0].mxu0 %v447
        %v1118 = vpop.f32.mrb[0].mxu0
        %v1119 = vadd.f32 0.0, %v1118
        %v1120 = vpop.f32.mrb[0].mxu0
        %v1121 = vadd.f32 0.0, %v1120
        %v1122 = vpop.f32.mrb[0].mxu0
        %v1123 = vadd.f32 0.0, %v1122
        %v1124 = vpop.f32.mrb[0].mxu0
        %v1125 = vadd.f32 0.0, %v1124
        %1126 = vmatprep.mubr.bf16.mxu0 0
        %1127 = vmatmul.mubr.bf16.gmra.mrb[0].mxu0 %v450
        %v1128 = vpop.f32.mrb[0].mxu0
        %v1129 = vadd.f32 0.0, %v1128
        %v1130 = vpop.f32.mrb[0].mxu0
        %v1131 = vadd.f32 0.0, %v1130
        %v1132 = vpop.f32.mrb[0].mxu0
        %v1133 = vadd.f32 0.0, %v1132
        %v1134 = vpop.f32.mrb[0].mxu0
        %v1135 = vadd.f32 0.0, %v1134
        %1136 = vmatprep.mubr.bf16.mxu0 0
        %1137 = vmatmul.mubr.bf16.gmra.mrb[0].mxu0 %v453
        %v1138 = vpop.f32.mrb[0].mxu0
        %v1139 = vadd.f32 0.0, %v1138
        %v1140 = vpop.f32.mrb[0].mxu0
        %v1141 = vadd.f32 0.0, %v1140
        %v1142 = vpop.f32.mrb[0].mxu0
        %v1143 = vadd.f32 0.0, %v1142
        %v1144 = vpop.f32.mrb[0].mxu0
        %v1145 = vadd.f32 0.0, %v1144
        %1146 = vmatprep.mubr.bf16.mxu0 0
        %1147 = vmatmul.mubr.bf16.gmra.mrb[0].mxu0 %v456
        %v1148 = vpop.f32.mrb[0].mxu0
        %v1149 = vadd.f32 0.0, %v1148
        %v1150 = vpop.f32.mrb[0].mxu0
        %v1151 = vadd.f32 0.0, %v1150
        %v1152 = vpop.f32.mrb[0].mxu0
        %v1153 = vadd.f32 0.0, %v1152
        %v1154 = vpop.f32.mrb[0].mxu0
        %v1155 = vadd.f32 0.0, %v1154
        %1156 = vmatprep.mubr.bf16.mxu0 0
        %1157 = vmatmul.mubr.bf16.gmra.mrb[0].mxu0 %v459
        %v1158 = vpop.f32.mrb[0].mxu0
        %v1159 = vadd.f32 0.0, %v1158
        %v1160 = vpop.f32.mrb[0].mxu0
        %v1161 = vadd.f32 0.0, %v1160
        %v1162 = vpop.f32.mrb[0].mxu0
        %v1163 = vadd.f32 0.0, %v1162
        %v1164 = vpop.f32.mrb[0].mxu0
        %v1165 = vadd.f32 0.0, %v1164
        %1166 = vmatprep.mubr.bf16.mxu0 0
        %1167 = vmatmul.mubr.bf16.gmra.mrb[0].mxu0 %v462
        %v1168 = vpop.f32.mrb[0].mxu0
        %v1169 = vadd.f32 0.0, %v1168
        %v1170 = vpop.f32.mrb[0].mxu0
        %v1171 = vadd.f32 0.0, %v1170
        %v1172 = vpop.f32.mrb[0].mxu0
        %v1173 = vadd.f32 0.0, %v1172
        %v1174 = vpop.f32.mrb[0].mxu0
        %v1175 = vadd.f32 0.0, %v1174
        %1176 = vmatprep.mubr.bf16.mxu0 0
        %1177 = vmatmul.mubr.bf16.gmra.mrb[0].mxu0 %v465
        %v1178 = vpop.f32.mrb[0].mxu0
        %v1179 = vadd.f32 0.0, %v1178
        %v1180 = vpop.f32.mrb[0].mxu0
        %v1181 = vadd.f32 0.0, %v1180
        %v1182 = vpop.f32.mrb[0].mxu0
        %v1183 = vadd.f32 0.0, %v1182
        %v1184 = vpop.f32.mrb[0].mxu0
        %v1185 = vadd.f32 0.0, %v1184
        %1186 = vmatprep.mubr.bf16.mxu0 0
        %1187 = vmatmul.mubr.bf16.gmra.mrb[0].mxu0 %v468
        %v1188 = vpop.f32.mrb[0].mxu0
        %v1189 = vadd.f32 0.0, %v1188
        %v1190 = vpop.f32.mrb[0].mxu0
        %v1191 = vadd.f32 0.0, %v1190
        %v1192 = vpop.f32.mrb[0].mxu0
        %v1193 = vadd.f32 0.0, %v1192
        %v1194 = vpop.f32.mrb[0].mxu0
        %v1195 = vadd.f32 0.0, %v1194
        %1196 = vdwg.mxu0
        %1197 = vmatprep.subr.bf16.mxu0 %v511
        %1198 = vmatpush1.bf16.msra.mxu0 %v508
        %1199 = vmatprep.subr.bf16.mxu0 0
        %1200 = vmatpush1.bf16.msra.mxu0 0
        %1201 = vmatprep.subr.bf16.mxu0 0
        %1202 = vmatpush1.bf16.msra.mxu0 0
        %1203 = vmatprep.subr.bf16.mxu0 0
        %1204 = vmatpush1.bf16.msra.mxu0 0
        %1205 = vmatprep.subr.bf16.mxu0 0
        %1206 = vmatpush1.bf16.msra.mxu0 0
        %1207 = vmatprep.subr.bf16.mxu0 0
        %1208 = vmatpush1.bf16.msra.mxu0 0
        %1209 = vmatprep.subr.bf16.mxu0 0
        %1210 = vmatpush1.bf16.msra.mxu0 0
        %1211 = vmatprep.subr.bf16.mxu0 0
        %1212 = vmatpush1.bf16.msra.mxu0 0
        %1213 = vmatprep.subr.bf16.mxu0 0
        %1214 = vmatpush1.bf16.msra.mxu0 0
        %1215 = vmatprep.subr.bf16.mxu0 0
        %1216 = vmatpush1.bf16.msra.mxu0 0
        %1217 = vmatprep.subr.bf16.mxu0 0
        %1218 = vmatpush1.bf16.msra.mxu0 0
        %1219 = vmatprep.subr.bf16.mxu0 0
        %1220 = vmatpush1.bf16.msra.mxu0 0
        %1221 = vmatprep.subr.bf16.mxu0 0
        %1222 = vmatpush1.bf16.msra.mxu0 0
        %1223 = vmatprep.subr.bf16.mxu0 0
        %1224 = vmatpush1.bf16.msra.mxu0 0
        %1225 = vmatprep.subr.bf16.mxu0 0
        %1226 = vmatpush1.bf16.msra.mxu0 0
        %1227 = vmatprep.subr.bf16.mxu0 0
        %1228 = vmatpush1.bf16.msra.mxu0 0
        %1229 = vmatprep.mubr.bf16.mxu0 0
        %1230 = vmatmul.mubr.bf16.gmra.mrb[0].mxu0 %v447
        %v1231 = vpop.f32.mrb[0].mxu0
        %v1232 = vadd.f32 0.0, %v1231
        %v1233 = vpop.f32.mrb[0].mxu0
        %v1234 = vadd.f32 0.0, %v1233
        %v1235 = vpop.f32.mrb[0].mxu0
        %v1236 = vadd.f32 0.0, %v1235
        %v1237 = vpop.f32.mrb[0].mxu0
        %v1238 = vadd.f32 0.0, %v1237
        %1239 = vmatprep.mubr.bf16.mxu0 0
        %1240 = vmatmul.mubr.bf16.gmra.mrb[0].mxu0 %v450
        %v1241 = vpop.f32.mrb[0].mxu0
        %v1242 = vadd.f32 0.0, %v1241
        %v1243 = vpop.f32.mrb[0].mxu0
        %v1244 = vadd.f32 0.0, %v1243
        %v1245 = vpop.f32.mrb[0].mxu0
        %v1246 = vadd.f32 0.0, %v1245
        %v1247 = vpop.f32.mrb[0].mxu0
        %v1248 = vadd.f32 0.0, %v1247
        %1249 = vmatprep.mubr.bf16.mxu0 0
        %1250 = vmatmul.mubr.bf16.gmra.mrb[0].mxu0 %v453
        %v1251 = vpop.f32.mrb[0].mxu0
        %v1252 = vadd.f32 0.0, %v1251
        %v1253 = vpop.f32.mrb[0].mxu0
        %v1254 = vadd.f32 0.0, %v1253
        %v1255 = vpop.f32.mrb[0].mxu0
        %v1256 = vadd.f32 0.0, %v1255
        %v1257 = vpop.f32.mrb[0].mxu0
        %v1258 = vadd.f32 0.0, %v1257
        %1259 = vmatprep.mubr.bf16.mxu0 0
        %1260 = vmatmul.mubr.bf16.gmra.mrb[0].mxu0 %v456
        %v1261 = vpop.f32.mrb[0].mxu0
        %v1262 = vadd.f32 0.0, %v1261
        %v1263 = vpop.f32.mrb[0].mxu0
        %v1264 = vadd.f32 0.0, %v1263
        %v1265 = vpop.f32.mrb[0].mxu0
        %v1266 = vadd.f32 0.0, %v1265
        %v1267 = vpop.f32.mrb[0].mxu0
        %v1268 = vadd.f32 0.0, %v1267
        %1269 = vmatprep.mubr.bf16.mxu0 0
        %1270 = vmatmul.mubr.bf16.gmra.mrb[0].mxu0 %v459
        %v1271 = vpop.f32.mrb[0].mxu0
        %v1272 = vadd.f32 0.0, %v1271
        %v1273 = vpop.f32.mrb[0].mxu0
        %v1274 = vadd.f32 0.0, %v1273
        %v1275 = vpop.f32.mrb[0].mxu0
        %v1276 = vadd.f32 0.0, %v1275
        %v1277 = vpop.f32.mrb[0].mxu0
        %v1278 = vadd.f32 0.0, %v1277
        %1279 = vmatprep.mubr.bf16.mxu0 0
        %1280 = vmatmul.mubr.bf16.gmra.mrb[0].mxu0 %v462
        %v1281 = vpop.f32.mrb[0].mxu0
        %v1282 = vadd.f32 0.0, %v1281
        %v1283 = vpop.f32.mrb[0].mxu0
        %v1284 = vadd.f32 0.0, %v1283
        %v1285 = vpop.f32.mrb[0].mxu0
        %v1286 = vadd.f32 0.0, %v1285
        %v1287 = vpop.f32.mrb[0].mxu0
        %v1288 = vadd.f32 0.0, %v1287
        %1289 = vmatprep.mubr.bf16.mxu0 0
        %1290 = vmatmul.mubr.bf16.gmra.mrb[0].mxu0 %v465
        %v1291 = vpop.f32.mrb[0].mxu0
        %v1292 = vadd.f32 0.0, %v1291
        %v1293 = vpop.f32.mrb[0].mxu0
        %v1294 = vadd.f32 0.0, %v1293
        %v1295 = vpop.f32.mrb[0].mxu0
        %v1296 = vadd.f32 0.0, %v1295
        %v1297 = vpop.f32.mrb[0].mxu0
        %v1298 = vadd.f32 0.0, %v1297
        %1299 = vmatprep.mubr.bf16.mxu0 0
        %1300 = vmatmul.mubr.bf16.gmra.mrb[0].mxu0 %v468
        %v1301 = vpop.f32.mrb[0].mxu0
        %v1302 = vadd.f32 0.0, %v1301
        %v1303 = vpop.f32.mrb[0].mxu0
        %v1304 = vadd.f32 0.0, %v1303
        %v1305 = vpop.f32.mrb[0].mxu0
        %v1306 = vadd.f32 0.0, %v1305
        %v1307 = vpop.f32.mrb[0].mxu0
        %v1308 = vadd.f32 0.0, %v1307
        %1309 = vdwg.mxu0
        %1310 = vmatprep.subr.bf16.mxu0 %v517
        %1311 = vmatpush1.bf16.msra.mxu0 %v514
        %1312 = vmatprep.subr.bf16.mxu0 0
        %1313 = vmatpush1.bf16.msra.mxu0 0
        %1314 = vmatprep.subr.bf16.mxu0 0
        %1315 = vmatpush1.bf16.msra.mxu0 0
        %1316 = vmatprep.subr.bf16.mxu0 0
        %1317 = vmatpush1.bf16.msra.mxu0 0
        %1318 = vmatprep.subr.bf16.mxu0 0
        %1319 = vmatpush1.bf16.msra.mxu0 0
        %1320 = vmatprep.subr.bf16.mxu0 0
        %1321 = vmatpush1.bf16.msra.mxu0 0
        %1322 = vmatprep.subr.bf16.mxu0 0
        %1323 = vmatpush1.bf16.msra.mxu0 0
        %1324 = vmatprep.subr.bf16.mxu0 0
        %1325 = vmatpush1.bf16.msra.mxu0 0
        %1326 = vmatprep.subr.bf16.mxu0 0
        %1327 = vmatpush1.bf16.msra.mxu0 0
        %1328 = vmatprep.subr.bf16.mxu0 0
        %1329 = vmatpush1.bf16.msra.mxu0 0
        %1330 = vmatprep.subr.bf16.mxu0 0
        %1331 = vmatpush1.bf16.msra.mxu0 0
        %1332 = vmatprep.subr.bf16.mxu0 0
        %1333 = vmatpush1.bf16.msra.mxu0 0
        %1334 = vmatprep.subr.bf16.mxu0 0
        %1335 = vmatpush1.bf16.msra.mxu0 0
        %1336 = vmatprep.subr.bf16.mxu0 0
        %1337 = vmatpush1.bf16.msra.mxu0 0
        %1338 = vmatprep.subr.bf16.mxu0 0
        %1339 = vmatpush1.bf16.msra.mxu0 0
        %1340 = vmatprep.subr.bf16.mxu0 0
        %1341 = vmatpush1.bf16.msra.mxu0 0
        %1342 = vmatprep.mubr.bf16.mxu0 0
        %1343 = vmatmul.mubr.bf16.gmra.mrb[0].mxu0 %v447
        %v1344 = vpop.f32.mrb[0].mxu0
        %v1345 = vadd.f32 0.0, %v1344
        %v1346 = vpop.f32.mrb[0].mxu0
        %v1347 = vadd.f32 0.0, %v1346
        %v1348 = vpop.f32.mrb[0].mxu0
        %v1349 = vadd.f32 0.0, %v1348
        %v1350 = vpop.f32.mrb[0].mxu0
        %v1351 = vadd.f32 0.0, %v1350
        %1352 = vmatprep.mubr.bf16.mxu0 0
        %1353 = vmatmul.mubr.bf16.gmra.mrb[0].mxu0 %v450
        %v1354 = vpop.f32.mrb[0].mxu0
        %v1355 = vadd.f32 0.0, %v1354
        %v1356 = vpop.f32.mrb[0].mxu0
        %v1357 = vadd.f32 0.0, %v1356
        %v1358 = vpop.f32.mrb[0].mxu0
        %v1359 = vadd.f32 0.0, %v1358
        %v1360 = vpop.f32.mrb[0].mxu0
        %v1361 = vadd.f32 0.0, %v1360
        %1362 = vmatprep.mubr.bf16.mxu0 0
        %1363 = vmatmul.mubr.bf16.gmra.mrb[0].mxu0 %v453
        %v1364 = vpop.f32.mrb[0].mxu0
        %v1365 = vadd.f32 0.0, %v1364
        %v1366 = vpop.f32.mrb[0].mxu0
        %v1367 = vadd.f32 0.0, %v1366
        %v1368 = vpop.f32.mrb[0].mxu0
        %v1369 = vadd.f32 0.0, %v1368
        %v1370 = vpop.f32.mrb[0].mxu0
        %v1371 = vadd.f32 0.0, %v1370
        %1372 = vmatprep.mubr.bf16.mxu0 0
        %1373 = vmatmul.mubr.bf16.gmra.mrb[0].mxu0 %v456
        %v1374 = vpop.f32.mrb[0].mxu0
        %v1375 = vadd.f32 0.0, %v1374
        %v1376 = vpop.f32.mrb[0].mxu0
        %v1377 = vadd.f32 0.0, %v1376
        %v1378 = vpop.f32.mrb[0].mxu0
        %v1379 = vadd.f32 0.0, %v1378
        %v1380 = vpop.f32.mrb[0].mxu0
        %v1381 = vadd.f32 0.0, %v1380
        %1382 = vmatprep.mubr.bf16.mxu0 0
        %1383 = vmatmul.mubr.bf16.gmra.mrb[0].mxu0 %v459
        %v1384 = vpop.f32.mrb[0].mxu0
        %v1385 = vadd.f32 0.0, %v1384
        %v1386 = vpop.f32.mrb[0].mxu0
        %v1387 = vadd.f32 0.0, %v1386
        %v1388 = vpop.f32.mrb[0].mxu0
        %v1389 = vadd.f32 0.0, %v1388
        %v1390 = vpop.f32.mrb[0].mxu0
        %v1391 = vadd.f32 0.0, %v1390
        %1392 = vmatprep.mubr.bf16.mxu0 0
        %1393 = vmatmul.mubr.bf16.gmra.mrb[0].mxu0 %v462
        %v1394 = vpop.f32.mrb[0].mxu0
        %v1395 = vadd.f32 0.0, %v1394
        %v1396 = vpop.f32.mrb[0].mxu0
        %v1397 = vadd.f32 0.0, %v1396
        %v1398 = vpop.f32.mrb[0].mxu0
        %v1399 = vadd.f32 0.0, %v1398
        %v1400 = vpop.f32.mrb[0].mxu0
        %v1401 = vadd.f32 0.0, %v1400
        %1402 = vmatprep.mubr.bf16.mxu0 0
        %1403 = vmatmul.mubr.bf16.gmra.mrb[0].mxu0 %v465
        %v1404 = vpop.f32.mrb[0].mxu0
        %v1405 = vadd.f32 0.0, %v1404
        %v1406 = vpop.f32.mrb[0].mxu0
        %v1407 = vadd.f32 0.0, %v1406
        %v1408 = vpop.f32.mrb[0].mxu0
        %v1409 = vadd.f32 0.0, %v1408
        %v1410 = vpop.f32.mrb[0].mxu0
        %v1411 = vadd.f32 0.0, %v1410
        %1412 = vmatprep.mubr.bf16.mxu0 0
        %1413 = vmatmul.mubr.bf16.gmra.mrb[0].mxu0 %v468
        %v1414 = vpop.f32.mrb[0].mxu0
        %v1415 = vadd.f32 0.0, %v1414
        %v1416 = vpop.f32.mrb[0].mxu0
        %v1417 = vadd.f32 0.0, %v1416
        %v1418 = vpop.f32.mrb[0].mxu0
        %v1419 = vadd.f32 0.0, %v1418
        %v1420 = vpop.f32.mrb[0].mxu0
        %v1421 = vadd.f32 0.0, %v1420
        %1422 = vdwg.mxu0
        %v1423 = vmax.f32 %v554, 0.0
        %v1424 = vmax.f32 %v556, 0.0
        %v1425 = vmax.f32 %v667, 0.0
        %v1426 = vmax.f32 %v669, 0.0
        %v1427 = vmax.f32 %v780, 0.0
        %v1428 = vmax.f32 %v782, 0.0
        %v1429 = vmax.f32 %v893, 0.0
        %v1430 = vmax.f32 %v895, 0.0
        %v1431 = vmax.f32 %v1006, 0.0
        %v1432 = vmax.f32 %v1008, 0.0
        %v1433 = vmax.f32 %v1119, 0.0
        %v1434 = vmax.f32 %v1121, 0.0
        %v1435 = vmax.f32 %v1232, 0.0
        %v1436 = vmax.f32 %v1234, 0.0
        %v1437 = vmax.f32 %v1345, 0.0
        %v1438 = vmax.f32 %v1347, 0.0
        %v1439 = vmax.f32 %v558, 0.0
        %v1440 = vmax.f32 %v560, 0.0
        %v1441 = vmax.f32 %v671, 0.0
        %v1442 = vmax.f32 %v673, 0.0
        %v1443 = vmax.f32 %v784, 0.0
        %v1444 = vmax.f32 %v786, 0.0
        %v1445 = vmax.f32 %v897, 0.0
        %v1446 = vmax.f32 %v899, 0.0
        %v1447 = vmax.f32 %v1010, 0.0
        %v1448 = vmax.f32 %v1012, 0.0
        %v1449 = vmax.f32 %v1123, 0.0
        %v1450 = vmax.f32 %v1125, 0.0
        %v1451 = vmax.f32 %v1236, 0.0
        %v1452 = vmax.f32 %v1238, 0.0
        %v1453 = vmax.f32 %v1349, 0.0
        %v1454 = vmax.f32 %v1351, 0.0
        %v1455 = vmax.f32 %v564, 0.0
        %v1456 = vmax.f32 %v566, 0.0
        %v1457 = vmax.f32 %v677, 0.0
        %v1458 = vmax.f32 %v679, 0.0
        %v1459 = vmax.f32 %v790, 0.0
        %v1460 = vmax.f32 %v792, 0.0
        %v1461 = vmax.f32 %v903, 0.0
        %v1462 = vmax.f32 %v905, 0.0
        %v1463 = vmax.f32 %v1016, 0.0
        %v1464 = vmax.f32 %v1018, 0.0
        %v1465 = vmax.f32 %v1129, 0.0
        %v1466 = vmax.f32 %v1131, 0.0
        %v1467 = vmax.f32 %v1242, 0.0
        %v1468 = vmax.f32 %v1244, 0.0
        %v1469 = vmax.f32 %v1355, 0.0
        %v1470 = vmax.f32 %v1357, 0.0
        %v1471 = vmax.f32 %v568, 0.0
        %v1472 = vmax.f32 %v570, 0.0
        %v1473 = vmax.f32 %v681, 0.0
        %v1474 = vmax.f32 %v683, 0.0
        %v1475 = vmax.f32 %v794, 0.0
        %v1476 = vmax.f32 %v796, 0.0
        %v1477 = vmax.f32 %v907, 0.0
        %v1478 = vmax.f32 %v909, 0.0
        %v1479 = vmax.f32 %v1020, 0.0
        %v1480 = vmax.f32 %v1022, 0.0
        %v1481 = vmax.f32 %v1133, 0.0
        %v1482 = vmax.f32 %v1135, 0.0
        %v1483 = vmax.f32 %v1246, 0.0
        %v1484 = vmax.f32 %v1248, 0.0
        %v1485 = vmax.f32 %v1359, 0.0
        %v1486 = vmax.f32 %v1361, 0.0
        %v1487 = vmax.f32 %v574, 0.0
        %v1488 = vmax.f32 %v576, 0.0
        %v1489 = vmax.f32 %v687, 0.0
        %v1490 = vmax.f32 %v689, 0.0
        %v1491 = vmax.f32 %v800, 0.0
        %v1492 = vmax.f32 %v802, 0.0
        %v1493 = vmax.f32 %v913, 0.0
        %v1494 = vmax.f32 %v915, 0.0
        %v1495 = vmax.f32 %v1026, 0.0
        %v1496 = vmax.f32 %v1028, 0.0
        %v1497 = vmax.f32 %v1139, 0.0
        %v1498 = vmax.f32 %v1141, 0.0
        %v1499 = vmax.f32 %v1252, 0.0
        %v1500 = vmax.f32 %v1254, 0.0
        %v1501 = vmax.f32 %v1365, 0.0
        %v1502 = vmax.f32 %v1367, 0.0
        %v1503 = vmax.f32 %v578, 0.0
        %v1504 = vmax.f32 %v580, 0.0
        %v1505 = vmax.f32 %v691, 0.0
        %v1506 = vmax.f32 %v693, 0.0
        %v1507 = vmax.f32 %v804, 0.0
        %v1508 = vmax.f32 %v806, 0.0
        %v1509 = vmax.f32 %v917, 0.0
        %v1510 = vmax.f32 %v919, 0.0
        %v1511 = vmax.f32 %v1030, 0.0
        %v1512 = vmax.f32 %v1032, 0.0
        %v1513 = vmax.f32 %v1143, 0.0
        %v1514 = vmax.f32 %v1145, 0.0
        %v1515 = vmax.f32 %v1256, 0.0
        %v1516 = vmax.f32 %v1258, 0.0
        %v1517 = vmax.f32 %v1369, 0.0
        %v1518 = vmax.f32 %v1371, 0.0
        %v1519 = vmax.f32 %v584, 0.0
        %v1520 = vmax.f32 %v586, 0.0
        %v1521 = vmax.f32 %v697, 0.0
        %v1522 = vmax.f32 %v699, 0.0
        %v1523 = vmax.f32 %v810, 0.0
        %v1524 = vmax.f32 %v812, 0.0
        %v1525 = vmax.f32 %v923, 0.0
        %v1526 = vmax.f32 %v925, 0.0
        %v1527 = vmax.f32 %v1036, 0.0
        %v1528 = vmax.f32 %v1038, 0.0
        %v1529 = vmax.f32 %v1149, 0.0
        %v1530 = vmax.f32 %v1151, 0.0
        %v1531 = vmax.f32 %v1262, 0.0
        %v1532 = vmax.f32 %v1264, 0.0
        %v1533 = vmax.f32 %v1375, 0.0
        %v1534 = vmax.f32 %v1377, 0.0
        %v1535 = vmax.f32 %v588, 0.0
        %v1536 = vmax.f32 %v590, 0.0
        %v1537 = vmax.f32 %v701, 0.0
        %v1538 = vmax.f32 %v703, 0.0
        %v1539 = vmax.f32 %v814, 0.0
        %v1540 = vmax.f32 %v816, 0.0
        %v1541 = vmax.f32 %v927, 0.0
        %v1542 = vmax.f32 %v929, 0.0
        %v1543 = vmax.f32 %v1040, 0.0
        %v1544 = vmax.f32 %v1042, 0.0
        %v1545 = vmax.f32 %v1153, 0.0
        %v1546 = vmax.f32 %v1155, 0.0
        %v1547 = vmax.f32 %v1266, 0.0
        %v1548 = vmax.f32 %v1268, 0.0
        %v1549 = vmax.f32 %v1379, 0.0
        %v1550 = vmax.f32 %v1381, 0.0
        %v1551 = vld [vmem:[%s2] sm:$0xf]
        %v1552 = vld [vmem:[%s2 + $0x4] sm:$0xf]
        %v1553 = vld [vmem:[%s2 + $0x8] sm:$0xf]
        %v1554 = vld [vmem:[%s2 + $0xc] sm:$0xf]
        %v1555 = vld [vmem:[%s2 + $0x10] sm:$0xf]
        %v1556 = vld [vmem:[%s2 + $0x14] sm:$0xf]
        %v1557 = vld [vmem:[%s2 + $0x18] sm:$0xf]
        %v1558 = vld [vmem:[%s2 + $0x1c] sm:$0xf]
        %v1559 = vpack.c.bf16 %v1439, %v1423
        %v1560 = vpack.c.bf16 %v1440, %v1424
        %v1561 = vpack.c.bf16 %v1441, %v1425
        %v1562 = vpack.c.bf16 %v1442, %v1426
        %v1563 = vpack.c.bf16 %v1443, %v1427
        %v1564 = vpack.c.bf16 %v1444, %v1428
        %v1565 = vpack.c.bf16 %v1445, %v1429
        %v1566 = vpack.c.bf16 %v1446, %v1430
        %v1567 = vpack.c.bf16 %v1447, %v1431
        %v1568 = vpack.c.bf16 %v1448, %v1432
        %v1569 = vpack.c.bf16 %v1449, %v1433
        %v1570 = vpack.c.bf16 %v1450, %v1434
        %v1571 = vpack.c.bf16 %v1451, %v1435
        %v1572 = vpack.c.bf16 %v1452, %v1436
        %v1573 = vpack.c.bf16 %v1453, %v1437
        %v1574 = vpack.c.bf16 %v1454, %v1438
        %v1575 = vpack.c.bf16 %v1471, %v1455
        %v1576 = vpack.c.bf16 %v1472, %v1456
        %v1577 = vpack.c.bf16 %v1473, %v1457
        %v1578 = vpack.c.bf16 %v1474, %v1458
        %v1579 = vpack.c.bf16 %v1475, %v1459
        %v1580 = vpack.c.bf16 %v1476, %v1460
        %v1581 = vpack.c.bf16 %v1477, %v1461
        %v1582 = vpack.c.bf16 %v1478, %v1462
        %v1583 = vpack.c.bf16 %v1479, %v1463
        %v1584 = vpack.c.bf16 %v1480, %v1464
        %v1585 = vpack.c.bf16 %v1481, %v1465
        %v1586 = vpack.c.bf16 %v1482, %v1466
        %v1587 = vpack.c.bf16 %v1483, %v1467
        %v1588 = vpack.c.bf16 %v1484, %v1468
        %v1589 = vpack.c.bf16 %v1485, %v1469
        %v1590 = vpack.c.bf16 %v1486, %v1470
        %v1591 = vpack.c.bf16 %v1503, %v1487
        %v1592 = vpack.c.bf16 %v1504, %v1488
        %v1593 = vpack.c.bf16 %v1505, %v1489
        %v1594 = vpack.c.bf16 %v1506, %v1490
        %v1595 = vpack.c.bf16 %v1507, %v1491
        %v1596 = vpack.c.bf16 %v1508, %v1492
        %v1597 = vpack.c.bf16 %v1509, %v1493
        %v1598 = vpack.c.bf16 %v1510, %v1494
        %v1599 = vpack.c.bf16 %v1511, %v1495
        %v1600 = vpack.c.bf16 %v1512, %v1496
        %v1601 = vpack.c.bf16 %v1513, %v1497
        %v1602 = vpack.c.bf16 %v1514, %v1498
        %v1603 = vpack.c.bf16 %v1515, %v1499
        %v1604 = vpack.c.bf16 %v1516, %v1500
        %v1605 = vpack.c.bf16 %v1517, %v1501
        %v1606 = vpack.c.bf16 %v1518, %v1502
        %v1607 = vpack.c.bf16 %v1535, %v1519
        %v1608 = vpack.c.bf16 %v1536, %v1520
        %v1609 = vpack.c.bf16 %v1537, %v1521
        %v1610 = vpack.c.bf16 %v1538, %v1522
        %v1611 = vpack.c.bf16 %v1539, %v1523
        %v1612 = vpack.c.bf16 %v1540, %v1524
        %v1613 = vpack.c.bf16 %v1541, %v1525
        %v1614 = vpack.c.bf16 %v1542, %v1526
        %v1615 = vpack.c.bf16 %v1543, %v1527
        %v1616 = vpack.c.bf16 %v1544, %v1528
        %v1617 = vpack.c.bf16 %v1545, %v1529
        %v1618 = vpack.c.bf16 %v1546, %v1530
        %v1619 = vpack.c.bf16 %v1547, %v1531
        %v1620 = vpack.c.bf16 %v1548, %v1532
        %v1621 = vpack.c.bf16 %v1549, %v1533
        %v1622 = vpack.c.bf16 %v1550, %v1534
        %v1631 = vunpack.c.l.b16 %v1551
        %v1632 = vunpack.c.l.b16 %v1552
        %v1633 = vunpack.c.l.b16 %v1553
        %v1634 = vunpack.c.l.b16 %v1554
        %v1635 = vunpack.c.l.b16 %v1555
        %v1636 = vunpack.c.l.b16 %v1556
        %v1637 = vunpack.c.l.b16 %v1557
        %v1638 = vunpack.c.l.b16 %v1558
        %v1639 = vpack.c.b16 %v1632, %v1631
        %v1640 = vpack.c.b16 %v1634, %v1633
        %v1641 = vpack.c.b16 %v1636, %v1635
        %v1642 = vpack.c.b16 %v1638, %v1637
        %vm1643 = vcmask 523264
        %v1645 = vsel %vm1643, %v1639, 0
        %v1648 = vsel %vm1643, %v1640, 0
        %v1651 = vsel %vm1643, %v1641, 0
        %v1654 = vsel %vm1643, %v1642, 0
        %1656 = vmatprep.subr.bf16.mxu0 %v1560
        %1657 = vmatpush1.bf16.msra.mxu0 %v1559
        %1658 = vmatprep.subr.bf16.mxu0 %v1576
        %1659 = vmatpush1.bf16.msra.mxu0 %v1575
        %1660 = vmatprep.subr.bf16.mxu0 %v1592
        %1661 = vmatpush1.bf16.msra.mxu0 %v1591
        %1662 = vmatprep.subr.bf16.mxu0 %v1608
        %1663 = vmatpush1.bf16.msra.mxu0 %v1607
        %1664 = vmatprep.subr.bf16.mxu0 0
        %1665 = vmatpush1.bf16.msra.mxu0 0
        %1666 = vmatprep.subr.bf16.mxu0 0
        %1667 = vmatpush1.bf16.msra.mxu0 0
        %1668 = vmatprep.subr.bf16.mxu0 0
        %1669 = vmatpush1.bf16.msra.mxu0 0
        %1670 = vmatprep.subr.bf16.mxu0 0
        %1671 = vmatpush1.bf16.msra.mxu0 0
        %1672 = vmatprep.subr.bf16.mxu0 0
        %1673 = vmatpush1.bf16.msra.mxu0 0
        %1674 = vmatprep.subr.bf16.mxu0 0
        %1675 = vmatpush1.bf16.msra.mxu0 0
        %1676 = vmatprep.subr.bf16.mxu0 0
        %1677 = vmatpush1.bf16.msra.mxu0 0
        %1678 = vmatprep.subr.bf16.mxu0 0
        %1679 = vmatpush1.bf16.msra.mxu0 0
        %1680 = vmatprep.subr.bf16.mxu0 0
        %1681 = vmatpush1.bf16.msra.mxu0 0
        %1682 = vmatprep.subr.bf16.mxu0 0
        %1683 = vmatpush1.bf16.msra.mxu0 0
        %1684 = vmatprep.subr.bf16.mxu0 0
        %1685 = vmatpush1.bf16.msra.mxu0 0
        %1686 = vmatprep.subr.bf16.mxu0 0
        %1687 = vmatpush1.bf16.msra.mxu0 0
        %1688 = vmatprep.mubr.bf16.mxu0 0
        %1689 = vmatmul.mubr.bf16.gmra.mrb[0].mxu0 %v1645
        %v1690 = vpop.f32.mrb[0].mxu0
        %v1691 = vadd.f32 0.0, %v1690
        %v1692 = vpop.f32.mrb[0].mxu0
        %v1693 = vadd.f32 0.0, %v1692
        %v1694 = vpop.f32.mrb[0].mxu0
        %v1695 = vadd.f32 0.0, %v1694
        %v1696 = vpop.f32.mrb[0].mxu0
        %v1697 = vadd.f32 0.0, %v1696
        %1698 = vmatprep.mubr.bf16.mxu0 0
        %1699 = vmatmul.mubr.bf16.gmra.mrb[0].mxu0 %v1648
        %v1700 = vpop.f32.mrb[0].mxu0
        %v1701 = vadd.f32 0.0, %v1700
        %v1702 = vpop.f32.mrb[0].mxu0
        %v1703 = vadd.f32 0.0, %v1702
        %v1704 = vpop.f32.mrb[0].mxu0
        %v1705 = vadd.f32 0.0, %v1704
        %v1706 = vpop.f32.mrb[0].mxu0
        %v1707 = vadd.f32 0.0, %v1706
        %1708 = vmatprep.mubr.bf16.mxu0 0
        %1709 = vmatmul.mubr.bf16.gmra.mrb[0].mxu0 %v1651
        %v1710 = vpop.f32.mrb[0].mxu0
        %v1711 = vadd.f32 0.0, %v1710
        %v1712 = vpop.f32.mrb[0].mxu0
        %v1713 = vadd.f32 0.0, %v1712
        %v1714 = vpop.f32.mrb[0].mxu0
        %v1715 = vadd.f32 0.0, %v1714
        %v1716 = vpop.f32.mrb[0].mxu0
        %v1717 = vadd.f32 0.0, %v1716
        %1718 = vmatprep.mubr.bf16.mxu0 0
        %1719 = vmatmul.mubr.bf16.gmra.mrb[0].mxu0 %v1654
        %v1720 = vpop.f32.mrb[0].mxu0
        %v1721 = vadd.f32 0.0, %v1720
        %v1722 = vpop.f32.mrb[0].mxu0
        %v1723 = vadd.f32 0.0, %v1722
        %v1724 = vpop.f32.mrb[0].mxu0
        %v1725 = vadd.f32 0.0, %v1724
        %v1726 = vpop.f32.mrb[0].mxu0
        %v1727 = vadd.f32 0.0, %v1726
        %1728 = vdwg.mxu0
        %1729 = vmatprep.subr.bf16.mxu0 %v1562
        %1730 = vmatpush1.bf16.msra.mxu0 %v1561
        %1731 = vmatprep.subr.bf16.mxu0 %v1578
        %1732 = vmatpush1.bf16.msra.mxu0 %v1577
        %1733 = vmatprep.subr.bf16.mxu0 %v1594
        %1734 = vmatpush1.bf16.msra.mxu0 %v1593
        %1735 = vmatprep.subr.bf16.mxu0 %v1610
        %1736 = vmatpush1.bf16.msra.mxu0 %v1609
        %1737 = vmatprep.subr.bf16.mxu0 0
        %1738 = vmatpush1.bf16.msra.mxu0 0
        %1739 = vmatprep.subr.bf16.mxu0 0
        %1740 = vmatpush1.bf16.msra.mxu0 0
        %1741 = vmatprep.subr.bf16.mxu0 0
        %1742 = vmatpush1.bf16.msra.mxu0 0
        %1743 = vmatprep.subr.bf16.mxu0 0
        %1744 = vmatpush1.bf16.msra.mxu0 0
        %1745 = vmatprep.subr.bf16.mxu0 0
        %1746 = vmatpush1.bf16.msra.mxu0 0
        %1747 = vmatprep.subr.bf16.mxu0 0
        %1748 = vmatpush1.bf16.msra.mxu0 0
        %1749 = vmatprep.subr.bf16.mxu0 0
        %1750 = vmatpush1.bf16.msra.mxu0 0
        %1751 = vmatprep.subr.bf16.mxu0 0
        %1752 = vmatpush1.bf16.msra.mxu0 0
        %1753 = vmatprep.subr.bf16.mxu0 0
        %1754 = vmatpush1.bf16.msra.mxu0 0
        %1755 = vmatprep.subr.bf16.mxu0 0
        %1756 = vmatpush1.bf16.msra.mxu0 0
        %1757 = vmatprep.subr.bf16.mxu0 0
        %1758 = vmatpush1.bf16.msra.mxu0 0
        %1759 = vmatprep.subr.bf16.mxu0 0
        %1760 = vmatpush1.bf16.msra.mxu0 0
        %1761 = vmatprep.mubr.bf16.mxu0 0
        %1762 = vmatmul.mubr.bf16.gmra.mrb[0].mxu0 %v1645
        %v1763 = vpop.f32.mrb[0].mxu0
        %v1764 = vadd.f32 0.0, %v1763
        %v1765 = vpop.f32.mrb[0].mxu0
        %v1766 = vadd.f32 0.0, %v1765
        %v1767 = vpop.f32.mrb[0].mxu0
        %v1768 = vadd.f32 0.0, %v1767
        %v1769 = vpop.f32.mrb[0].mxu0
        %v1770 = vadd.f32 0.0, %v1769
        %1771 = vmatprep.mubr.bf16.mxu0 0
        %1772 = vmatmul.mubr.bf16.gmra.mrb[0].mxu0 %v1648
        %v1773 = vpop.f32.mrb[0].mxu0
        %v1774 = vadd.f32 0.0, %v1773
        %v1775 = vpop.f32.mrb[0].mxu0
        %v1776 = vadd.f32 0.0, %v1775
        %v1777 = vpop.f32.mrb[0].mxu0
        %v1778 = vadd.f32 0.0, %v1777
        %v1779 = vpop.f32.mrb[0].mxu0
        %v1780 = vadd.f32 0.0, %v1779
        %1781 = vmatprep.mubr.bf16.mxu0 0
        %1782 = vmatmul.mubr.bf16.gmra.mrb[0].mxu0 %v1651
        %v1783 = vpop.f32.mrb[0].mxu0
        %v1784 = vadd.f32 0.0, %v1783
        %v1785 = vpop.f32.mrb[0].mxu0
        %v1786 = vadd.f32 0.0, %v1785
        %v1787 = vpop.f32.mrb[0].mxu0
        %v1788 = vadd.f32 0.0, %v1787
        %v1789 = vpop.f32.mrb[0].mxu0
        %v1790 = vadd.f32 0.0, %v1789
        %1791 = vmatprep.mubr.bf16.mxu0 0
        %1792 = vmatmul.mubr.bf16.gmra.mrb[0].mxu0 %v1654
        %v1793 = vpop.f32.mrb[0].mxu0
        %v1794 = vadd.f32 0.0, %v1793
        %v1795 = vpop.f32.mrb[0].mxu0
        %v1796 = vadd.f32 0.0, %v1795
        %v1797 = vpop.f32.mrb[0].mxu0
        %v1798 = vadd.f32 0.0, %v1797
        %v1799 = vpop.f32.mrb[0].mxu0
        %v1800 = vadd.f32 0.0, %v1799
        %1801 = vdwg.mxu0
        %1802 = vmatprep.subr.bf16.mxu0 %v1564
        %1803 = vmatpush1.bf16.msra.mxu0 %v1563
        %1804 = vmatprep.subr.bf16.mxu0 %v1580
        %1805 = vmatpush1.bf16.msra.mxu0 %v1579
        %1806 = vmatprep.subr.bf16.mxu0 %v1596
        %1807 = vmatpush1.bf16.msra.mxu0 %v1595
        %1808 = vmatprep.subr.bf16.mxu0 %v1612
        %1809 = vmatpush1.bf16.msra.mxu0 %v1611
        %1810 = vmatprep.subr.bf16.mxu0 0
        %1811 = vmatpush1.bf16.msra.mxu0 0
        %1812 = vmatprep.subr.bf16.mxu0 0
        %1813 = vmatpush1.bf16.msra.mxu0 0
        %1814 = vmatprep.subr.bf16.mxu0 0
        %1815 = vmatpush1.bf16.msra.mxu0 0
        %1816 = vmatprep.subr.bf16.mxu0 0
        %1817 = vmatpush1.bf16.msra.mxu0 0
        %1818 = vmatprep.subr.bf16.mxu0 0
        %1819 = vmatpush1.bf16.msra.mxu0 0
        %1820 = vmatprep.subr.bf16.mxu0 0
        %1821 = vmatpush1.bf16.msra.mxu0 0
        %1822 = vmatprep.subr.bf16.mxu0 0
        %1823 = vmatpush1.bf16.msra.mxu0 0
        %1824 = vmatprep.subr.bf16.mxu0 0
        %1825 = vmatpush1.bf16.msra.mxu0 0
        %1826 = vmatprep.subr.bf16.mxu0 0
        %1827 = vmatpush1.bf16.msra.mxu0 0
        %1828 = vmatprep.subr.bf16.mxu0 0
        %1829 = vmatpush1.bf16.msra.mxu0 0
        %1830 = vmatprep.subr.bf16.mxu0 0
        %1831 = vmatpush1.bf16.msra.mxu0 0
        %1832 = vmatprep.subr.bf16.mxu0 0
        %1833 = vmatpush1.bf16.msra.mxu0 0
        %1834 = vmatprep.mubr.bf16.mxu0 0
        %1835 = vmatmul.mubr.bf16.gmra.mrb[0].mxu0 %v1645
        %v1836 = vpop.f32.mrb[0].mxu0
        %v1837 = vadd.f32 0.0, %v1836
        %v1838 = vpop.f32.mrb[0].mxu0
        %v1839 = vadd.f32 0.0, %v1838
        %v1840 = vpop.f32.mrb[0].mxu0
        %v1841 = vadd.f32 0.0, %v1840
        %v1842 = vpop.f32.mrb[0].mxu0
        %v1843 = vadd.f32 0.0, %v1842
        %1844 = vmatprep.mubr.bf16.mxu0 0
        %1845 = vmatmul.mubr.bf16.gmra.mrb[0].mxu0 %v1648
        %v1846 = vpop.f32.mrb[0].mxu0
        %v1847 = vadd.f32 0.0, %v1846
        %v1848 = vpop.f32.mrb[0].mxu0
        %v1849 = vadd.f32 0.0, %v1848
        %v1850 = vpop.f32.mrb[0].mxu0
        %v1851 = vadd.f32 0.0, %v1850
        %v1852 = vpop.f32.mrb[0].mxu0
        %v1853 = vadd.f32 0.0, %v1852
        %1854 = vmatprep.mubr.bf16.mxu0 0
        %1855 = vmatmul.mubr.bf16.gmra.mrb[0].mxu0 %v1651
        %v1856 = vpop.f32.mrb[0].mxu0
        %v1857 = vadd.f32 0.0, %v1856
        %v1858 = vpop.f32.mrb[0].mxu0
        %v1859 = vadd.f32 0.0, %v1858
        %v1860 = vpop.f32.mrb[0].mxu0
        %v1861 = vadd.f32 0.0, %v1860
        %v1862 = vpop.f32.mrb[0].mxu0
        %v1863 = vadd.f32 0.0, %v1862
        %1864 = vmatprep.mubr.bf16.mxu0 0
        %1865 = vmatmul.mubr.bf16.gmra.mrb[0].mxu0 %v1654
        %v1866 = vpop.f32.mrb[0].mxu0
        %v1867 = vadd.f32 0.0, %v1866
        %v1868 = vpop.f32.mrb[0].mxu0
        %v1869 = vadd.f32 0.0, %v1868
        %v1870 = vpop.f32.mrb[0].mxu0
        %v1871 = vadd.f32 0.0, %v1870
        %v1872 = vpop.f32.mrb[0].mxu0
        %v1873 = vadd.f32 0.0, %v1872
        %1874 = vdwg.mxu0
        %1875 = vmatprep.subr.bf16.mxu0 %v1566
        %1876 = vmatpush1.bf16.msra.mxu0 %v1565
        %1877 = vmatprep.subr.bf16.mxu0 %v1582
        %1878 = vmatpush1.bf16.msra.mxu0 %v1581
        %1879 = vmatprep.subr.bf16.mxu0 %v1598
        %1880 = vmatpush1.bf16.msra.mxu0 %v1597
        %1881 = vmatprep.subr.bf16.mxu0 %v1614
        %1882 = vmatpush1.bf16.msra.mxu0 %v1613
        %1883 = vmatprep.subr.bf16.mxu0 0
        %1884 = vmatpush1.bf16.msra.mxu0 0
        %1885 = vmatprep.subr.bf16.mxu0 0
        %1886 = vmatpush1.bf16.msra.mxu0 0
        %1887 = vmatprep.subr.bf16.mxu0 0
        %1888 = vmatpush1.bf16.msra.mxu0 0
        %1889 = vmatprep.subr.bf16.mxu0 0
        %1890 = vmatpush1.bf16.msra.mxu0 0
        %1891 = vmatprep.subr.bf16.mxu0 0
        %1892 = vmatpush1.bf16.msra.mxu0 0
        %1893 = vmatprep.subr.bf16.mxu0 0
        %1894 = vmatpush1.bf16.msra.mxu0 0
        %1895 = vmatprep.subr.bf16.mxu0 0
        %1896 = vmatpush1.bf16.msra.mxu0 0
        %1897 = vmatprep.subr.bf16.mxu0 0
        %1898 = vmatpush1.bf16.msra.mxu0 0
        %1899 = vmatprep.subr.bf16.mxu0 0
        %1900 = vmatpush1.bf16.msra.mxu0 0
        %1901 = vmatprep.subr.bf16.mxu0 0
        %1902 = vmatpush1.bf16.msra.mxu0 0
        %1903 = vmatprep.subr.bf16.mxu0 0
        %1904 = vmatpush1.bf16.msra.mxu0 0
        %1905 = vmatprep.subr.bf16.mxu0 0
        %1906 = vmatpush1.bf16.msra.mxu0 0
        %1907 = vmatprep.mubr.bf16.mxu0 0
        %1908 = vmatmul.mubr.bf16.gmra.mrb[0].mxu0 %v1645
        %v1909 = vpop.f32.mrb[0].mxu0
        %v1910 = vadd.f32 0.0, %v1909
        %v1911 = vpop.f32.mrb[0].mxu0
        %v1912 = vadd.f32 0.0, %v1911
        %v1913 = vpop.f32.mrb[0].mxu0
        %v1914 = vadd.f32 0.0, %v1913
        %v1915 = vpop.f32.mrb[0].mxu0
        %v1916 = vadd.f32 0.0, %v1915
        %1917 = vmatprep.mubr.bf16.mxu0 0
        %1918 = vmatmul.mubr.bf16.gmra.mrb[0].mxu0 %v1648
        %v1919 = vpop.f32.mrb[0].mxu0
        %v1920 = vadd.f32 0.0, %v1919
        %v1921 = vpop.f32.mrb[0].mxu0
        %v1922 = vadd.f32 0.0, %v1921
        %v1923 = vpop.f32.mrb[0].mxu0
        %v1924 = vadd.f32 0.0, %v1923
        %v1925 = vpop.f32.mrb[0].mxu0
        %v1926 = vadd.f32 0.0, %v1925
        %1927 = vmatprep.mubr.bf16.mxu0 0
        %1928 = vmatmul.mubr.bf16.gmra.mrb[0].mxu0 %v1651
        %v1929 = vpop.f32.mrb[0].mxu0
        %v1930 = vadd.f32 0.0, %v1929
        %v1931 = vpop.f32.mrb[0].mxu0
        %v1932 = vadd.f32 0.0, %v1931
        %v1933 = vpop.f32.mrb[0].mxu0
        %v1934 = vadd.f32 0.0, %v1933
        %v1935 = vpop.f32.mrb[0].mxu0
        %v1936 = vadd.f32 0.0, %v1935
        %1937 = vmatprep.mubr.bf16.mxu0 0
        %1938 = vmatmul.mubr.bf16.gmra.mrb[0].mxu0 %v1654
        %v1939 = vpop.f32.mrb[0].mxu0
        %v1940 = vadd.f32 0.0, %v1939
        %v1941 = vpop.f32.mrb[0].mxu0
        %v1942 = vadd.f32 0.0, %v1941
        %v1943 = vpop.f32.mrb[0].mxu0
        %v1944 = vadd.f32 0.0, %v1943
        %v1945 = vpop.f32.mrb[0].mxu0
        %v1946 = vadd.f32 0.0, %v1945
        %1947 = vdwg.mxu0
        %1948 = vmatprep.subr.bf16.mxu0 %v1568
        %1949 = vmatpush1.bf16.msra.mxu0 %v1567
        %1950 = vmatprep.subr.bf16.mxu0 %v1584
        %1951 = vmatpush1.bf16.msra.mxu0 %v1583
        %1952 = vmatprep.subr.bf16.mxu0 %v1600
        %1953 = vmatpush1.bf16.msra.mxu0 %v1599
        %1954 = vmatprep.subr.bf16.mxu0 %v1616
        %1955 = vmatpush1.bf16.msra.mxu0 %v1615
        %1956 = vmatprep.subr.bf16.mxu0 0
        %1957 = vmatpush1.bf16.msra.mxu0 0
        %1958 = vmatprep.subr.bf16.mxu0 0
        %1959 = vmatpush1.bf16.msra.mxu0 0
        %1960 = vmatprep.subr.bf16.mxu0 0
        %1961 = vmatpush1.bf16.msra.mxu0 0
        %1962 = vmatprep.subr.bf16.mxu0 0
        %1963 = vmatpush1.bf16.msra.mxu0 0
        %1964 = vmatprep.subr.bf16.mxu0 0
        %1965 = vmatpush1.bf16.msra.mxu0 0
        %1966 = vmatprep.subr.bf16.mxu0 0
        %1967 = vmatpush1.bf16.msra.mxu0 0
        %1968 = vmatprep.subr.bf16.mxu0 0
        %1969 = vmatpush1.bf16.msra.mxu0 0
        %1970 = vmatprep.subr.bf16.mxu0 0
        %1971 = vmatpush1.bf16.msra.mxu0 0
        %1972 = vmatprep.subr.bf16.mxu0 0
        %1973 = vmatpush1.bf16.msra.mxu0 0
        %1974 = vmatprep.subr.bf16.mxu0 0
        %1975 = vmatpush1.bf16.msra.mxu0 0
        %1976 = vmatprep.subr.bf16.mxu0 0
        %1977 = vmatpush1.bf16.msra.mxu0 0
        %1978 = vmatprep.subr.bf16.mxu0 0
        %1979 = vmatpush1.bf16.msra.mxu0 0
        %1980 = vmatprep.mubr.bf16.mxu0 0
        %1981 = vmatmul.mubr.bf16.gmra.mrb[0].mxu0 %v1645
        %v1982 = vpop.f32.mrb[0].mxu0
        %v1983 = vadd.f32 0.0, %v1982
        %v1984 = vpop.f32.mrb[0].mxu0
        %v1985 = vadd.f32 0.0, %v1984
        %v1986 = vpop.f32.mrb[0].mxu0
        %v1987 = vadd.f32 0.0, %v1986
        %v1988 = vpop.f32.mrb[0].mxu0
        %v1989 = vadd.f32 0.0, %v1988
        %1990 = vmatprep.mubr.bf16.mxu0 0
        %1991 = vmatmul.mubr.bf16.gmra.mrb[0].mxu0 %v1648
        %v1992 = vpop.f32.mrb[0].mxu0
        %v1993 = vadd.f32 0.0, %v1992
        %v1994 = vpop.f32.mrb[0].mxu0
        %v1995 = vadd.f32 0.0, %v1994
        %v1996 = vpop.f32.mrb[0].mxu0
        %v1997 = vadd.f32 0.0, %v1996
        %v1998 = vpop.f32.mrb[0].mxu0
        %v1999 = vadd.f32 0.0, %v1998
        %2000 = vmatprep.mubr.bf16.mxu0 0
        %2001 = vmatmul.mubr.bf16.gmra.mrb[0].mxu0 %v1651
        %v2002 = vpop.f32.mrb[0].mxu0
        %v2003 = vadd.f32 0.0, %v2002
        %v2004 = vpop.f32.mrb[0].mxu0
        %v2005 = vadd.f32 0.0, %v2004
        %v2006 = vpop.f32.mrb[0].mxu0
        %v2007 = vadd.f32 0.0, %v2006
        %v2008 = vpop.f32.mrb[0].mxu0
        %v2009 = vadd.f32 0.0, %v2008
        %2010 = vmatprep.mubr.bf16.mxu0 0
        %2011 = vmatmul.mubr.bf16.gmra.mrb[0].mxu0 %v1654
        %v2012 = vpop.f32.mrb[0].mxu0
        %v2013 = vadd.f32 0.0, %v2012
        %v2014 = vpop.f32.mrb[0].mxu0
        %v2015 = vadd.f32 0.0, %v2014
        %v2016 = vpop.f32.mrb[0].mxu0
        %v2017 = vadd.f32 0.0, %v2016
        %v2018 = vpop.f32.mrb[0].mxu0
        %v2019 = vadd.f32 0.0, %v2018
        %2020 = vdwg.mxu0
        %2021 = vmatprep.subr.bf16.mxu0 %v1570
        %2022 = vmatpush1.bf16.msra.mxu0 %v1569
        %2023 = vmatprep.subr.bf16.mxu0 %v1586
        %2024 = vmatpush1.bf16.msra.mxu0 %v1585
        %2025 = vmatprep.subr.bf16.mxu0 %v1602
        %2026 = vmatpush1.bf16.msra.mxu0 %v1601
        %2027 = vmatprep.subr.bf16.mxu0 %v1618
        %2028 = vmatpush1.bf16.msra.mxu0 %v1617
        %2029 = vmatprep.subr.bf16.mxu0 0
        %2030 = vmatpush1.bf16.msra.mxu0 0
        %2031 = vmatprep.subr.bf16.mxu0 0
        %2032 = vmatpush1.bf16.msra.mxu0 0
        %2033 = vmatprep.subr.bf16.mxu0 0
        %2034 = vmatpush1.bf16.msra.mxu0 0
        %2035 = vmatprep.subr.bf16.mxu0 0
        %2036 = vmatpush1.bf16.msra.mxu0 0
        %2037 = vmatprep.subr.bf16.mxu0 0
        %2038 = vmatpush1.bf16.msra.mxu0 0
        %2039 = vmatprep.subr.bf16.mxu0 0
        %2040 = vmatpush1.bf16.msra.mxu0 0
        %2041 = vmatprep.subr.bf16.mxu0 0
        %2042 = vmatpush1.bf16.msra.mxu0 0
        %2043 = vmatprep.subr.bf16.mxu0 0
        %2044 = vmatpush1.bf16.msra.mxu0 0
        %2045 = vmatprep.subr.bf16.mxu0 0
        %2046 = vmatpush1.bf16.msra.mxu0 0
        %2047 = vmatprep.subr.bf16.mxu0 0
        %2048 = vmatpush1.bf16.msra.mxu0 0
        %2049 = vmatprep.subr.bf16.mxu0 0
        %2050 = vmatpush1.bf16.msra.mxu0 0
        %2051 = vmatprep.subr.bf16.mxu0 0
        %2052 = vmatpush1.bf16.msra.mxu0 0
        %2053 = vmatprep.mubr.bf16.mxu0 0
        %2054 = vmatmul.mubr.bf16.gmra.mrb[0].mxu0 %v1645
        %v2055 = vpop.f32.mrb[0].mxu0
        %v2056 = vadd.f32 0.0, %v2055
        %v2057 = vpop.f32.mrb[0].mxu0
        %v2058 = vadd.f32 0.0, %v2057
        %v2059 = vpop.f32.mrb[0].mxu0
        %v2060 = vadd.f32 0.0, %v2059
        %v2061 = vpop.f32.mrb[0].mxu0
        %v2062 = vadd.f32 0.0, %v2061
        %2063 = vmatprep.mubr.bf16.mxu0 0
        %2064 = vmatmul.mubr.bf16.gmra.mrb[0].mxu0 %v1648
        %v2065 = vpop.f32.mrb[0].mxu0
        %v2066 = vadd.f32 0.0, %v2065
        %v2067 = vpop.f32.mrb[0].mxu0
        %v2068 = vadd.f32 0.0, %v2067
        %v2069 = vpop.f32.mrb[0].mxu0
        %v2070 = vadd.f32 0.0, %v2069
        %v2071 = vpop.f32.mrb[0].mxu0
        %v2072 = vadd.f32 0.0, %v2071
        %2073 = vmatprep.mubr.bf16.mxu0 0
        %2074 = vmatmul.mubr.bf16.gmra.mrb[0].mxu0 %v1651
        %v2075 = vpop.f32.mrb[0].mxu0
        %v2076 = vadd.f32 0.0, %v2075
        %v2077 = vpop.f32.mrb[0].mxu0
        %v2078 = vadd.f32 0.0, %v2077
        %v2079 = vpop.f32.mrb[0].mxu0
        %v2080 = vadd.f32 0.0, %v2079
        %v2081 = vpop.f32.mrb[0].mxu0
        %v2082 = vadd.f32 0.0, %v2081
        %2083 = vmatprep.mubr.bf16.mxu0 0
        %2084 = vmatmul.mubr.bf16.gmra.mrb[0].mxu0 %v1654
        %v2085 = vpop.f32.mrb[0].mxu0
        %v2086 = vadd.f32 0.0, %v2085
        %v2087 = vpop.f32.mrb[0].mxu0
        %v2088 = vadd.f32 0.0, %v2087
        %v2089 = vpop.f32.mrb[0].mxu0
        %v2090 = vadd.f32 0.0, %v2089
        %v2091 = vpop.f32.mrb[0].mxu0
        %v2092 = vadd.f32 0.0, %v2091
        %2093 = vdwg.mxu0
        %2094 = vmatprep.subr.bf16.mxu0 %v1572
        %2095 = vmatpush1.bf16.msra.mxu0 %v1571
        %2096 = vmatprep.subr.bf16.mxu0 %v1588
        %2097 = vmatpush1.bf16.msra.mxu0 %v1587
        %2098 = vmatprep.subr.bf16.mxu0 %v1604
        %2099 = vmatpush1.bf16.msra.mxu0 %v1603
        %2100 = vmatprep.subr.bf16.mxu0 %v1620
        %2101 = vmatpush1.bf16.msra.mxu0 %v1619
        %2102 = vmatprep.subr.bf16.mxu0 0
        %2103 = vmatpush1.bf16.msra.mxu0 0
        %2104 = vmatprep.subr.bf16.mxu0 0
        %2105 = vmatpush1.bf16.msra.mxu0 0
        %2106 = vmatprep.subr.bf16.mxu0 0
        %2107 = vmatpush1.bf16.msra.mxu0 0
        %2108 = vmatprep.subr.bf16.mxu0 0
        %2109 = vmatpush1.bf16.msra.mxu0 0
        %2110 = vmatprep.subr.bf16.mxu0 0
        %2111 = vmatpush1.bf16.msra.mxu0 0
        %2112 = vmatprep.subr.bf16.mxu0 0
        %2113 = vmatpush1.bf16.msra.mxu0 0
        %2114 = vmatprep.subr.bf16.mxu0 0
        %2115 = vmatpush1.bf16.msra.mxu0 0
        %2116 = vmatprep.subr.bf16.mxu0 0
        %2117 = vmatpush1.bf16.msra.mxu0 0
        %2118 = vmatprep.subr.bf16.mxu0 0
        %2119 = vmatpush1.bf16.msra.mxu0 0
        %2120 = vmatprep.subr.bf16.mxu0 0
        %2121 = vmatpush1.bf16.msra.mxu0 0
        %2122 = vmatprep.subr.bf16.mxu0 0
        %2123 = vmatpush1.bf16.msra.mxu0 0
        %2124 = vmatprep.subr.bf16.mxu0 0
        %2125 = vmatpush1.bf16.msra.mxu0 0
        %2126 = vmatprep.mubr.bf16.mxu0 0
        %2127 = vmatmul.mubr.bf16.gmra.mrb[0].mxu0 %v1645
        %v2128 = vpop.f32.mrb[0].mxu0
        %v2129 = vadd.f32 0.0, %v2128
        %v2130 = vpop.f32.mrb[0].mxu0
        %v2131 = vadd.f32 0.0, %v2130
        %v2132 = vpop.f32.mrb[0].mxu0
        %v2133 = vadd.f32 0.0, %v2132
        %v2134 = vpop.f32.mrb[0].mxu0
        %v2135 = vadd.f32 0.0, %v2134
        %2136 = vmatprep.mubr.bf16.mxu0 0
        %2137 = vmatmul.mubr.bf16.gmra.mrb[0].mxu0 %v1648
        %v2138 = vpop.f32.mrb[0].mxu0
        %v2139 = vadd.f32 0.0, %v2138
        %v2140 = vpop.f32.mrb[0].mxu0
        %v2141 = vadd.f32 0.0, %v2140
        %v2142 = vpop.f32.mrb[0].mxu0
        %v2143 = vadd.f32 0.0, %v2142
        %v2144 = vpop.f32.mrb[0].mxu0
        %v2145 = vadd.f32 0.0, %v2144
        %2146 = vmatprep.mubr.bf16.mxu0 0
        %2147 = vmatmul.mubr.bf16.gmra.mrb[0].mxu0 %v1651
        %v2148 = vpop.f32.mrb[0].mxu0
        %v2149 = vadd.f32 0.0, %v2148
        %v2150 = vpop.f32.mrb[0].mxu0
        %v2151 = vadd.f32 0.0, %v2150
        %v2152 = vpop.f32.mrb[0].mxu0
        %v2153 = vadd.f32 0.0, %v2152
        %v2154 = vpop.f32.mrb[0].mxu0
        %v2155 = vadd.f32 0.0, %v2154
        %2156 = vmatprep.mubr.bf16.mxu0 0
        %2157 = vmatmul.mubr.bf16.gmra.mrb[0].mxu0 %v1654
        %v2158 = vpop.f32.mrb[0].mxu0
        %v2159 = vadd.f32 0.0, %v2158
        %v2160 = vpop.f32.mrb[0].mxu0
        %v2161 = vadd.f32 0.0, %v2160
        %v2162 = vpop.f32.mrb[0].mxu0
        %v2163 = vadd.f32 0.0, %v2162
        %v2164 = vpop.f32.mrb[0].mxu0
        %v2165 = vadd.f32 0.0, %v2164
        %2166 = vdwg.mxu0
        %2167 = vmatprep.subr.bf16.mxu0 %v1574
        %2168 = vmatpush1.bf16.msra.mxu0 %v1573
        %2169 = vmatprep.subr.bf16.mxu0 %v1590
        %2170 = vmatpush1.bf16.msra.mxu0 %v1589
        %2171 = vmatprep.subr.bf16.mxu0 %v1606
        %2172 = vmatpush1.bf16.msra.mxu0 %v1605
        %2173 = vmatprep.subr.bf16.mxu0 %v1622
        %2174 = vmatpush1.bf16.msra.mxu0 %v1621
        %2175 = vmatprep.subr.bf16.mxu0 0
        %2176 = vmatpush1.bf16.msra.mxu0 0
        %2177 = vmatprep.subr.bf16.mxu0 0
        %2178 = vmatpush1.bf16.msra.mxu0 0
        %2179 = vmatprep.subr.bf16.mxu0 0
        %2180 = vmatpush1.bf16.msra.mxu0 0
        %2181 = vmatprep.subr.bf16.mxu0 0
        %2182 = vmatpush1.bf16.msra.mxu0 0
        %2183 = vmatprep.subr.bf16.mxu0 0
        %2184 = vmatpush1.bf16.msra.mxu0 0
        %2185 = vmatprep.subr.bf16.mxu0 0
        %2186 = vmatpush1.bf16.msra.mxu0 0
        %2187 = vmatprep.subr.bf16.mxu0 0
        %2188 = vmatpush1.bf16.msra.mxu0 0
        %2189 = vmatprep.subr.bf16.mxu0 0
        %2190 = vmatpush1.bf16.msra.mxu0 0
        %2191 = vmatprep.subr.bf16.mxu0 0
        %2192 = vmatpush1.bf16.msra.mxu0 0
        %2193 = vmatprep.subr.bf16.mxu0 0
        %2194 = vmatpush1.bf16.msra.mxu0 0
        %2195 = vmatprep.subr.bf16.mxu0 0
        %2196 = vmatpush1.bf16.msra.mxu0 0
        %2197 = vmatprep.subr.bf16.mxu0 0
        %2198 = vmatpush1.bf16.msra.mxu0 0
        %2199 = vmatprep.mubr.bf16.mxu0 0
        %2200 = vmatmul.mubr.bf16.gmra.mrb[0].mxu0 %v1645
        %v2201 = vpop.f32.mrb[0].mxu0
        %v2202 = vadd.f32 0.0, %v2201
        %v2203 = vpop.f32.mrb[0].mxu0
        %v2204 = vadd.f32 0.0, %v2203
        %v2205 = vpop.f32.mrb[0].mxu0
        %v2206 = vadd.f32 0.0, %v2205
        %v2207 = vpop.f32.mrb[0].mxu0
        %v2208 = vadd.f32 0.0, %v2207
        %2209 = vmatprep.mubr.bf16.mxu0 0
        %2210 = vmatmul.mubr.bf16.gmra.mrb[0].mxu0 %v1648
        %v2211 = vpop.f32.mrb[0].mxu0
        %v2212 = vadd.f32 0.0, %v2211
        %v2213 = vpop.f32.mrb[0].mxu0
        %v2214 = vadd.f32 0.0, %v2213
        %v2215 = vpop.f32.mrb[0].mxu0
        %v2216 = vadd.f32 0.0, %v2215
        %v2217 = vpop.f32.mrb[0].mxu0
        %v2218 = vadd.f32 0.0, %v2217
        %2219 = vmatprep.mubr.bf16.mxu0 0
        %2220 = vmatmul.mubr.bf16.gmra.mrb[0].mxu0 %v1651
        %v2221 = vpop.f32.mrb[0].mxu0
        %v2222 = vadd.f32 0.0, %v2221
        %v2223 = vpop.f32.mrb[0].mxu0
        %v2224 = vadd.f32 0.0, %v2223
        %v2225 = vpop.f32.mrb[0].mxu0
        %v2226 = vadd.f32 0.0, %v2225
        %v2227 = vpop.f32.mrb[0].mxu0
        %v2228 = vadd.f32 0.0, %v2227
        %2229 = vmatprep.mubr.bf16.mxu0 0
        %2230 = vmatmul.mubr.bf16.gmra.mrb[0].mxu0 %v1654
        %v2231 = vpop.f32.mrb[0].mxu0
        %v2232 = vadd.f32 0.0, %v2231
        %v2233 = vpop.f32.mrb[0].mxu0
        %v2234 = vadd.f32 0.0, %v2233
        %v2235 = vpop.f32.mrb[0].mxu0
        %v2236 = vadd.f32 0.0, %v2235
        %v2237 = vpop.f32.mrb[0].mxu0
        %v2238 = vadd.f32 0.0, %v2237
        %2239 = vdwg.mxu0
        %v2240 = vmax.f32 %v1691, 0.0
        %v2241 = vmax.f32 %v1693, 0.0
        %v2242 = vmax.f32 %v1764, 0.0
        %v2243 = vmax.f32 %v1766, 0.0
        %v2244 = vmax.f32 %v1837, 0.0
        %v2245 = vmax.f32 %v1839, 0.0
        %v2246 = vmax.f32 %v1910, 0.0
        %v2247 = vmax.f32 %v1912, 0.0
        %v2248 = vmax.f32 %v1983, 0.0
        %v2249 = vmax.f32 %v1985, 0.0
        %v2250 = vmax.f32 %v2056, 0.0
        %v2251 = vmax.f32 %v2058, 0.0
        %v2252 = vmax.f32 %v2129, 0.0
        %v2253 = vmax.f32 %v2131, 0.0
        %v2254 = vmax.f32 %v2202, 0.0
        %v2255 = vmax.f32 %v2204, 0.0
        %v2256 = vmax.f32 %v1695, 0.0
        %v2257 = vmax.f32 %v1697, 0.0
        %v2258 = vmax.f32 %v1768, 0.0
        %v2259 = vmax.f32 %v1770, 0.0
        %v2260 = vmax.f32 %v1841, 0.0
        %v2261 = vmax.f32 %v1843, 0.0
        %v2262 = vmax.f32 %v1914, 0.0
        %v2263 = vmax.f32 %v1916, 0.0
        %v2264 = vmax.f32 %v1987, 0.0
        %v2265 = vmax.f32 %v1989, 0.0
        %v2266 = vmax.f32 %v2060, 0.0
        %v2267 = vmax.f32 %v2062, 0.0
        %v2268 = vmax.f32 %v2133, 0.0
        %v2269 = vmax.f32 %v2135, 0.0
        %v2270 = vmax.f32 %v2206, 0.0
        %v2271 = vmax.f32 %v2208, 0.0
        %v2272 = vmax.f32 %v1701, 0.0
        %v2273 = vmax.f32 %v1703, 0.0
        %v2274 = vmax.f32 %v1774, 0.0
        %v2275 = vmax.f32 %v1776, 0.0
        %v2276 = vmax.f32 %v1847, 0.0
        %v2277 = vmax.f32 %v1849, 0.0
        %v2278 = vmax.f32 %v1920, 0.0
        %v2279 = vmax.f32 %v1922, 0.0
        %v2280 = vmax.f32 %v1993, 0.0
        %v2281 = vmax.f32 %v1995, 0.0
        %v2282 = vmax.f32 %v2066, 0.0
        %v2283 = vmax.f32 %v2068, 0.0
        %v2284 = vmax.f32 %v2139, 0.0
        %v2285 = vmax.f32 %v2141, 0.0
        %v2286 = vmax.f32 %v2212, 0.0
        %v2287 = vmax.f32 %v2214, 0.0
        %v2288 = vmax.f32 %v1705, 0.0
        %v2289 = vmax.f32 %v1707, 0.0
        %v2290 = vmax.f32 %v1778, 0.0
        %v2291 = vmax.f32 %v1780, 0.0
        %v2292 = vmax.f32 %v1851, 0.0
        %v2293 = vmax.f32 %v1853, 0.0
        %v2294 = vmax.f32 %v1924, 0.0
        %v2295 = vmax.f32 %v1926, 0.0
        %v2296 = vmax.f32 %v1997, 0.0
        %v2297 = vmax.f32 %v1999, 0.0
        %v2298 = vmax.f32 %v2070, 0.0
        %v2299 = vmax.f32 %v2072, 0.0
        %v2300 = vmax.f32 %v2143, 0.0
        %v2301 = vmax.f32 %v2145, 0.0
        %v2302 = vmax.f32 %v2216, 0.0
        %v2303 = vmax.f32 %v2218, 0.0
        %v2304 = vmax.f32 %v1711, 0.0
        %v2305 = vmax.f32 %v1713, 0.0
        %v2306 = vmax.f32 %v1784, 0.0
        %v2307 = vmax.f32 %v1786, 0.0
        %v2308 = vmax.f32 %v1857, 0.0
        %v2309 = vmax.f32 %v1859, 0.0
        %v2310 = vmax.f32 %v1930, 0.0
        %v2311 = vmax.f32 %v1932, 0.0
        %v2312 = vmax.f32 %v2003, 0.0
        %v2313 = vmax.f32 %v2005, 0.0
        %v2314 = vmax.f32 %v2076, 0.0
        %v2315 = vmax.f32 %v2078, 0.0
        %v2316 = vmax.f32 %v2149, 0.0
        %v2317 = vmax.f32 %v2151, 0.0
        %v2318 = vmax.f32 %v2222, 0.0
        %v2319 = vmax.f32 %v2224, 0.0
        %v2320 = vmax.f32 %v1715, 0.0
        %v2321 = vmax.f32 %v1717, 0.0
        %v2322 = vmax.f32 %v1788, 0.0
        %v2323 = vmax.f32 %v1790, 0.0
        %v2324 = vmax.f32 %v1861, 0.0
        %v2325 = vmax.f32 %v1863, 0.0
        %v2326 = vmax.f32 %v1934, 0.0
        %v2327 = vmax.f32 %v1936, 0.0
        %v2328 = vmax.f32 %v2007, 0.0
        %v2329 = vmax.f32 %v2009, 0.0
        %v2330 = vmax.f32 %v2080, 0.0
        %v2331 = vmax.f32 %v2082, 0.0
        %v2332 = vmax.f32 %v2153, 0.0
        %v2333 = vmax.f32 %v2155, 0.0
        %v2334 = vmax.f32 %v2226, 0.0
        %v2335 = vmax.f32 %v2228, 0.0
        %v2336 = vmax.f32 %v1721, 0.0
        %v2337 = vmax.f32 %v1723, 0.0
        %v2338 = vmax.f32 %v1794, 0.0
        %v2339 = vmax.f32 %v1796, 0.0
        %v2340 = vmax.f32 %v1867, 0.0
        %v2341 = vmax.f32 %v1869, 0.0
        %v2342 = vmax.f32 %v1940, 0.0
        %v2343 = vmax.f32 %v1942, 0.0
        %v2344 = vmax.f32 %v2013, 0.0
        %v2345 = vmax.f32 %v2015, 0.0
        %v2346 = vmax.f32 %v2086, 0.0
        %v2347 = vmax.f32 %v2088, 0.0
        %v2348 = vmax.f32 %v2159, 0.0
        %v2349 = vmax.f32 %v2161, 0.0
        %v2350 = vmax.f32 %v2232, 0.0
        %v2351 = vmax.f32 %v2234, 0.0
        %v2352 = vmax.f32 %v1725, 0.0
        %v2353 = vmax.f32 %v1727, 0.0
        %v2354 = vmax.f32 %v1798, 0.0
        %v2355 = vmax.f32 %v1800, 0.0
        %v2356 = vmax.f32 %v1871, 0.0
        %v2357 = vmax.f32 %v1873, 0.0
        %v2358 = vmax.f32 %v1944, 0.0
        %v2359 = vmax.f32 %v1946, 0.0
        %v2360 = vmax.f32 %v2017, 0.0
        %v2361 = vmax.f32 %v2019, 0.0
        %v2362 = vmax.f32 %v2090, 0.0
        %v2363 = vmax.f32 %v2092, 0.0
        %v2364 = vmax.f32 %v2163, 0.0
        %v2365 = vmax.f32 %v2165, 0.0
        %v2366 = vmax.f32 %v2236, 0.0
        %v2367 = vmax.f32 %v2238, 0.0
        %v2368 = vpack.c.bf16 %v2256, %v2240
        %v2369 = vpack.c.bf16 %v2257, %v2241
        %v2370 = vpack.c.bf16 %v2258, %v2242
        %v2371 = vpack.c.bf16 %v2259, %v2243
        %v2372 = vpack.c.bf16 %v2260, %v2244
        %v2373 = vpack.c.bf16 %v2261, %v2245
        %v2374 = vpack.c.bf16 %v2262, %v2246
        %v2375 = vpack.c.bf16 %v2263, %v2247
        %v2376 = vpack.c.bf16 %v2264, %v2248
        %v2377 = vpack.c.bf16 %v2265, %v2249
        %v2378 = vpack.c.bf16 %v2266, %v2250
        %v2379 = vpack.c.bf16 %v2267, %v2251
        %v2380 = vpack.c.bf16 %v2268, %v2252
        %v2381 = vpack.c.bf16 %v2269, %v2253
        %v2382 = vpack.c.bf16 %v2270, %v2254
        %v2383 = vpack.c.bf16 %v2271, %v2255
        %v2384 = vpack.c.bf16 %v2288, %v2272
        %v2385 = vpack.c.bf16 %v2289, %v2273
        %v2386 = vpack.c.bf16 %v2290, %v2274
        %v2387 = vpack.c.bf16 %v2291, %v2275
        %v2388 = vpack.c.bf16 %v2292, %v2276
        %v2389 = vpack.c.bf16 %v2293, %v2277
        %v2390 = vpack.c.bf16 %v2294, %v2278
        %v2391 = vpack.c.bf16 %v2295, %v2279
        %v2392 = vpack.c.bf16 %v2296, %v2280
        %v2393 = vpack.c.bf16 %v2297, %v2281
        %v2394 = vpack.c.bf16 %v2298, %v2282
        %v2395 = vpack.c.bf16 %v2299, %v2283
        %v2396 = vpack.c.bf16 %v2300, %v2284
        %v2397 = vpack.c.bf16 %v2301, %v2285
        %v2398 = vpack.c.bf16 %v2302, %v2286
        %v2399 = vpack.c.bf16 %v2303, %v2287
        %v2400 = vpack.c.bf16 %v2320, %v2304
        %v2401 = vpack.c.bf16 %v2321, %v2305
        %v2402 = vpack.c.bf16 %v2322, %v2306
        %v2403 = vpack.c.bf16 %v2323, %v2307
        %v2404 = vpack.c.bf16 %v2324, %v2308
        %v2405 = vpack.c.bf16 %v2325, %v2309
        %v2406 = vpack.c.bf16 %v2326, %v2310
        %v2407 = vpack.c.bf16 %v2327, %v2311
        %v2408 = vpack.c.bf16 %v2328, %v2312
        %v2409 = vpack.c.bf16 %v2329, %v2313
        %v2410 = vpack.c.bf16 %v2330, %v2314
        %v2411 = vpack.c.bf16 %v2331, %v2315
        %v2412 = vpack.c.bf16 %v2332, %v2316
        %v2413 = vpack.c.bf16 %v2333, %v2317
        %v2414 = vpack.c.bf16 %v2334, %v2318
        %v2415 = vpack.c.bf16 %v2335, %v2319
        %v2416 = vpack.c.bf16 %v2352, %v2336
        %v2417 = vpack.c.bf16 %v2353, %v2337
        %v2418 = vpack.c.bf16 %v2354, %v2338
        %v2419 = vpack.c.bf16 %v2355, %v2339
        %v2420 = vpack.c.bf16 %v2356, %v2340
        %v2421 = vpack.c.bf16 %v2357, %v2341
        %v2422 = vpack.c.bf16 %v2358, %v2342
        %v2423 = vpack.c.bf16 %v2359, %v2343
        %v2424 = vpack.c.bf16 %v2360, %v2344
        %v2425 = vpack.c.bf16 %v2361, %v2345
        %v2426 = vpack.c.bf16 %v2362, %v2346
        %v2427 = vpack.c.bf16 %v2363, %v2347
        %v2428 = vpack.c.bf16 %v2364, %v2348
        %v2429 = vpack.c.bf16 %v2365, %v2349
        %v2430 = vpack.c.bf16 %v2366, %v2350
        %v2431 = vpack.c.bf16 %v2367, %v2351
        %v2432 = vld [vmem:[%s3] sm:$0xf]
        %v2433 = vld [vmem:[%s3 + $0x4] sm:$0xf]
        %v2434 = vld [vmem:[%s3 + $0x8] sm:$0xf]
        %v2435 = vld [vmem:[%s3 + $0xc] sm:$0xf]
        %v2436 = vld [vmem:[%s3 + $0x10] sm:$0xf]
        %v2437 = vld [vmem:[%s3 + $0x14] sm:$0xf]
        %v2438 = vld [vmem:[%s3 + $0x18] sm:$0xf]
        %v2439 = vld [vmem:[%s3 + $0x1c] sm:$0xf]
        %v2448 = vunpack.c.l.b16 %v2432
        %v2449 = vunpack.c.l.b16 %v2433
        %v2450 = vunpack.c.l.b16 %v2434
        %v2451 = vunpack.c.l.b16 %v2435
        %v2452 = vunpack.c.l.b16 %v2436
        %v2453 = vunpack.c.l.b16 %v2437
        %v2454 = vunpack.c.l.b16 %v2438
        %v2455 = vunpack.c.l.b16 %v2439
        %v2456 = vpack.c.b16 %v2449, %v2448
        %v2457 = vpack.c.b16 %v2451, %v2450
        %v2458 = vpack.c.b16 %v2453, %v2452
        %v2459 = vpack.c.b16 %v2455, %v2454
        %v2461 = vsel %vm1643, %v2456, 0
        %v2464 = vsel %vm1643, %v2457, 0
        %v2467 = vsel %vm1643, %v2458, 0
        %v2470 = vsel %vm1643, %v2459, 0
        %2472 = vmatprep.subr.bf16.mxu0 %v2369
        %2473 = vmatpush1.bf16.msra.mxu0 %v2368
        %2474 = vmatprep.subr.bf16.mxu0 %v2385
        %2475 = vmatpush1.bf16.msra.mxu0 %v2384
        %2476 = vmatprep.subr.bf16.mxu0 %v2401
        %2477 = vmatpush1.bf16.msra.mxu0 %v2400
        %2478 = vmatprep.subr.bf16.mxu0 %v2417
        %2479 = vmatpush1.bf16.msra.mxu0 %v2416
        %2480 = vmatprep.subr.bf16.mxu0 0
        %2481 = vmatpush1.bf16.msra.mxu0 0
        %2482 = vmatprep.subr.bf16.mxu0 0
        %2483 = vmatpush1.bf16.msra.mxu0 0
        %2484 = vmatprep.subr.bf16.mxu0 0
        %2485 = vmatpush1.bf16.msra.mxu0 0
        %2486 = vmatprep.subr.bf16.mxu0 0
        %2487 = vmatpush1.bf16.msra.mxu0 0
        %2488 = vmatprep.subr.bf16.mxu0 0
        %2489 = vmatpush1.bf16.msra.mxu0 0
        %2490 = vmatprep.subr.bf16.mxu0 0
        %2491 = vmatpush1.bf16.msra.mxu0 0
        %2492 = vmatprep.subr.bf16.mxu0 0
        %2493 = vmatpush1.bf16.msra.mxu0 0
        %2494 = vmatprep.subr.bf16.mxu0 0
        %2495 = vmatpush1.bf16.msra.mxu0 0
        %2496 = vmatprep.subr.bf16.mxu0 0
        %2497 = vmatpush1.bf16.msra.mxu0 0
        %2498 = vmatprep.subr.bf16.mxu0 0
        %2499 = vmatpush1.bf16.msra.mxu0 0
        %2500 = vmatprep.subr.bf16.mxu0 0
        %2501 = vmatpush1.bf16.msra.mxu0 0
        %2502 = vmatprep.subr.bf16.mxu0 0
        %2503 = vmatpush1.bf16.msra.mxu0 0
        %2504 = vmatprep.mubr.bf16.mxu0 0
        %2505 = vmatmul.mubr.bf16.gmra.mrb[0].mxu0 %v2461
        %v2506 = vpop.f32.mrb[0].mxu0
        %v2507 = vadd.f32 0.0, %v2506
        %v2508 = vpop.f32.mrb[0].mxu0
        %v2509 = vadd.f32 0.0, %v2508
        %v2510 = vpop.f32.mrb[0].mxu0
        %v2511 = vadd.f32 0.0, %v2510
        %v2512 = vpop.f32.mrb[0].mxu0
        %v2513 = vadd.f32 0.0, %v2512
        %2514 = vmatprep.mubr.bf16.mxu0 0
        %2515 = vmatmul.mubr.bf16.gmra.mrb[0].mxu0 %v2464
        %v2516 = vpop.f32.mrb[0].mxu0
        %v2517 = vadd.f32 0.0, %v2516
        %v2518 = vpop.f32.mrb[0].mxu0
        %v2519 = vadd.f32 0.0, %v2518
        %v2520 = vpop.f32.mrb[0].mxu0
        %v2521 = vadd.f32 0.0, %v2520
        %v2522 = vpop.f32.mrb[0].mxu0
        %v2523 = vadd.f32 0.0, %v2522
        %2524 = vmatprep.mubr.bf16.mxu0 0
        %2525 = vmatmul.mubr.bf16.gmra.mrb[0].mxu0 %v2467
        %v2526 = vpop.f32.mrb[0].mxu0
        %v2527 = vadd.f32 0.0, %v2526
        %v2528 = vpop.f32.mrb[0].mxu0
        %v2529 = vadd.f32 0.0, %v2528
        %v2530 = vpop.f32.mrb[0].mxu0
        %v2531 = vadd.f32 0.0, %v2530
        %v2532 = vpop.f32.mrb[0].mxu0
        %v2533 = vadd.f32 0.0, %v2532
        %2534 = vmatprep.mubr.bf16.mxu0 0
        %2535 = vmatmul.mubr.bf16.gmra.mrb[0].mxu0 %v2470
        %v2536 = vpop.f32.mrb[0].mxu0
        %v2537 = vadd.f32 0.0, %v2536
        %v2538 = vpop.f32.mrb[0].mxu0
        %v2539 = vadd.f32 0.0, %v2538
        %v2540 = vpop.f32.mrb[0].mxu0
        %v2541 = vadd.f32 0.0, %v2540
        %v2542 = vpop.f32.mrb[0].mxu0
        %v2543 = vadd.f32 0.0, %v2542
        %2544 = vdwg.mxu0
        %2545 = vmatprep.subr.bf16.mxu0 %v2371
        %2546 = vmatpush1.bf16.msra.mxu0 %v2370
        %2547 = vmatprep.subr.bf16.mxu0 %v2387
        %2548 = vmatpush1.bf16.msra.mxu0 %v2386
        %2549 = vmatprep.subr.bf16.mxu0 %v2403
        %2550 = vmatpush1.bf16.msra.mxu0 %v2402
        %2551 = vmatprep.subr.bf16.mxu0 %v2419
        %2552 = vmatpush1.bf16.msra.mxu0 %v2418
        %2553 = vmatprep.subr.bf16.mxu0 0
        %2554 = vmatpush1.bf16.msra.mxu0 0
        %2555 = vmatprep.subr.bf16.mxu0 0
        %2556 = vmatpush1.bf16.msra.mxu0 0
        %2557 = vmatprep.subr.bf16.mxu0 0
        %2558 = vmatpush1.bf16.msra.mxu0 0
        %2559 = vmatprep.subr.bf16.mxu0 0
        %2560 = vmatpush1.bf16.msra.mxu0 0
        %2561 = vmatprep.subr.bf16.mxu0 0
        %2562 = vmatpush1.bf16.msra.mxu0 0
        %2563 = vmatprep.subr.bf16.mxu0 0
        %2564 = vmatpush1.bf16.msra.mxu0 0
        %2565 = vmatprep.subr.bf16.mxu0 0
        %2566 = vmatpush1.bf16.msra.mxu0 0
        %2567 = vmatprep.subr.bf16.mxu0 0
        %2568 = vmatpush1.bf16.msra.mxu0 0
        %2569 = vmatprep.subr.bf16.mxu0 0
        %2570 = vmatpush1.bf16.msra.mxu0 0
        %2571 = vmatprep.subr.bf16.mxu0 0
        %2572 = vmatpush1.bf16.msra.mxu0 0
        %2573 = vmatprep.subr.bf16.mxu0 0
        %2574 = vmatpush1.bf16.msra.mxu0 0
        %2575 = vmatprep.subr.bf16.mxu0 0
        %2576 = vmatpush1.bf16.msra.mxu0 0
        %2577 = vmatprep.mubr.bf16.mxu0 0
        %2578 = vmatmul.mubr.bf16.gmra.mrb[0].mxu0 %v2461
        %v2579 = vpop.f32.mrb[0].mxu0
        %v2580 = vadd.f32 0.0, %v2579
        %v2581 = vpop.f32.mrb[0].mxu0
        %v2582 = vadd.f32 0.0, %v2581
        %v2583 = vpop.f32.mrb[0].mxu0
        %v2584 = vadd.f32 0.0, %v2583
        %v2585 = vpop.f32.mrb[0].mxu0
        %v2586 = vadd.f32 0.0, %v2585
        %2587 = vmatprep.mubr.bf16.mxu0 0
        %2588 = vmatmul.mubr.bf16.gmra.mrb[0].mxu0 %v2464
        %v2589 = vpop.f32.mrb[0].mxu0
        %v2590 = vadd.f32 0.0, %v2589
        %v2591 = vpop.f32.mrb[0].mxu0
        %v2592 = vadd.f32 0.0, %v2591
        %v2593 = vpop.f32.mrb[0].mxu0
        %v2594 = vadd.f32 0.0, %v2593
        %v2595 = vpop.f32.mrb[0].mxu0
        %v2596 = vadd.f32 0.0, %v2595
        %2597 = vmatprep.mubr.bf16.mxu0 0
        %2598 = vmatmul.mubr.bf16.gmra.mrb[0].mxu0 %v2467
        %v2599 = vpop.f32.mrb[0].mxu0
        %v2600 = vadd.f32 0.0, %v2599
        %v2601 = vpop.f32.mrb[0].mxu0
        %v2602 = vadd.f32 0.0, %v2601
        %v2603 = vpop.f32.mrb[0].mxu0
        %v2604 = vadd.f32 0.0, %v2603
        %v2605 = vpop.f32.mrb[0].mxu0
        %v2606 = vadd.f32 0.0, %v2605
        %2607 = vmatprep.mubr.bf16.mxu0 0
        %2608 = vmatmul.mubr.bf16.gmra.mrb[0].mxu0 %v2470
        %v2609 = vpop.f32.mrb[0].mxu0
        %v2610 = vadd.f32 0.0, %v2609
        %v2611 = vpop.f32.mrb[0].mxu0
        %v2612 = vadd.f32 0.0, %v2611
        %v2613 = vpop.f32.mrb[0].mxu0
        %v2614 = vadd.f32 0.0, %v2613
        %v2615 = vpop.f32.mrb[0].mxu0
        %v2616 = vadd.f32 0.0, %v2615
        %2617 = vdwg.mxu0
        %2618 = vmatprep.subr.bf16.mxu0 %v2373
        %2619 = vmatpush1.bf16.msra.mxu0 %v2372
        %2620 = vmatprep.subr.bf16.mxu0 %v2389
        %2621 = vmatpush1.bf16.msra.mxu0 %v2388
        %2622 = vmatprep.subr.bf16.mxu0 %v2405
        %2623 = vmatpush1.bf16.msra.mxu0 %v2404
        %2624 = vmatprep.subr.bf16.mxu0 %v2421
        %2625 = vmatpush1.bf16.msra.mxu0 %v2420
        %2626 = vmatprep.subr.bf16.mxu0 0
        %2627 = vmatpush1.bf16.msra.mxu0 0
        %2628 = vmatprep.subr.bf16.mxu0 0
        %2629 = vmatpush1.bf16.msra.mxu0 0
        %2630 = vmatprep.subr.bf16.mxu0 0
        %2631 = vmatpush1.bf16.msra.mxu0 0
        %2632 = vmatprep.subr.bf16.mxu0 0
        %2633 = vmatpush1.bf16.msra.mxu0 0
        %2634 = vmatprep.subr.bf16.mxu0 0
        %2635 = vmatpush1.bf16.msra.mxu0 0
        %2636 = vmatprep.subr.bf16.mxu0 0
        %2637 = vmatpush1.bf16.msra.mxu0 0
        %2638 = vmatprep.subr.bf16.mxu0 0
        %2639 = vmatpush1.bf16.msra.mxu0 0
        %2640 = vmatprep.subr.bf16.mxu0 0
        %2641 = vmatpush1.bf16.msra.mxu0 0
        %2642 = vmatprep.subr.bf16.mxu0 0
        %2643 = vmatpush1.bf16.msra.mxu0 0
        %2644 = vmatprep.subr.bf16.mxu0 0
        %2645 = vmatpush1.bf16.msra.mxu0 0
        %2646 = vmatprep.subr.bf16.mxu0 0
        %2647 = vmatpush1.bf16.msra.mxu0 0
        %2648 = vmatprep.subr.bf16.mxu0 0
        %2649 = vmatpush1.bf16.msra.mxu0 0
        %2650 = vmatprep.mubr.bf16.mxu0 0
        %2651 = vmatmul.mubr.bf16.gmra.mrb[0].mxu0 %v2461
        %v2652 = vpop.f32.mrb[0].mxu0
        %v2653 = vadd.f32 0.0, %v2652
        %v2654 = vpop.f32.mrb[0].mxu0
        %v2655 = vadd.f32 0.0, %v2654
        %v2656 = vpop.f32.mrb[0].mxu0
        %v2657 = vadd.f32 0.0, %v2656
        %v2658 = vpop.f32.mrb[0].mxu0
        %v2659 = vadd.f32 0.0, %v2658
        %2660 = vmatprep.mubr.bf16.mxu0 0
        %2661 = vmatmul.mubr.bf16.gmra.mrb[0].mxu0 %v2464
        %v2662 = vpop.f32.mrb[0].mxu0
        %v2663 = vadd.f32 0.0, %v2662
        %v2664 = vpop.f32.mrb[0].mxu0
        %v2665 = vadd.f32 0.0, %v2664
        %v2666 = vpop.f32.mrb[0].mxu0
        %v2667 = vadd.f32 0.0, %v2666
        %v2668 = vpop.f32.mrb[0].mxu0
        %v2669 = vadd.f32 0.0, %v2668
        %2670 = vmatprep.mubr.bf16.mxu0 0
        %2671 = vmatmul.mubr.bf16.gmra.mrb[0].mxu0 %v2467
        %v2672 = vpop.f32.mrb[0].mxu0
        %v2673 = vadd.f32 0.0, %v2672
        %v2674 = vpop.f32.mrb[0].mxu0
        %v2675 = vadd.f32 0.0, %v2674
        %v2676 = vpop.f32.mrb[0].mxu0
        %v2677 = vadd.f32 0.0, %v2676
        %v2678 = vpop.f32.mrb[0].mxu0
        %v2679 = vadd.f32 0.0, %v2678
        %2680 = vmatprep.mubr.bf16.mxu0 0
        %2681 = vmatmul.mubr.bf16.gmra.mrb[0].mxu0 %v2470
        %v2682 = vpop.f32.mrb[0].mxu0
        %v2683 = vadd.f32 0.0, %v2682
        %v2684 = vpop.f32.mrb[0].mxu0
        %v2685 = vadd.f32 0.0, %v2684
        %v2686 = vpop.f32.mrb[0].mxu0
        %v2687 = vadd.f32 0.0, %v2686
        %v2688 = vpop.f32.mrb[0].mxu0
        %v2689 = vadd.f32 0.0, %v2688
        %2690 = vdwg.mxu0
        %2691 = vmatprep.subr.bf16.mxu0 %v2375
        %2692 = vmatpush1.bf16.msra.mxu0 %v2374
        %2693 = vmatprep.subr.bf16.mxu0 %v2391
        %2694 = vmatpush1.bf16.msra.mxu0 %v2390
        %2695 = vmatprep.subr.bf16.mxu0 %v2407
        %2696 = vmatpush1.bf16.msra.mxu0 %v2406
        %2697 = vmatprep.subr.bf16.mxu0 %v2423
        %2698 = vmatpush1.bf16.msra.mxu0 %v2422
        %2699 = vmatprep.subr.bf16.mxu0 0
        %2700 = vmatpush1.bf16.msra.mxu0 0
        %2701 = vmatprep.subr.bf16.mxu0 0
        %2702 = vmatpush1.bf16.msra.mxu0 0
        %2703 = vmatprep.subr.bf16.mxu0 0
        %2704 = vmatpush1.bf16.msra.mxu0 0
        %2705 = vmatprep.subr.bf16.mxu0 0
        %2706 = vmatpush1.bf16.msra.mxu0 0
        %2707 = vmatprep.subr.bf16.mxu0 0
        %2708 = vmatpush1.bf16.msra.mxu0 0
        %2709 = vmatprep.subr.bf16.mxu0 0
        %2710 = vmatpush1.bf16.msra.mxu0 0
        %2711 = vmatprep.subr.bf16.mxu0 0
        %2712 = vmatpush1.bf16.msra.mxu0 0
        %2713 = vmatprep.subr.bf16.mxu0 0
        %2714 = vmatpush1.bf16.msra.mxu0 0
        %2715 = vmatprep.subr.bf16.mxu0 0
        %2716 = vmatpush1.bf16.msra.mxu0 0
        %2717 = vmatprep.subr.bf16.mxu0 0
        %2718 = vmatpush1.bf16.msra.mxu0 0
        %2719 = vmatprep.subr.bf16.mxu0 0
        %2720 = vmatpush1.bf16.msra.mxu0 0
        %2721 = vmatprep.subr.bf16.mxu0 0
        %2722 = vmatpush1.bf16.msra.mxu0 0
        %2723 = vmatprep.mubr.bf16.mxu0 0
        %2724 = vmatmul.mubr.bf16.gmra.mrb[0].mxu0 %v2461
        %v2725 = vpop.f32.mrb[0].mxu0
        %v2726 = vadd.f32 0.0, %v2725
        %v2727 = vpop.f32.mrb[0].mxu0
        %v2728 = vadd.f32 0.0, %v2727
        %v2729 = vpop.f32.mrb[0].mxu0
        %v2730 = vadd.f32 0.0, %v2729
        %v2731 = vpop.f32.mrb[0].mxu0
        %v2732 = vadd.f32 0.0, %v2731
        %2733 = vmatprep.mubr.bf16.mxu0 0
        %2734 = vmatmul.mubr.bf16.gmra.mrb[0].mxu0 %v2464
        %v2735 = vpop.f32.mrb[0].mxu0
        %v2736 = vadd.f32 0.0, %v2735
        %v2737 = vpop.f32.mrb[0].mxu0
        %v2738 = vadd.f32 0.0, %v2737
        %v2739 = vpop.f32.mrb[0].mxu0
        %v2740 = vadd.f32 0.0, %v2739
        %v2741 = vpop.f32.mrb[0].mxu0
        %v2742 = vadd.f32 0.0, %v2741
        %2743 = vmatprep.mubr.bf16.mxu0 0
        %2744 = vmatmul.mubr.bf16.gmra.mrb[0].mxu0 %v2467
        %v2745 = vpop.f32.mrb[0].mxu0
        %v2746 = vadd.f32 0.0, %v2745
        %v2747 = vpop.f32.mrb[0].mxu0
        %v2748 = vadd.f32 0.0, %v2747
        %v2749 = vpop.f32.mrb[0].mxu0
        %v2750 = vadd.f32 0.0, %v2749
        %v2751 = vpop.f32.mrb[0].mxu0
        %v2752 = vadd.f32 0.0, %v2751
        %2753 = vmatprep.mubr.bf16.mxu0 0
        %2754 = vmatmul.mubr.bf16.gmra.mrb[0].mxu0 %v2470
        %v2755 = vpop.f32.mrb[0].mxu0
        %v2756 = vadd.f32 0.0, %v2755
        %v2757 = vpop.f32.mrb[0].mxu0
        %v2758 = vadd.f32 0.0, %v2757
        %v2759 = vpop.f32.mrb[0].mxu0
        %v2760 = vadd.f32 0.0, %v2759
        %v2761 = vpop.f32.mrb[0].mxu0
        %v2762 = vadd.f32 0.0, %v2761
        %2763 = vdwg.mxu0
        %2764 = vmatprep.subr.bf16.mxu0 %v2377
        %2765 = vmatpush1.bf16.msra.mxu0 %v2376
        %2766 = vmatprep.subr.bf16.mxu0 %v2393
        %2767 = vmatpush1.bf16.msra.mxu0 %v2392
        %2768 = vmatprep.subr.bf16.mxu0 %v2409
        %2769 = vmatpush1.bf16.msra.mxu0 %v2408
        %2770 = vmatprep.subr.bf16.mxu0 %v2425
        %2771 = vmatpush1.bf16.msra.mxu0 %v2424
        %2772 = vmatprep.subr.bf16.mxu0 0
        %2773 = vmatpush1.bf16.msra.mxu0 0
        %2774 = vmatprep.subr.bf16.mxu0 0
        %2775 = vmatpush1.bf16.msra.mxu0 0
        %2776 = vmatprep.subr.bf16.mxu0 0
        %2777 = vmatpush1.bf16.msra.mxu0 0
        %2778 = vmatprep.subr.bf16.mxu0 0
        %2779 = vmatpush1.bf16.msra.mxu0 0
        %2780 = vmatprep.subr.bf16.mxu0 0
        %2781 = vmatpush1.bf16.msra.mxu0 0
        %2782 = vmatprep.subr.bf16.mxu0 0
        %2783 = vmatpush1.bf16.msra.mxu0 0
        %2784 = vmatprep.subr.bf16.mxu0 0
        %2785 = vmatpush1.bf16.msra.mxu0 0
        %2786 = vmatprep.subr.bf16.mxu0 0
        %2787 = vmatpush1.bf16.msra.mxu0 0
        %2788 = vmatprep.subr.bf16.mxu0 0
        %2789 = vmatpush1.bf16.msra.mxu0 0
        %2790 = vmatprep.subr.bf16.mxu0 0
        %2791 = vmatpush1.bf16.msra.mxu0 0
        %2792 = vmatprep.subr.bf16.mxu0 0
        %2793 = vmatpush1.bf16.msra.mxu0 0
        %2794 = vmatprep.subr.bf16.mxu0 0
        %2795 = vmatpush1.bf16.msra.mxu0 0
        %2796 = vmatprep.mubr.bf16.mxu0 0
        %2797 = vmatmul.mubr.bf16.gmra.mrb[0].mxu0 %v2461
        %v2798 = vpop.f32.mrb[0].mxu0
        %v2799 = vadd.f32 0.0, %v2798
        %v2800 = vpop.f32.mrb[0].mxu0
        %v2801 = vadd.f32 0.0, %v2800
        %v2802 = vpop.f32.mrb[0].mxu0
        %v2803 = vadd.f32 0.0, %v2802
        %v2804 = vpop.f32.mrb[0].mxu0
        %v2805 = vadd.f32 0.0, %v2804
        %2806 = vmatprep.mubr.bf16.mxu0 0
        %2807 = vmatmul.mubr.bf16.gmra.mrb[0].mxu0 %v2464
        %v2808 = vpop.f32.mrb[0].mxu0
        %v2809 = vadd.f32 0.0, %v2808
        %v2810 = vpop.f32.mrb[0].mxu0
        %v2811 = vadd.f32 0.0, %v2810
        %v2812 = vpop.f32.mrb[0].mxu0
        %v2813 = vadd.f32 0.0, %v2812
        %v2814 = vpop.f32.mrb[0].mxu0
        %v2815 = vadd.f32 0.0, %v2814
        %2816 = vmatprep.mubr.bf16.mxu0 0
        %2817 = vmatmul.mubr.bf16.gmra.mrb[0].mxu0 %v2467
        %v2818 = vpop.f32.mrb[0].mxu0
        %v2819 = vadd.f32 0.0, %v2818
        %v2820 = vpop.f32.mrb[0].mxu0
        %v2821 = vadd.f32 0.0, %v2820
        %v2822 = vpop.f32.mrb[0].mxu0
        %v2823 = vadd.f32 0.0, %v2822
        %v2824 = vpop.f32.mrb[0].mxu0
        %v2825 = vadd.f32 0.0, %v2824
        %2826 = vmatprep.mubr.bf16.mxu0 0
        %2827 = vmatmul.mubr.bf16.gmra.mrb[0].mxu0 %v2470
        %v2828 = vpop.f32.mrb[0].mxu0
        %v2829 = vadd.f32 0.0, %v2828
        %v2830 = vpop.f32.mrb[0].mxu0
        %v2831 = vadd.f32 0.0, %v2830
        %v2832 = vpop.f32.mrb[0].mxu0
        %v2833 = vadd.f32 0.0, %v2832
        %v2834 = vpop.f32.mrb[0].mxu0
        %v2835 = vadd.f32 0.0, %v2834
        %2836 = vdwg.mxu0
        %2837 = vmatprep.subr.bf16.mxu0 %v2379
        %2838 = vmatpush1.bf16.msra.mxu0 %v2378
        %2839 = vmatprep.subr.bf16.mxu0 %v2395
        %2840 = vmatpush1.bf16.msra.mxu0 %v2394
        %2841 = vmatprep.subr.bf16.mxu0 %v2411
        %2842 = vmatpush1.bf16.msra.mxu0 %v2410
        %2843 = vmatprep.subr.bf16.mxu0 %v2427
        %2844 = vmatpush1.bf16.msra.mxu0 %v2426
        %2845 = vmatprep.subr.bf16.mxu0 0
        %2846 = vmatpush1.bf16.msra.mxu0 0
        %2847 = vmatprep.subr.bf16.mxu0 0
        %2848 = vmatpush1.bf16.msra.mxu0 0
        %2849 = vmatprep.subr.bf16.mxu0 0
        %2850 = vmatpush1.bf16.msra.mxu0 0
        %2851 = vmatprep.subr.bf16.mxu0 0
        %2852 = vmatpush1.bf16.msra.mxu0 0
        %2853 = vmatprep.subr.bf16.mxu0 0
        %2854 = vmatpush1.bf16.msra.mxu0 0
        %2855 = vmatprep.subr.bf16.mxu0 0
        %2856 = vmatpush1.bf16.msra.mxu0 0
        %2857 = vmatprep.subr.bf16.mxu0 0
        %2858 = vmatpush1.bf16.msra.mxu0 0
        %2859 = vmatprep.subr.bf16.mxu0 0
        %2860 = vmatpush1.bf16.msra.mxu0 0
        %2861 = vmatprep.subr.bf16.mxu0 0
        %2862 = vmatpush1.bf16.msra.mxu0 0
        %2863 = vmatprep.subr.bf16.mxu0 0
        %2864 = vmatpush1.bf16.msra.mxu0 0
        %2865 = vmatprep.subr.bf16.mxu0 0
        %2866 = vmatpush1.bf16.msra.mxu0 0
        %2867 = vmatprep.subr.bf16.mxu0 0
        %2868 = vmatpush1.bf16.msra.mxu0 0
        %2869 = vmatprep.mubr.bf16.mxu0 0
        %2870 = vmatmul.mubr.bf16.gmra.mrb[0].mxu0 %v2461
        %v2871 = vpop.f32.mrb[0].mxu0
        %v2872 = vadd.f32 0.0, %v2871
        %v2873 = vpop.f32.mrb[0].mxu0
        %v2874 = vadd.f32 0.0, %v2873
        %v2875 = vpop.f32.mrb[0].mxu0
        %v2876 = vadd.f32 0.0, %v2875
        %v2877 = vpop.f32.mrb[0].mxu0
        %v2878 = vadd.f32 0.0, %v2877
        %2879 = vmatprep.mubr.bf16.mxu0 0
        %2880 = vmatmul.mubr.bf16.gmra.mrb[0].mxu0 %v2464
        %v2881 = vpop.f32.mrb[0].mxu0
        %v2882 = vadd.f32 0.0, %v2881
        %v2883 = vpop.f32.mrb[0].mxu0
        %v2884 = vadd.f32 0.0, %v2883
        %v2885 = vpop.f32.mrb[0].mxu0
        %v2886 = vadd.f32 0.0, %v2885
        %v2887 = vpop.f32.mrb[0].mxu0
        %v2888 = vadd.f32 0.0, %v2887
        %2889 = vmatprep.mubr.bf16.mxu0 0
        %2890 = vmatmul.mubr.bf16.gmra.mrb[0].mxu0 %v2467
        %v2891 = vpop.f32.mrb[0].mxu0
        %v2892 = vadd.f32 0.0, %v2891
        %v2893 = vpop.f32.mrb[0].mxu0
        %v2894 = vadd.f32 0.0, %v2893
        %v2895 = vpop.f32.mrb[0].mxu0
        %v2896 = vadd.f32 0.0, %v2895
        %v2897 = vpop.f32.mrb[0].mxu0
        %v2898 = vadd.f32 0.0, %v2897
        %2899 = vmatprep.mubr.bf16.mxu0 0
        %2900 = vmatmul.mubr.bf16.gmra.mrb[0].mxu0 %v2470
        %v2901 = vpop.f32.mrb[0].mxu0
        %v2902 = vadd.f32 0.0, %v2901
        %v2903 = vpop.f32.mrb[0].mxu0
        %v2904 = vadd.f32 0.0, %v2903
        %v2905 = vpop.f32.mrb[0].mxu0
        %v2906 = vadd.f32 0.0, %v2905
        %v2907 = vpop.f32.mrb[0].mxu0
        %v2908 = vadd.f32 0.0, %v2907
        %2909 = vdwg.mxu0
        %2910 = vmatprep.subr.bf16.mxu0 %v2381
        %2911 = vmatpush1.bf16.msra.mxu0 %v2380
        %2912 = vmatprep.subr.bf16.mxu0 %v2397
        %2913 = vmatpush1.bf16.msra.mxu0 %v2396
        %2914 = vmatprep.subr.bf16.mxu0 %v2413
        %2915 = vmatpush1.bf16.msra.mxu0 %v2412
        %2916 = vmatprep.subr.bf16.mxu0 %v2429
        %2917 = vmatpush1.bf16.msra.mxu0 %v2428
        %2918 = vmatprep.subr.bf16.mxu0 0
        %2919 = vmatpush1.bf16.msra.mxu0 0
        %2920 = vmatprep.subr.bf16.mxu0 0
        %2921 = vmatpush1.bf16.msra.mxu0 0
        %2922 = vmatprep.subr.bf16.mxu0 0
        %2923 = vmatpush1.bf16.msra.mxu0 0
        %2924 = vmatprep.subr.bf16.mxu0 0
        %2925 = vmatpush1.bf16.msra.mxu0 0
        %2926 = vmatprep.subr.bf16.mxu0 0
        %2927 = vmatpush1.bf16.msra.mxu0 0
        %2928 = vmatprep.subr.bf16.mxu0 0
        %2929 = vmatpush1.bf16.msra.mxu0 0
        %2930 = vmatprep.subr.bf16.mxu0 0
        %2931 = vmatpush1.bf16.msra.mxu0 0
        %2932 = vmatprep.subr.bf16.mxu0 0
        %2933 = vmatpush1.bf16.msra.mxu0 0
        %2934 = vmatprep.subr.bf16.mxu0 0
        %2935 = vmatpush1.bf16.msra.mxu0 0
        %2936 = vmatprep.subr.bf16.mxu0 0
        %2937 = vmatpush1.bf16.msra.mxu0 0
        %2938 = vmatprep.subr.bf16.mxu0 0
        %2939 = vmatpush1.bf16.msra.mxu0 0
        %2940 = vmatprep.subr.bf16.mxu0 0
        %2941 = vmatpush1.bf16.msra.mxu0 0
        %2942 = vmatprep.mubr.bf16.mxu0 0
        %2943 = vmatmul.mubr.bf16.gmra.mrb[0].mxu0 %v2461
        %v2944 = vpop.f32.mrb[0].mxu0
        %v2945 = vadd.f32 0.0, %v2944
        %v2946 = vpop.f32.mrb[0].mxu0
        %v2947 = vadd.f32 0.0, %v2946
        %v2948 = vpop.f32.mrb[0].mxu0
        %v2949 = vadd.f32 0.0, %v2948
        %v2950 = vpop.f32.mrb[0].mxu0
        %v2951 = vadd.f32 0.0, %v2950
        %2952 = vmatprep.mubr.bf16.mxu0 0
        %2953 = vmatmul.mubr.bf16.gmra.mrb[0].mxu0 %v2464
        %v2954 = vpop.f32.mrb[0].mxu0
        %v2955 = vadd.f32 0.0, %v2954
        %v2956 = vpop.f32.mrb[0].mxu0
        %v2957 = vadd.f32 0.0, %v2956
        %v2958 = vpop.f32.mrb[0].mxu0
        %v2959 = vadd.f32 0.0, %v2958
        %v2960 = vpop.f32.mrb[0].mxu0
        %v2961 = vadd.f32 0.0, %v2960
        %2962 = vmatprep.mubr.bf16.mxu0 0
        %2963 = vmatmul.mubr.bf16.gmra.mrb[0].mxu0 %v2467
        %v2964 = vpop.f32.mrb[0].mxu0
        %v2965 = vadd.f32 0.0, %v2964
        %v2966 = vpop.f32.mrb[0].mxu0
        %v2967 = vadd.f32 0.0, %v2966
        %v2968 = vpop.f32.mrb[0].mxu0
        %v2969 = vadd.f32 0.0, %v2968
        %v2970 = vpop.f32.mrb[0].mxu0
        %v2971 = vadd.f32 0.0, %v2970
        %2972 = vmatprep.mubr.bf16.mxu0 0
        %2973 = vmatmul.mubr.bf16.gmra.mrb[0].mxu0 %v2470
        %v2974 = vpop.f32.mrb[0].mxu0
        %v2975 = vadd.f32 0.0, %v2974
        %v2976 = vpop.f32.mrb[0].mxu0
        %v2977 = vadd.f32 0.0, %v2976
        %v2978 = vpop.f32.mrb[0].mxu0
        %v2979 = vadd.f32 0.0, %v2978
        %v2980 = vpop.f32.mrb[0].mxu0
        %v2981 = vadd.f32 0.0, %v2980
        %2982 = vdwg.mxu0
        %2983 = vmatprep.subr.bf16.mxu0 %v2383
        %2984 = vmatpush1.bf16.msra.mxu0 %v2382
        %2985 = vmatprep.subr.bf16.mxu0 %v2399
        %2986 = vmatpush1.bf16.msra.mxu0 %v2398
        %2987 = vmatprep.subr.bf16.mxu0 %v2415
        %2988 = vmatpush1.bf16.msra.mxu0 %v2414
        %2989 = vmatprep.subr.bf16.mxu0 %v2431
        %2990 = vmatpush1.bf16.msra.mxu0 %v2430
        %2991 = vmatprep.subr.bf16.mxu0 0
        %2992 = vmatpush1.bf16.msra.mxu0 0
        %2993 = vmatprep.subr.bf16.mxu0 0
        %2994 = vmatpush1.bf16.msra.mxu0 0
        %2995 = vmatprep.subr.bf16.mxu0 0
        %2996 = vmatpush1.bf16.msra.mxu0 0
        %2997 = vmatprep.subr.bf16.mxu0 0
        %2998 = vmatpush1.bf16.msra.mxu0 0
        %2999 = vmatprep.subr.bf16.mxu0 0
        %3000 = vmatpush1.bf16.msra.mxu0 0
        %3001 = vmatprep.subr.bf16.mxu0 0
        %3002 = vmatpush1.bf16.msra.mxu0 0
        %3003 = vmatprep.subr.bf16.mxu0 0
        %3004 = vmatpush1.bf16.msra.mxu0 0
        %3005 = vmatprep.subr.bf16.mxu0 0
        %3006 = vmatpush1.bf16.msra.mxu0 0
        %3007 = vmatprep.subr.bf16.mxu0 0
        %3008 = vmatpush1.bf16.msra.mxu0 0
        %3009 = vmatprep.subr.bf16.mxu0 0
        %3010 = vmatpush1.bf16.msra.mxu0 0
        %3011 = vmatprep.subr.bf16.mxu0 0
        %3012 = vmatpush1.bf16.msra.mxu0 0
        %3013 = vmatprep.subr.bf16.mxu0 0
        %3014 = vmatpush1.bf16.msra.mxu0 0
        %3015 = vmatprep.mubr.bf16.mxu0 0
        %3016 = vmatmul.mubr.bf16.gmra.mrb[0].mxu0 %v2461
        %v3017 = vpop.f32.mrb[0].mxu0
        %v3018 = vadd.f32 0.0, %v3017
        %v3019 = vpop.f32.mrb[0].mxu0
        %v3020 = vadd.f32 0.0, %v3019
        %v3021 = vpop.f32.mrb[0].mxu0
        %v3022 = vadd.f32 0.0, %v3021
        %v3023 = vpop.f32.mrb[0].mxu0
        %v3024 = vadd.f32 0.0, %v3023
        %3025 = vmatprep.mubr.bf16.mxu0 0
        %3026 = vmatmul.mubr.bf16.gmra.mrb[0].mxu0 %v2464
        %v3027 = vpop.f32.mrb[0].mxu0
        %v3028 = vadd.f32 0.0, %v3027
        %v3029 = vpop.f32.mrb[0].mxu0
        %v3030 = vadd.f32 0.0, %v3029
        %v3031 = vpop.f32.mrb[0].mxu0
        %v3032 = vadd.f32 0.0, %v3031
        %v3033 = vpop.f32.mrb[0].mxu0
        %v3034 = vadd.f32 0.0, %v3033
        %3035 = vmatprep.mubr.bf16.mxu0 0
        %3036 = vmatmul.mubr.bf16.gmra.mrb[0].mxu0 %v2467
        %v3037 = vpop.f32.mrb[0].mxu0
        %v3038 = vadd.f32 0.0, %v3037
        %v3039 = vpop.f32.mrb[0].mxu0
        %v3040 = vadd.f32 0.0, %v3039
        %v3041 = vpop.f32.mrb[0].mxu0
        %v3042 = vadd.f32 0.0, %v3041
        %v3043 = vpop.f32.mrb[0].mxu0
        %v3044 = vadd.f32 0.0, %v3043
        %3045 = vmatprep.mubr.bf16.mxu0 0
        %3046 = vmatmul.mubr.bf16.gmra.mrb[0].mxu0 %v2470
        %v3047 = vpop.f32.mrb[0].mxu0
        %v3048 = vadd.f32 0.0, %v3047
        %v3049 = vpop.f32.mrb[0].mxu0
        %v3050 = vadd.f32 0.0, %v3049
        %v3051 = vpop.f32.mrb[0].mxu0
        %v3052 = vadd.f32 0.0, %v3051
        %v3053 = vpop.f32.mrb[0].mxu0
        %v3054 = vadd.f32 0.0, %v3053
        %3055 = vdwg.mxu0
        %v3056 = vadd.f32 %v594, %v2507
        %v3057 = vadd.f32 %v596, %v2509
        %v3058 = vadd.f32 %v707, %v2580
        %v3059 = vadd.f32 %v709, %v2582
        %v3060 = vadd.f32 %v820, %v2653
        %v3061 = vadd.f32 %v822, %v2655
        %v3062 = vadd.f32 %v933, %v2726
        %v3063 = vadd.f32 %v935, %v2728
        %v3064 = vadd.f32 %v1046, %v2799
        %v3065 = vadd.f32 %v1048, %v2801
        %v3066 = vadd.f32 %v1159, %v2872
        %v3067 = vadd.f32 %v1161, %v2874
        %v3068 = vadd.f32 %v1272, %v2945
        %v3069 = vadd.f32 %v1274, %v2947
        %v3070 = vadd.f32 %v1385, %v3018
        %v3071 = vadd.f32 %v1387, %v3020
        %v3072 = vadd.f32 %v598, %v2511
        %v3073 = vadd.f32 %v600, %v2513
        %v3074 = vadd.f32 %v711, %v2584
        %v3075 = vadd.f32 %v713, %v2586
        %v3076 = vadd.f32 %v824, %v2657
        %v3077 = vadd.f32 %v826, %v2659
        %v3078 = vadd.f32 %v937, %v2730
        %v3079 = vadd.f32 %v939, %v2732
        %v3080 = vadd.f32 %v1050, %v2803
        %v3081 = vadd.f32 %v1052, %v2805
        %v3082 = vadd.f32 %v1163, %v2876
        %v3083 = vadd.f32 %v1165, %v2878
        %v3084 = vadd.f32 %v1276, %v2949
        %v3085 = vadd.f32 %v1278, %v2951
        %v3086 = vadd.f32 %v1389, %v3022
        %v3087 = vadd.f32 %v1391, %v3024
        %v3088 = vadd.f32 %v604, %v2517
        %v3089 = vadd.f32 %v606, %v2519
        %v3090 = vadd.f32 %v717, %v2590
        %v3091 = vadd.f32 %v719, %v2592
        %v3092 = vadd.f32 %v830, %v2663
        %v3093 = vadd.f32 %v832, %v2665
        %v3094 = vadd.f32 %v943, %v2736
        %v3095 = vadd.f32 %v945, %v2738
        %v3096 = vadd.f32 %v1056, %v2809
        %v3097 = vadd.f32 %v1058, %v2811
        %v3098 = vadd.f32 %v1169, %v2882
        %v3099 = vadd.f32 %v1171, %v2884
        %v3100 = vadd.f32 %v1282, %v2955
        %v3101 = vadd.f32 %v1284, %v2957
        %v3102 = vadd.f32 %v1395, %v3028
        %v3103 = vadd.f32 %v1397, %v3030
        %v3104 = vadd.f32 %v608, %v2521
        %v3105 = vadd.f32 %v610, %v2523
        %v3106 = vadd.f32 %v721, %v2594
        %v3107 = vadd.f32 %v723, %v2596
        %v3108 = vadd.f32 %v834, %v2667
        %v3109 = vadd.f32 %v836, %v2669
        %v3110 = vadd.f32 %v947, %v2740
        %v3111 = vadd.f32 %v949, %v2742
        %v3112 = vadd.f32 %v1060, %v2813
        %v3113 = vadd.f32 %v1062, %v2815
        %v3114 = vadd.f32 %v1173, %v2886
        %v3115 = vadd.f32 %v1175, %v2888
        %v3116 = vadd.f32 %v1286, %v2959
        %v3117 = vadd.f32 %v1288, %v2961
        %v3118 = vadd.f32 %v1399, %v3032
        %v3119 = vadd.f32 %v1401, %v3034
        %v3120 = vadd.f32 %v614, %v2527
        %v3121 = vadd.f32 %v616, %v2529
        %v3122 = vadd.f32 %v727, %v2600
        %v3123 = vadd.f32 %v729, %v2602
        %v3124 = vadd.f32 %v840, %v2673
        %v3125 = vadd.f32 %v842, %v2675
        %v3126 = vadd.f32 %v953, %v2746
        %v3127 = vadd.f32 %v955, %v2748
        %v3128 = vadd.f32 %v1066, %v2819
        %v3129 = vadd.f32 %v1068, %v2821
        %v3130 = vadd.f32 %v1179, %v2892
        %v3131 = vadd.f32 %v1181, %v2894
        %v3132 = vadd.f32 %v1292, %v2965
        %v3133 = vadd.f32 %v1294, %v2967
        %v3134 = vadd.f32 %v1405, %v3038
        %v3135 = vadd.f32 %v1407, %v3040
        %v3136 = vadd.f32 %v618, %v2531
        %v3137 = vadd.f32 %v620, %v2533
        %v3138 = vadd.f32 %v731, %v2604
        %v3139 = vadd.f32 %v733, %v2606
        %v3140 = vadd.f32 %v844, %v2677
        %v3141 = vadd.f32 %v846, %v2679
        %v3142 = vadd.f32 %v957, %v2750
        %v3143 = vadd.f32 %v959, %v2752
        %v3144 = vadd.f32 %v1070, %v2823
        %v3145 = vadd.f32 %v1072, %v2825
        %v3146 = vadd.f32 %v1183, %v2896
        %v3147 = vadd.f32 %v1185, %v2898
        %v3148 = vadd.f32 %v1296, %v2969
        %v3149 = vadd.f32 %v1298, %v2971
        %v3150 = vadd.f32 %v1409, %v3042
        %v3151 = vadd.f32 %v1411, %v3044
        %v3152 = vadd.f32 %v624, %v2537
        %v3153 = vadd.f32 %v626, %v2539
        %v3154 = vadd.f32 %v737, %v2610
        %v3155 = vadd.f32 %v739, %v2612
        %v3156 = vadd.f32 %v850, %v2683
        %v3157 = vadd.f32 %v852, %v2685
        %v3158 = vadd.f32 %v963, %v2756
        %v3159 = vadd.f32 %v965, %v2758
        %v3160 = vadd.f32 %v1076, %v2829
        %v3161 = vadd.f32 %v1078, %v2831
        %v3162 = vadd.f32 %v1189, %v2902
        %v3163 = vadd.f32 %v1191, %v2904
        %v3164 = vadd.f32 %v1302, %v2975
        %v3165 = vadd.f32 %v1304, %v2977
        %v3166 = vadd.f32 %v1415, %v3048
        %v3167 = vadd.f32 %v1417, %v3050
        %v3168 = vadd.f32 %v628, %v2541
        %v3169 = vadd.f32 %v630, %v2543
        %v3170 = vadd.f32 %v741, %v2614
        %v3171 = vadd.f32 %v743, %v2616
        %v3172 = vadd.f32 %v854, %v2687
        %v3173 = vadd.f32 %v856, %v2689
        %v3174 = vadd.f32 %v967, %v2760
        %v3175 = vadd.f32 %v969, %v2762
        %v3176 = vadd.f32 %v1080, %v2833
        %v3177 = vadd.f32 %v1082, %v2835
        %v3178 = vadd.f32 %v1193, %v2906
        %v3179 = vadd.f32 %v1195, %v2908
        %v3180 = vadd.f32 %v1306, %v2979
        %v3181 = vadd.f32 %v1308, %v2981
        %v3182 = vadd.f32 %v1419, %v3052
        %v3183 = vadd.f32 %v1421, %v3054
        %v3184 = vmax.f32 %v3056, 0.0
        %v3185 = vmax.f32 %v3057, 0.0
        %v3186 = vmax.f32 %v3058, 0.0
        %v3187 = vmax.f32 %v3059, 0.0
        %v3188 = vmax.f32 %v3060, 0.0
        %v3189 = vmax.f32 %v3061, 0.0
        %v3190 = vmax.f32 %v3062, 0.0
        %v3191 = vmax.f32 %v3063, 0.0
        %v3192 = vmax.f32 %v3064, 0.0
        %v3193 = vmax.f32 %v3065, 0.0
        %v3194 = vmax.f32 %v3066, 0.0
        %v3195 = vmax.f32 %v3067, 0.0
        %v3196 = vmax.f32 %v3068, 0.0
        %v3197 = vmax.f32 %v3069, 0.0
        %v3198 = vmax.f32 %v3070, 0.0
        %v3199 = vmax.f32 %v3071, 0.0
        %v3200 = vmax.f32 %v3072, 0.0
        %v3201 = vmax.f32 %v3073, 0.0
        %v3202 = vmax.f32 %v3074, 0.0
        %v3203 = vmax.f32 %v3075, 0.0
        %v3204 = vmax.f32 %v3076, 0.0
        %v3205 = vmax.f32 %v3077, 0.0
        %v3206 = vmax.f32 %v3078, 0.0
        %v3207 = vmax.f32 %v3079, 0.0
        %v3208 = vmax.f32 %v3080, 0.0
        %v3209 = vmax.f32 %v3081, 0.0
        %v3210 = vmax.f32 %v3082, 0.0
        %v3211 = vmax.f32 %v3083, 0.0
        %v3212 = vmax.f32 %v3084, 0.0
        %v3213 = vmax.f32 %v3085, 0.0
        %v3214 = vmax.f32 %v3086, 0.0
        %v3215 = vmax.f32 %v3087, 0.0
        %v3216 = vmax.f32 %v3088, 0.0
        %v3217 = vmax.f32 %v3089, 0.0
        %v3218 = vmax.f32 %v3090, 0.0
        %v3219 = vmax.f32 %v3091, 0.0
        %v3220 = vmax.f32 %v3092, 0.0
        %v3221 = vmax.f32 %v3093, 0.0
        %v3222 = vmax.f32 %v3094, 0.0
        %v3223 = vmax.f32 %v3095, 0.0
        %v3224 = vmax.f32 %v3096, 0.0
        %v3225 = vmax.f32 %v3097, 0.0
        %v3226 = vmax.f32 %v3098, 0.0
        %v3227 = vmax.f32 %v3099, 0.0
        %v3228 = vmax.f32 %v3100, 0.0
        %v3229 = vmax.f32 %v3101, 0.0
        %v3230 = vmax.f32 %v3102, 0.0
        %v3231 = vmax.f32 %v3103, 0.0
        %v3232 = vmax.f32 %v3104, 0.0
        %v3233 = vmax.f32 %v3105, 0.0
        %v3234 = vmax.f32 %v3106, 0.0
        %v3235 = vmax.f32 %v3107, 0.0
        %v3236 = vmax.f32 %v3108, 0.0
        %v3237 = vmax.f32 %v3109, 0.0
        %v3238 = vmax.f32 %v3110, 0.0
        %v3239 = vmax.f32 %v3111, 0.0
        %v3240 = vmax.f32 %v3112, 0.0
        %v3241 = vmax.f32 %v3113, 0.0
        %v3242 = vmax.f32 %v3114, 0.0
        %v3243 = vmax.f32 %v3115, 0.0
        %v3244 = vmax.f32 %v3116, 0.0
        %v3245 = vmax.f32 %v3117, 0.0
        %v3246 = vmax.f32 %v3118, 0.0
        %v3247 = vmax.f32 %v3119, 0.0
        %v3248 = vmax.f32 %v3120, 0.0
        %v3249 = vmax.f32 %v3121, 0.0
        %v3250 = vmax.f32 %v3122, 0.0
        %v3251 = vmax.f32 %v3123, 0.0
        %v3252 = vmax.f32 %v3124, 0.0
        %v3253 = vmax.f32 %v3125, 0.0
        %v3254 = vmax.f32 %v3126, 0.0
        %v3255 = vmax.f32 %v3127, 0.0
        %v3256 = vmax.f32 %v3128, 0.0
        %v3257 = vmax.f32 %v3129, 0.0
        %v3258 = vmax.f32 %v3130, 0.0
        %v3259 = vmax.f32 %v3131, 0.0
        %v3260 = vmax.f32 %v3132, 0.0
        %v3261 = vmax.f32 %v3133, 0.0
        %v3262 = vmax.f32 %v3134, 0.0
        %v3263 = vmax.f32 %v3135, 0.0
        %v3264 = vmax.f32 %v3136, 0.0
        %v3265 = vmax.f32 %v3137, 0.0
        %v3266 = vmax.f32 %v3138, 0.0
        %v3267 = vmax.f32 %v3139, 0.0
        %v3268 = vmax.f32 %v3140, 0.0
        %v3269 = vmax.f32 %v3141, 0.0
        %v3270 = vmax.f32 %v3142, 0.0
        %v3271 = vmax.f32 %v3143, 0.0
        %v3272 = vmax.f32 %v3144, 0.0
        %v3273 = vmax.f32 %v3145, 0.0
        %v3274 = vmax.f32 %v3146, 0.0
        %v3275 = vmax.f32 %v3147, 0.0
        %v3276 = vmax.f32 %v3148, 0.0
        %v3277 = vmax.f32 %v3149, 0.0
        %v3278 = vmax.f32 %v3150, 0.0
        %v3279 = vmax.f32 %v3151, 0.0
        %v3280 = vmax.f32 %v3152, 0.0
        %v3281 = vmax.f32 %v3153, 0.0
        %v3282 = vmax.f32 %v3154, 0.0
        %v3283 = vmax.f32 %v3155, 0.0
        %v3284 = vmax.f32 %v3156, 0.0
        %v3285 = vmax.f32 %v3157, 0.0
        %v3286 = vmax.f32 %v3158, 0.0
        %v3287 = vmax.f32 %v3159, 0.0
        %v3288 = vmax.f32 %v3160, 0.0
        %v3289 = vmax.f32 %v3161, 0.0
        %v3290 = vmax.f32 %v3162, 0.0
        %v3291 = vmax.f32 %v3163, 0.0
        %v3292 = vmax.f32 %v3164, 0.0
        %v3293 = vmax.f32 %v3165, 0.0
        %v3294 = vmax.f32 %v3166, 0.0
        %v3295 = vmax.f32 %v3167, 0.0
        %v3296 = vmax.f32 %v3168, 0.0
        %v3297 = vmax.f32 %v3169, 0.0
        %v3298 = vmax.f32 %v3170, 0.0
        %v3299 = vmax.f32 %v3171, 0.0
        %v3300 = vmax.f32 %v3172, 0.0
        %v3301 = vmax.f32 %v3173, 0.0
        %v3302 = vmax.f32 %v3174, 0.0
        %v3303 = vmax.f32 %v3175, 0.0
        %v3304 = vmax.f32 %v3176, 0.0
        %v3305 = vmax.f32 %v3177, 0.0
        %v3306 = vmax.f32 %v3178, 0.0
        %v3307 = vmax.f32 %v3179, 0.0
        %v3308 = vmax.f32 %v3180, 0.0
        %v3309 = vmax.f32 %v3181, 0.0
        %v3310 = vmax.f32 %v3182, 0.0
        %v3311 = vmax.f32 %v3183, 0.0
        %v3312 = vld [vmem:[#allocation5] sm:$0xf]
        %v3313 = vld [vmem:[#allocation5 + $0x4] sm:$0xf]
        %v3314 = vld [vmem:[#allocation5 + $0x8] sm:$0xf]
        %v3315 = vld [vmem:[#allocation5 + $0xc] sm:$0xf]
        %v3316 = vld [vmem:[#allocation5 + $0x10] sm:$0xf]
        %v3317 = vld [vmem:[#allocation5 + $0x14] sm:$0xf]
        %v3318 = vld [vmem:[#allocation5 + $0x18] sm:$0xf]
        %v3319 = vld [vmem:[#allocation5 + $0x1c] sm:$0xf]
        %v3320 = vpack.c.bf16 %v3200, %v3184
        %v3321 = vpack.c.bf16 %v3201, %v3185
        %v3322 = vpack.c.bf16 %v3202, %v3186
        %v3323 = vpack.c.bf16 %v3203, %v3187
        %v3324 = vpack.c.bf16 %v3204, %v3188
        %v3325 = vpack.c.bf16 %v3205, %v3189
        %v3326 = vpack.c.bf16 %v3206, %v3190
        %v3327 = vpack.c.bf16 %v3207, %v3191
        %v3328 = vpack.c.bf16 %v3208, %v3192
        %v3329 = vpack.c.bf16 %v3209, %v3193
        %v3330 = vpack.c.bf16 %v3210, %v3194
        %v3331 = vpack.c.bf16 %v3211, %v3195
        %v3332 = vpack.c.bf16 %v3212, %v3196
        %v3333 = vpack.c.bf16 %v3213, %v3197
        %v3334 = vpack.c.bf16 %v3214, %v3198
        %v3335 = vpack.c.bf16 %v3215, %v3199
        %v3336 = vpack.c.bf16 %v3232, %v3216
        %v3337 = vpack.c.bf16 %v3233, %v3217
        %v3338 = vpack.c.bf16 %v3234, %v3218
        %v3339 = vpack.c.bf16 %v3235, %v3219
        %v3340 = vpack.c.bf16 %v3236, %v3220
        %v3341 = vpack.c.bf16 %v3237, %v3221
        %v3342 = vpack.c.bf16 %v3238, %v3222
        %v3343 = vpack.c.bf16 %v3239, %v3223
        %v3344 = vpack.c.bf16 %v3240, %v3224
        %v3345 = vpack.c.bf16 %v3241, %v3225
        %v3346 = vpack.c.bf16 %v3242, %v3226
        %v3347 = vpack.c.bf16 %v3243, %v3227
        %v3348 = vpack.c.bf16 %v3244, %v3228
        %v3349 = vpack.c.bf16 %v3245, %v3229
        %v3350 = vpack.c.bf16 %v3246, %v3230
        %v3351 = vpack.c.bf16 %v3247, %v3231
        %v3352 = vpack.c.bf16 %v3264, %v3248
        %v3353 = vpack.c.bf16 %v3265, %v3249
        %v3354 = vpack.c.bf16 %v3266, %v3250
        %v3355 = vpack.c.bf16 %v3267, %v3251
        %v3356 = vpack.c.bf16 %v3268, %v3252
        %v3357 = vpack.c.bf16 %v3269, %v3253
        %v3358 = vpack.c.bf16 %v3270, %v3254
        %v3359 = vpack.c.bf16 %v3271, %v3255
        %v3360 = vpack.c.bf16 %v3272, %v3256
        %v3361 = vpack.c.bf16 %v3273, %v3257
        %v3362 = vpack.c.bf16 %v3274, %v3258
        %v3363 = vpack.c.bf16 %v3275, %v3259
        %v3364 = vpack.c.bf16 %v3276, %v3260
        %v3365 = vpack.c.bf16 %v3277, %v3261
        %v3366 = vpack.c.bf16 %v3278, %v3262
        %v3367 = vpack.c.bf16 %v3279, %v3263
        %v3368 = vpack.c.bf16 %v3296, %v3280
        %v3369 = vpack.c.bf16 %v3297, %v3281
        %v3370 = vpack.c.bf16 %v3298, %v3282
        %v3371 = vpack.c.bf16 %v3299, %v3283
        %v3372 = vpack.c.bf16 %v3300, %v3284
        %v3373 = vpack.c.bf16 %v3301, %v3285
        %v3374 = vpack.c.bf16 %v3302, %v3286
        %v3375 = vpack.c.bf16 %v3303, %v3287
        %v3376 = vpack.c.bf16 %v3304, %v3288
        %v3377 = vpack.c.bf16 %v3305, %v3289
        %v3378 = vpack.c.bf16 %v3306, %v3290
        %v3379 = vpack.c.bf16 %v3307, %v3291
        %v3380 = vpack.c.bf16 %v3308, %v3292
        %v3381 = vpack.c.bf16 %v3309, %v3293
        %v3382 = vpack.c.bf16 %v3310, %v3294
        %v3383 = vpack.c.bf16 %v3311, %v3295
        %v3392 = vunpack.c.l.b16 %v3312
        %v3393 = vunpack.c.l.b16 %v3313
        %v3394 = vunpack.c.l.b16 %v3314
        %v3395 = vunpack.c.l.b16 %v3315
        %v3396 = vunpack.c.l.b16 %v3316
        %v3397 = vunpack.c.l.b16 %v3317
        %v3398 = vunpack.c.l.b16 %v3318
        %v3399 = vunpack.c.l.b16 %v3319
        %v3400 = vpack.c.b16 %v3393, %v3392
        %v3401 = vpack.c.b16 %v3395, %v3394
        %v3402 = vpack.c.b16 %v3397, %v3396
        %v3403 = vpack.c.b16 %v3399, %v3398
        %v3405 = vsel %vm1643, %v3400, 0
        %v3408 = vsel %vm1643, %v3401, 0
        %v3411 = vsel %vm1643, %v3402, 0
        %v3414 = vsel %vm1643, %v3403, 0
        %3416 = vmatprep.subr.bf16.mxu0 %v3321
        %3417 = vmatpush1.bf16.msra.mxu0 %v3320
        %3418 = vmatprep.subr.bf16.mxu0 %v3337
        %3419 = vmatpush1.bf16.msra.mxu0 %v3336
        %3420 = vmatprep.subr.bf16.mxu0 %v3353
        %3421 = vmatpush1.bf16.msra.mxu0 %v3352
        %3422 = vmatprep.subr.bf16.mxu0 %v3369
        %3423 = vmatpush1.bf16.msra.mxu0 %v3368
        %3424 = vmatprep.subr.bf16.mxu0 0
        %3425 = vmatpush1.bf16.msra.mxu0 0
        %3426 = vmatprep.subr.bf16.mxu0 0
        %3427 = vmatpush1.bf16.msra.mxu0 0
        %3428 = vmatprep.subr.bf16.mxu0 0
        %3429 = vmatpush1.bf16.msra.mxu0 0
        %3430 = vmatprep.subr.bf16.mxu0 0
        %3431 = vmatpush1.bf16.msra.mxu0 0
        %3432 = vmatprep.subr.bf16.mxu0 0
        %3433 = vmatpush1.bf16.msra.mxu0 0
        %3434 = vmatprep.subr.bf16.mxu0 0
        %3435 = vmatpush1.bf16.msra.mxu0 0
        %3436 = vmatprep.subr.bf16.mxu0 0
        %3437 = vmatpush1.bf16.msra.mxu0 0
        %3438 = vmatprep.subr.bf16.mxu0 0
        %3439 = vmatpush1.bf16.msra.mxu0 0
        %3440 = vmatprep.subr.bf16.mxu0 0
        %3441 = vmatpush1.bf16.msra.mxu0 0
        %3442 = vmatprep.subr.bf16.mxu0 0
        %3443 = vmatpush1.bf16.msra.mxu0 0
        %3444 = vmatprep.subr.bf16.mxu0 0
        %3445 = vmatpush1.bf16.msra.mxu0 0
        %3446 = vmatprep.subr.bf16.mxu0 0
        %3447 = vmatpush1.bf16.msra.mxu0 0
        %3448 = vmatprep.mubr.bf16.mxu0 0
        %3449 = vmatmul.mubr.bf16.gmra.mrb[0].mxu0 %v3405
        %v3450 = vpop.f32.mrb[0].mxu0
        %v3451 = vadd.f32 0.0, %v3450
        %v3452 = vpop.f32.mrb[0].mxu0
        %v3453 = vadd.f32 0.0, %v3452
        %v3454 = vpop.f32.mrb[0].mxu0
        %v3455 = vadd.f32 0.0, %v3454
        %v3456 = vpop.f32.mrb[0].mxu0
        %v3457 = vadd.f32 0.0, %v3456
        %3458 = vmatprep.mubr.bf16.mxu0 0
        %3459 = vmatmul.mubr.bf16.gmra.mrb[0].mxu0 %v3408
        %v3460 = vpop.f32.mrb[0].mxu0
        %v3461 = vadd.f32 0.0, %v3460
        %v3462 = vpop.f32.mrb[0].mxu0
        %v3463 = vadd.f32 0.0, %v3462
        %v3464 = vpop.f32.mrb[0].mxu0
        %v3465 = vadd.f32 0.0, %v3464
        %v3466 = vpop.f32.mrb[0].mxu0
        %v3467 = vadd.f32 0.0, %v3466
        %3468 = vmatprep.mubr.bf16.mxu0 0
        %3469 = vmatmul.mubr.bf16.gmra.mrb[0].mxu0 %v3411
        %v3470 = vpop.f32.mrb[0].mxu0
        %v3471 = vadd.f32 0.0, %v3470
        %v3472 = vpop.f32.mrb[0].mxu0
        %v3473 = vadd.f32 0.0, %v3472
        %v3474 = vpop.f32.mrb[0].mxu0
        %v3475 = vadd.f32 0.0, %v3474
        %v3476 = vpop.f32.mrb[0].mxu0
        %v3477 = vadd.f32 0.0, %v3476
        %3478 = vmatprep.mubr.bf16.mxu0 0
        %3479 = vmatmul.mubr.bf16.gmra.mrb[0].mxu0 %v3414
        %v3480 = vpop.f32.mrb[0].mxu0
        %v3481 = vadd.f32 0.0, %v3480
        %v3482 = vpop.f32.mrb[0].mxu0
        %v3483 = vadd.f32 0.0, %v3482
        %v3484 = vpop.f32.mrb[0].mxu0
        %v3485 = vadd.f32 0.0, %v3484
        %v3486 = vpop.f32.mrb[0].mxu0
        %v3487 = vadd.f32 0.0, %v3486
        %3488 = vdwg.mxu0
        %3489 = vmatprep.subr.bf16.mxu0 %v3323
        %3490 = vmatpush1.bf16.msra.mxu0 %v3322
        %3491 = vmatprep.subr.bf16.mxu0 %v3339
        %3492 = vmatpush1.bf16.msra.mxu0 %v3338
        %3493 = vmatprep.subr.bf16.mxu0 %v3355
        %3494 = vmatpush1.bf16.msra.mxu0 %v3354
        %3495 = vmatprep.subr.bf16.mxu0 %v3371
        %3496 = vmatpush1.bf16.msra.mxu0 %v3370
        %3497 = vmatprep.subr.bf16.mxu0 0
        %3498 = vmatpush1.bf16.msra.mxu0 0
        %3499 = vmatprep.subr.bf16.mxu0 0
        %3500 = vmatpush1.bf16.msra.mxu0 0
        %3501 = vmatprep.subr.bf16.mxu0 0
        %3502 = vmatpush1.bf16.msra.mxu0 0
        %3503 = vmatprep.subr.bf16.mxu0 0
        %3504 = vmatpush1.bf16.msra.mxu0 0
        %3505 = vmatprep.subr.bf16.mxu0 0
        %3506 = vmatpush1.bf16.msra.mxu0 0
        %3507 = vmatprep.subr.bf16.mxu0 0
        %3508 = vmatpush1.bf16.msra.mxu0 0
        %3509 = vmatprep.subr.bf16.mxu0 0
        %3510 = vmatpush1.bf16.msra.mxu0 0
        %3511 = vmatprep.subr.bf16.mxu0 0
        %3512 = vmatpush1.bf16.msra.mxu0 0
        %3513 = vmatprep.subr.bf16.mxu0 0
        %3514 = vmatpush1.bf16.msra.mxu0 0
        %3515 = vmatprep.subr.bf16.mxu0 0
        %3516 = vmatpush1.bf16.msra.mxu0 0
        %3517 = vmatprep.subr.bf16.mxu0 0
        %3518 = vmatpush1.bf16.msra.mxu0 0
        %3519 = vmatprep.subr.bf16.mxu0 0
        %3520 = vmatpush1.bf16.msra.mxu0 0
        %3521 = vmatprep.mubr.bf16.mxu0 0
        %3522 = vmatmul.mubr.bf16.gmra.mrb[0].mxu0 %v3405
        %v3523 = vpop.f32.mrb[0].mxu0
        %v3524 = vadd.f32 0.0, %v3523
        %v3525 = vpop.f32.mrb[0].mxu0
        %v3526 = vadd.f32 0.0, %v3525
        %v3527 = vpop.f32.mrb[0].mxu0
        %v3528 = vadd.f32 0.0, %v3527
        %v3529 = vpop.f32.mrb[0].mxu0
        %v3530 = vadd.f32 0.0, %v3529
        %3531 = vmatprep.mubr.bf16.mxu0 0
        %3532 = vmatmul.mubr.bf16.gmra.mrb[0].mxu0 %v3408
        %v3533 = vpop.f32.mrb[0].mxu0
        %v3534 = vadd.f32 0.0, %v3533
        %v3535 = vpop.f32.mrb[0].mxu0
        %v3536 = vadd.f32 0.0, %v3535
        %v3537 = vpop.f32.mrb[0].mxu0
        %v3538 = vadd.f32 0.0, %v3537
        %v3539 = vpop.f32.mrb[0].mxu0
        %v3540 = vadd.f32 0.0, %v3539
        %3541 = vmatprep.mubr.bf16.mxu0 0
        %3542 = vmatmul.mubr.bf16.gmra.mrb[0].mxu0 %v3411
        %v3543 = vpop.f32.mrb[0].mxu0
        %v3544 = vadd.f32 0.0, %v3543
        %v3545 = vpop.f32.mrb[0].mxu0
        %v3546 = vadd.f32 0.0, %v3545
        %v3547 = vpop.f32.mrb[0].mxu0
        %v3548 = vadd.f32 0.0, %v3547
        %v3549 = vpop.f32.mrb[0].mxu0
        %v3550 = vadd.f32 0.0, %v3549
        %3551 = vmatprep.mubr.bf16.mxu0 0
        %3552 = vmatmul.mubr.bf16.gmra.mrb[0].mxu0 %v3414
        %v3553 = vpop.f32.mrb[0].mxu0
        %v3554 = vadd.f32 0.0, %v3553
        %v3555 = vpop.f32.mrb[0].mxu0
        %v3556 = vadd.f32 0.0, %v3555
        %v3557 = vpop.f32.mrb[0].mxu0
        %v3558 = vadd.f32 0.0, %v3557
        %v3559 = vpop.f32.mrb[0].mxu0
        %v3560 = vadd.f32 0.0, %v3559
        %3561 = vdwg.mxu0
        %3562 = vmatprep.subr.bf16.mxu0 %v3325
        %3563 = vmatpush1.bf16.msra.mxu0 %v3324
        %3564 = vmatprep.subr.bf16.mxu0 %v3341
        %3565 = vmatpush1.bf16.msra.mxu0 %v3340
        %3566 = vmatprep.subr.bf16.mxu0 %v3357
        %3567 = vmatpush1.bf16.msra.mxu0 %v3356
        %3568 = vmatprep.subr.bf16.mxu0 %v3373
        %3569 = vmatpush1.bf16.msra.mxu0 %v3372
        %3570 = vmatprep.subr.bf16.mxu0 0
        %3571 = vmatpush1.bf16.msra.mxu0 0
        %3572 = vmatprep.subr.bf16.mxu0 0
        %3573 = vmatpush1.bf16.msra.mxu0 0
        %3574 = vmatprep.subr.bf16.mxu0 0
        %3575 = vmatpush1.bf16.msra.mxu0 0
        %3576 = vmatprep.subr.bf16.mxu0 0
        %3577 = vmatpush1.bf16.msra.mxu0 0
        %3578 = vmatprep.subr.bf16.mxu0 0
        %3579 = vmatpush1.bf16.msra.mxu0 0
        %3580 = vmatprep.subr.bf16.mxu0 0
        %3581 = vmatpush1.bf16.msra.mxu0 0
        %3582 = vmatprep.subr.bf16.mxu0 0
        %3583 = vmatpush1.bf16.msra.mxu0 0
        %3584 = vmatprep.subr.bf16.mxu0 0
        %3585 = vmatpush1.bf16.msra.mxu0 0
        %3586 = vmatprep.subr.bf16.mxu0 0
        %3587 = vmatpush1.bf16.msra.mxu0 0
        %3588 = vmatprep.subr.bf16.mxu0 0
        %3589 = vmatpush1.bf16.msra.mxu0 0
        %3590 = vmatprep.subr.bf16.mxu0 0
        %3591 = vmatpush1.bf16.msra.mxu0 0
        %3592 = vmatprep.subr.bf16.mxu0 0
        %3593 = vmatpush1.bf16.msra.mxu0 0
        %3594 = vmatprep.mubr.bf16.mxu0 0
        %3595 = vmatmul.mubr.bf16.gmra.mrb[0].mxu0 %v3405
        %v3596 = vpop.f32.mrb[0].mxu0
        %v3597 = vadd.f32 0.0, %v3596
        %v3598 = vpop.f32.mrb[0].mxu0
        %v3599 = vadd.f32 0.0, %v3598
        %v3600 = vpop.f32.mrb[0].mxu0
        %v3601 = vadd.f32 0.0, %v3600
        %v3602 = vpop.f32.mrb[0].mxu0
        %v3603 = vadd.f32 0.0, %v3602
        %3604 = vmatprep.mubr.bf16.mxu0 0
        %3605 = vmatmul.mubr.bf16.gmra.mrb[0].mxu0 %v3408
        %v3606 = vpop.f32.mrb[0].mxu0
        %v3607 = vadd.f32 0.0, %v3606
        %v3608 = vpop.f32.mrb[0].mxu0
        %v3609 = vadd.f32 0.0, %v3608
        %v3610 = vpop.f32.mrb[0].mxu0
        %v3611 = vadd.f32 0.0, %v3610
        %v3612 = vpop.f32.mrb[0].mxu0
        %v3613 = vadd.f32 0.0, %v3612
        %3614 = vmatprep.mubr.bf16.mxu0 0
        %3615 = vmatmul.mubr.bf16.gmra.mrb[0].mxu0 %v3411
        %v3616 = vpop.f32.mrb[0].mxu0
        %v3617 = vadd.f32 0.0, %v3616
        %v3618 = vpop.f32.mrb[0].mxu0
        %v3619 = vadd.f32 0.0, %v3618
        %v3620 = vpop.f32.mrb[0].mxu0
        %v3621 = vadd.f32 0.0, %v3620
        %v3622 = vpop.f32.mrb[0].mxu0
        %v3623 = vadd.f32 0.0, %v3622
        %3624 = vmatprep.mubr.bf16.mxu0 0
        %3625 = vmatmul.mubr.bf16.gmra.mrb[0].mxu0 %v3414
        %v3626 = vpop.f32.mrb[0].mxu0
        %v3627 = vadd.f32 0.0, %v3626
        %v3628 = vpop.f32.mrb[0].mxu0
        %v3629 = vadd.f32 0.0, %v3628
        %v3630 = vpop.f32.mrb[0].mxu0
        %v3631 = vadd.f32 0.0, %v3630
        %v3632 = vpop.f32.mrb[0].mxu0
        %v3633 = vadd.f32 0.0, %v3632
        %3634 = vdwg.mxu0
        %3635 = vmatprep.subr.bf16.mxu0 %v3327
        %3636 = vmatpush1.bf16.msra.mxu0 %v3326
        %3637 = vmatprep.subr.bf16.mxu0 %v3343
        %3638 = vmatpush1.bf16.msra.mxu0 %v3342
        %3639 = vmatprep.subr.bf16.mxu0 %v3359
        %3640 = vmatpush1.bf16.msra.mxu0 %v3358
        %3641 = vmatprep.subr.bf16.mxu0 %v3375
        %3642 = vmatpush1.bf16.msra.mxu0 %v3374
        %3643 = vmatprep.subr.bf16.mxu0 0
        %3644 = vmatpush1.bf16.msra.mxu0 0
        %3645 = vmatprep.subr.bf16.mxu0 0
        %3646 = vmatpush1.bf16.msra.mxu0 0
        %3647 = vmatprep.subr.bf16.mxu0 0
        %3648 = vmatpush1.bf16.msra.mxu0 0
        %3649 = vmatprep.subr.bf16.mxu0 0
        %3650 = vmatpush1.bf16.msra.mxu0 0
        %3651 = vmatprep.subr.bf16.mxu0 0
        %3652 = vmatpush1.bf16.msra.mxu0 0
        %3653 = vmatprep.subr.bf16.mxu0 0
        %3654 = vmatpush1.bf16.msra.mxu0 0
        %3655 = vmatprep.subr.bf16.mxu0 0
        %3656 = vmatpush1.bf16.msra.mxu0 0
        %3657 = vmatprep.subr.bf16.mxu0 0
        %3658 = vmatpush1.bf16.msra.mxu0 0
        %3659 = vmatprep.subr.bf16.mxu0 0
        %3660 = vmatpush1.bf16.msra.mxu0 0
        %3661 = vmatprep.subr.bf16.mxu0 0
        %3662 = vmatpush1.bf16.msra.mxu0 0
        %3663 = vmatprep.subr.bf16.mxu0 0
        %3664 = vmatpush1.bf16.msra.mxu0 0
        %3665 = vmatprep.subr.bf16.mxu0 0
        %3666 = vmatpush1.bf16.msra.mxu0 0
        %3667 = vmatprep.mubr.bf16.mxu0 0
        %3668 = vmatmul.mubr.bf16.gmra.mrb[0].mxu0 %v3405
        %v3669 = vpop.f32.mrb[0].mxu0
        %v3670 = vadd.f32 0.0, %v3669
        %v3671 = vpop.f32.mrb[0].mxu0
        %v3672 = vadd.f32 0.0, %v3671
        %v3673 = vpop.f32.mrb[0].mxu0
        %v3674 = vadd.f32 0.0, %v3673
        %v3675 = vpop.f32.mrb[0].mxu0
        %v3676 = vadd.f32 0.0, %v3675
        %3677 = vmatprep.mubr.bf16.mxu0 0
        %3678 = vmatmul.mubr.bf16.gmra.mrb[0].mxu0 %v3408
        %v3679 = vpop.f32.mrb[0].mxu0
        %v3680 = vadd.f32 0.0, %v3679
        %v3681 = vpop.f32.mrb[0].mxu0
        %v3682 = vadd.f32 0.0, %v3681
        %v3683 = vpop.f32.mrb[0].mxu0
        %v3684 = vadd.f32 0.0, %v3683
        %v3685 = vpop.f32.mrb[0].mxu0
        %v3686 = vadd.f32 0.0, %v3685
        %3687 = vmatprep.mubr.bf16.mxu0 0
        %3688 = vmatmul.mubr.bf16.gmra.mrb[0].mxu0 %v3411
        %v3689 = vpop.f32.mrb[0].mxu0
        %v3690 = vadd.f32 0.0, %v3689
        %v3691 = vpop.f32.mrb[0].mxu0
        %v3692 = vadd.f32 0.0, %v3691
        %v3693 = vpop.f32.mrb[0].mxu0
        %v3694 = vadd.f32 0.0, %v3693
        %v3695 = vpop.f32.mrb[0].mxu0
        %v3696 = vadd.f32 0.0, %v3695
        %3697 = vmatprep.mubr.bf16.mxu0 0
        %3698 = vmatmul.mubr.bf16.gmra.mrb[0].mxu0 %v3414
        %v3699 = vpop.f32.mrb[0].mxu0
        %v3700 = vadd.f32 0.0, %v3699
        %v3701 = vpop.f32.mrb[0].mxu0
        %v3702 = vadd.f32 0.0, %v3701
        %v3703 = vpop.f32.mrb[0].mxu0
        %v3704 = vadd.f32 0.0, %v3703
        %v3705 = vpop.f32.mrb[0].mxu0
        %v3706 = vadd.f32 0.0, %v3705
        %3707 = vdwg.mxu0
        %3708 = vmatprep.subr.bf16.mxu0 %v3329
        %3709 = vmatpush1.bf16.msra.mxu0 %v3328
        %3710 = vmatprep.subr.bf16.mxu0 %v3345
        %3711 = vmatpush1.bf16.msra.mxu0 %v3344
        %3712 = vmatprep.subr.bf16.mxu0 %v3361
        %3713 = vmatpush1.bf16.msra.mxu0 %v3360
        %3714 = vmatprep.subr.bf16.mxu0 %v3377
        %3715 = vmatpush1.bf16.msra.mxu0 %v3376
        %3716 = vmatprep.subr.bf16.mxu0 0
        %3717 = vmatpush1.bf16.msra.mxu0 0
        %3718 = vmatprep.subr.bf16.mxu0 0
        %3719 = vmatpush1.bf16.msra.mxu0 0
        %3720 = vmatprep.subr.bf16.mxu0 0
        %3721 = vmatpush1.bf16.msra.mxu0 0
        %3722 = vmatprep.subr.bf16.mxu0 0
        %3723 = vmatpush1.bf16.msra.mxu0 0
        %3724 = vmatprep.subr.bf16.mxu0 0
        %3725 = vmatpush1.bf16.msra.mxu0 0
        %3726 = vmatprep.subr.bf16.mxu0 0
        %3727 = vmatpush1.bf16.msra.mxu0 0
        %3728 = vmatprep.subr.bf16.mxu0 0
        %3729 = vmatpush1.bf16.msra.mxu0 0
        %3730 = vmatprep.subr.bf16.mxu0 0
        %3731 = vmatpush1.bf16.msra.mxu0 0
        %3732 = vmatprep.subr.bf16.mxu0 0
        %3733 = vmatpush1.bf16.msra.mxu0 0
        %3734 = vmatprep.subr.bf16.mxu0 0
        %3735 = vmatpush1.bf16.msra.mxu0 0
        %3736 = vmatprep.subr.bf16.mxu0 0
        %3737 = vmatpush1.bf16.msra.mxu0 0
        %3738 = vmatprep.subr.bf16.mxu0 0
        %3739 = vmatpush1.bf16.msra.mxu0 0
        %3740 = vmatprep.mubr.bf16.mxu0 0
        %3741 = vmatmul.mubr.bf16.gmra.mrb[0].mxu0 %v3405
        %v3742 = vpop.f32.mrb[0].mxu0
        %v3743 = vadd.f32 0.0, %v3742
        %v3744 = vpop.f32.mrb[0].mxu0
        %v3745 = vadd.f32 0.0, %v3744
        %v3746 = vpop.f32.mrb[0].mxu0
        %v3747 = vadd.f32 0.0, %v3746
        %v3748 = vpop.f32.mrb[0].mxu0
        %v3749 = vadd.f32 0.0, %v3748
        %3750 = vmatprep.mubr.bf16.mxu0 0
        %3751 = vmatmul.mubr.bf16.gmra.mrb[0].mxu0 %v3408
        %v3752 = vpop.f32.mrb[0].mxu0
        %v3753 = vadd.f32 0.0, %v3752
        %v3754 = vpop.f32.mrb[0].mxu0
        %v3755 = vadd.f32 0.0, %v3754
        %v3756 = vpop.f32.mrb[0].mxu0
        %v3757 = vadd.f32 0.0, %v3756
        %v3758 = vpop.f32.mrb[0].mxu0
        %v3759 = vadd.f32 0.0, %v3758
        %3760 = vmatprep.mubr.bf16.mxu0 0
        %3761 = vmatmul.mubr.bf16.gmra.mrb[0].mxu0 %v3411
        %v3762 = vpop.f32.mrb[0].mxu0
        %v3763 = vadd.f32 0.0, %v3762
        %v3764 = vpop.f32.mrb[0].mxu0
        %v3765 = vadd.f32 0.0, %v3764
        %v3766 = vpop.f32.mrb[0].mxu0
        %v3767 = vadd.f32 0.0, %v3766
        %v3768 = vpop.f32.mrb[0].mxu0
        %v3769 = vadd.f32 0.0, %v3768
        %3770 = vmatprep.mubr.bf16.mxu0 0
        %3771 = vmatmul.mubr.bf16.gmra.mrb[0].mxu0 %v3414
        %v3772 = vpop.f32.mrb[0].mxu0
        %v3773 = vadd.f32 0.0, %v3772
        %v3774 = vpop.f32.mrb[0].mxu0
        %v3775 = vadd.f32 0.0, %v3774
        %v3776 = vpop.f32.mrb[0].mxu0
        %v3777 = vadd.f32 0.0, %v3776
        %v3778 = vpop.f32.mrb[0].mxu0
        %v3779 = vadd.f32 0.0, %v3778
        %3780 = vdwg.mxu0
        %3781 = vmatprep.subr.bf16.mxu0 %v3331
        %3782 = vmatpush1.bf16.msra.mxu0 %v3330
        %3783 = vmatprep.subr.bf16.mxu0 %v3347
        %3784 = vmatpush1.bf16.msra.mxu0 %v3346
        %3785 = vmatprep.subr.bf16.mxu0 %v3363
        %3786 = vmatpush1.bf16.msra.mxu0 %v3362
        %3787 = vmatprep.subr.bf16.mxu0 %v3379
        %3788 = vmatpush1.bf16.msra.mxu0 %v3378
        %3789 = vmatprep.subr.bf16.mxu0 0
        %3790 = vmatpush1.bf16.msra.mxu0 0
        %3791 = vmatprep.subr.bf16.mxu0 0
        %3792 = vmatpush1.bf16.msra.mxu0 0
        %3793 = vmatprep.subr.bf16.mxu0 0
        %3794 = vmatpush1.bf16.msra.mxu0 0
        %3795 = vmatprep.subr.bf16.mxu0 0
        %3796 = vmatpush1.bf16.msra.mxu0 0
        %3797 = vmatprep.subr.bf16.mxu0 0
        %3798 = vmatpush1.bf16.msra.mxu0 0
        %3799 = vmatprep.subr.bf16.mxu0 0
        %3800 = vmatpush1.bf16.msra.mxu0 0
        %3801 = vmatprep.subr.bf16.mxu0 0
        %3802 = vmatpush1.bf16.msra.mxu0 0
        %3803 = vmatprep.subr.bf16.mxu0 0
        %3804 = vmatpush1.bf16.msra.mxu0 0
        %3805 = vmatprep.subr.bf16.mxu0 0
        %3806 = vmatpush1.bf16.msra.mxu0 0
        %3807 = vmatprep.subr.bf16.mxu0 0
        %3808 = vmatpush1.bf16.msra.mxu0 0
        %3809 = vmatprep.subr.bf16.mxu0 0
        %3810 = vmatpush1.bf16.msra.mxu0 0
        %3811 = vmatprep.subr.bf16.mxu0 0
        %3812 = vmatpush1.bf16.msra.mxu0 0
        %3813 = vmatprep.mubr.bf16.mxu0 0
        %3814 = vmatmul.mubr.bf16.gmra.mrb[0].mxu0 %v3405
        %v3815 = vpop.f32.mrb[0].mxu0
        %v3816 = vadd.f32 0.0, %v3815
        %v3817 = vpop.f32.mrb[0].mxu0
        %v3818 = vadd.f32 0.0, %v3817
        %v3819 = vpop.f32.mrb[0].mxu0
        %v3820 = vadd.f32 0.0, %v3819
        %v3821 = vpop.f32.mrb[0].mxu0
        %v3822 = vadd.f32 0.0, %v3821
        %3823 = vmatprep.mubr.bf16.mxu0 0
        %3824 = vmatmul.mubr.bf16.gmra.mrb[0].mxu0 %v3408
        %v3825 = vpop.f32.mrb[0].mxu0
        %v3826 = vadd.f32 0.0, %v3825
        %v3827 = vpop.f32.mrb[0].mxu0
        %v3828 = vadd.f32 0.0, %v3827
        %v3829 = vpop.f32.mrb[0].mxu0
        %v3830 = vadd.f32 0.0, %v3829
        %v3831 = vpop.f32.mrb[0].mxu0
        %v3832 = vadd.f32 0.0, %v3831
        %3833 = vmatprep.mubr.bf16.mxu0 0
        %3834 = vmatmul.mubr.bf16.gmra.mrb[0].mxu0 %v3411
        %v3835 = vpop.f32.mrb[0].mxu0
        %v3836 = vadd.f32 0.0, %v3835
        %v3837 = vpop.f32.mrb[0].mxu0
        %v3838 = vadd.f32 0.0, %v3837
        %v3839 = vpop.f32.mrb[0].mxu0
        %v3840 = vadd.f32 0.0, %v3839
        %v3841 = vpop.f32.mrb[0].mxu0
        %v3842 = vadd.f32 0.0, %v3841
        %3843 = vmatprep.mubr.bf16.mxu0 0
        %3844 = vmatmul.mubr.bf16.gmra.mrb[0].mxu0 %v3414
        %v3845 = vpop.f32.mrb[0].mxu0
        %v3846 = vadd.f32 0.0, %v3845
        %v3847 = vpop.f32.mrb[0].mxu0
        %v3848 = vadd.f32 0.0, %v3847
        %v3849 = vpop.f32.mrb[0].mxu0
        %v3850 = vadd.f32 0.0, %v3849
        %v3851 = vpop.f32.mrb[0].mxu0
        %v3852 = vadd.f32 0.0, %v3851
        %3853 = vdwg.mxu0
        %3854 = vmatprep.subr.bf16.mxu0 %v3333
        %3855 = vmatpush1.bf16.msra.mxu0 %v3332
        %3856 = vmatprep.subr.bf16.mxu0 %v3349
        %3857 = vmatpush1.bf16.msra.mxu0 %v3348
        %3858 = vmatprep.subr.bf16.mxu0 %v3365
        %3859 = vmatpush1.bf16.msra.mxu0 %v3364
        %3860 = vmatprep.subr.bf16.mxu0 %v3381
        %3861 = vmatpush1.bf16.msra.mxu0 %v3380
        %3862 = vmatprep.subr.bf16.mxu0 0
        %3863 = vmatpush1.bf16.msra.mxu0 0
        %3864 = vmatprep.subr.bf16.mxu0 0
        %3865 = vmatpush1.bf16.msra.mxu0 0
        %3866 = vmatprep.subr.bf16.mxu0 0
        %3867 = vmatpush1.bf16.msra.mxu0 0
        %3868 = vmatprep.subr.bf16.mxu0 0
        %3869 = vmatpush1.bf16.msra.mxu0 0
        %3870 = vmatprep.subr.bf16.mxu0 0
        %3871 = vmatpush1.bf16.msra.mxu0 0
        %3872 = vmatprep.subr.bf16.mxu0 0
        %3873 = vmatpush1.bf16.msra.mxu0 0
        %3874 = vmatprep.subr.bf16.mxu0 0
        %3875 = vmatpush1.bf16.msra.mxu0 0
        %3876 = vmatprep.subr.bf16.mxu0 0
        %3877 = vmatpush1.bf16.msra.mxu0 0
        %3878 = vmatprep.subr.bf16.mxu0 0
        %3879 = vmatpush1.bf16.msra.mxu0 0
        %3880 = vmatprep.subr.bf16.mxu0 0
        %3881 = vmatpush1.bf16.msra.mxu0 0
        %3882 = vmatprep.subr.bf16.mxu0 0
        %3883 = vmatpush1.bf16.msra.mxu0 0
        %3884 = vmatprep.subr.bf16.mxu0 0
        %3885 = vmatpush1.bf16.msra.mxu0 0
        %3886 = vmatprep.mubr.bf16.mxu0 0
        %3887 = vmatmul.mubr.bf16.gmra.mrb[0].mxu0 %v3405
        %v3888 = vpop.f32.mrb[0].mxu0
        %v3889 = vadd.f32 0.0, %v3888
        %v3890 = vpop.f32.mrb[0].mxu0
        %v3891 = vadd.f32 0.0, %v3890
        %v3892 = vpop.f32.mrb[0].mxu0
        %v3893 = vadd.f32 0.0, %v3892
        %v3894 = vpop.f32.mrb[0].mxu0
        %v3895 = vadd.f32 0.0, %v3894
        %3896 = vmatprep.mubr.bf16.mxu0 0
        %3897 = vmatmul.mubr.bf16.gmra.mrb[0].mxu0 %v3408
        %v3898 = vpop.f32.mrb[0].mxu0
        %v3899 = vadd.f32 0.0, %v3898
        %v3900 = vpop.f32.mrb[0].mxu0
        %v3901 = vadd.f32 0.0, %v3900
        %v3902 = vpop.f32.mrb[0].mxu0
        %v3903 = vadd.f32 0.0, %v3902
        %v3904 = vpop.f32.mrb[0].mxu0
        %v3905 = vadd.f32 0.0, %v3904
        %3906 = vmatprep.mubr.bf16.mxu0 0
        %3907 = vmatmul.mubr.bf16.gmra.mrb[0].mxu0 %v3411
        %v3908 = vpop.f32.mrb[0].mxu0
        %v3909 = vadd.f32 0.0, %v3908
        %v3910 = vpop.f32.mrb[0].mxu0
        %v3911 = vadd.f32 0.0, %v3910
        %v3912 = vpop.f32.mrb[0].mxu0
        %v3913 = vadd.f32 0.0, %v3912
        %v3914 = vpop.f32.mrb[0].mxu0
        %v3915 = vadd.f32 0.0, %v3914
        %3916 = vmatprep.mubr.bf16.mxu0 0
        %3917 = vmatmul.mubr.bf16.gmra.mrb[0].mxu0 %v3414
        %v3918 = vpop.f32.mrb[0].mxu0
        %v3919 = vadd.f32 0.0, %v3918
        %v3920 = vpop.f32.mrb[0].mxu0
        %v3921 = vadd.f32 0.0, %v3920
        %v3922 = vpop.f32.mrb[0].mxu0
        %v3923 = vadd.f32 0.0, %v3922
        %v3924 = vpop.f32.mrb[0].mxu0
        %v3925 = vadd.f32 0.0, %v3924
        %3926 = vdwg.mxu0
        %3927 = vmatprep.subr.bf16.mxu0 %v3335
        %3928 = vmatpush1.bf16.msra.mxu0 %v3334
        %3929 = vmatprep.subr.bf16.mxu0 %v3351
        %3930 = vmatpush1.bf16.msra.mxu0 %v3350
        %3931 = vmatprep.subr.bf16.mxu0 %v3367
        %3932 = vmatpush1.bf16.msra.mxu0 %v3366
        %3933 = vmatprep.subr.bf16.mxu0 %v3383
        %3934 = vmatpush1.bf16.msra.mxu0 %v3382
        %3935 = vmatprep.subr.bf16.mxu0 0
        %3936 = vmatpush1.bf16.msra.mxu0 0
        %3937 = vmatprep.subr.bf16.mxu0 0
        %3938 = vmatpush1.bf16.msra.mxu0 0
        %3939 = vmatprep.subr.bf16.mxu0 0
        %3940 = vmatpush1.bf16.msra.mxu0 0
        %3941 = vmatprep.subr.bf16.mxu0 0
        %3942 = vmatpush1.bf16.msra.mxu0 0
        %3943 = vmatprep.subr.bf16.mxu0 0
        %3944 = vmatpush1.bf16.msra.mxu0 0
        %3945 = vmatprep.subr.bf16.mxu0 0
        %3946 = vmatpush1.bf16.msra.mxu0 0
        %3947 = vmatprep.subr.bf16.mxu0 0
        %3948 = vmatpush1.bf16.msra.mxu0 0
        %3949 = vmatprep.subr.bf16.mxu0 0
        %3950 = vmatpush1.bf16.msra.mxu0 0
        %3951 = vmatprep.subr.bf16.mxu0 0
        %3952 = vmatpush1.bf16.msra.mxu0 0
        %3953 = vmatprep.subr.bf16.mxu0 0
        %3954 = vmatpush1.bf16.msra.mxu0 0
        %3955 = vmatprep.subr.bf16.mxu0 0
        %3956 = vmatpush1.bf16.msra.mxu0 0
        %3957 = vmatprep.subr.bf16.mxu0 0
        %3958 = vmatpush1.bf16.msra.mxu0 0
        %3959 = vmatprep.mubr.bf16.mxu0 0
        %3960 = vmatmul.mubr.bf16.gmra.mrb[0].mxu0 %v3405
        %v3961 = vpop.f32.mrb[0].mxu0
        %v3962 = vadd.f32 0.0, %v3961
        %v3963 = vpop.f32.mrb[0].mxu0
        %v3964 = vadd.f32 0.0, %v3963
        %v3965 = vpop.f32.mrb[0].mxu0
        %v3966 = vadd.f32 0.0, %v3965
        %v3967 = vpop.f32.mrb[0].mxu0
        %v3968 = vadd.f32 0.0, %v3967
        %3969 = vmatprep.mubr.bf16.mxu0 0
        %3970 = vmatmul.mubr.bf16.gmra.mrb[0].mxu0 %v3408
        %v3971 = vpop.f32.mrb[0].mxu0
        %v3972 = vadd.f32 0.0, %v3971
        %v3973 = vpop.f32.mrb[0].mxu0
        %v3974 = vadd.f32 0.0, %v3973
        %v3975 = vpop.f32.mrb[0].mxu0
        %v3976 = vadd.f32 0.0, %v3975
        %v3977 = vpop.f32.mrb[0].mxu0
        %v3978 = vadd.f32 0.0, %v3977
        %3979 = vmatprep.mubr.bf16.mxu0 0
        %3980 = vmatmul.mubr.bf16.gmra.mrb[0].mxu0 %v3411
        %v3981 = vpop.f32.mrb[0].mxu0
        %v3982 = vadd.f32 0.0, %v3981
        %v3983 = vpop.f32.mrb[0].mxu0
        %v3984 = vadd.f32 0.0, %v3983
        %v3985 = vpop.f32.mrb[0].mxu0
        %v3986 = vadd.f32 0.0, %v3985
        %v3987 = vpop.f32.mrb[0].mxu0
        %v3988 = vadd.f32 0.0, %v3987
        %3989 = vmatprep.mubr.bf16.mxu0 0
        %3990 = vmatmul.mubr.bf16.gmra.mrb[0].mxu0 %v3414
        %v3991 = vpop.f32.mrb[0].mxu0
        %v3992 = vadd.f32 0.0, %v3991
        %v3993 = vpop.f32.mrb[0].mxu0
        %v3994 = vadd.f32 0.0, %v3993
        %v3995 = vpop.f32.mrb[0].mxu0
        %v3996 = vadd.f32 0.0, %v3995
        %v3997 = vpop.f32.mrb[0].mxu0
        %v3998 = vadd.f32 0.0, %v3997
        %3999 = vdwg.mxu0
        %v4000 = vmax.f32 %v3451, 0.0
        %v4001 = vmax.f32 %v3453, 0.0
        %v4002 = vmax.f32 %v3524, 0.0
        %v4003 = vmax.f32 %v3526, 0.0
        %v4004 = vmax.f32 %v3597, 0.0
        %v4005 = vmax.f32 %v3599, 0.0
        %v4006 = vmax.f32 %v3670, 0.0
        %v4007 = vmax.f32 %v3672, 0.0
        %v4008 = vmax.f32 %v3743, 0.0
        %v4009 = vmax.f32 %v3745, 0.0
        %v4010 = vmax.f32 %v3816, 0.0
        %v4011 = vmax.f32 %v3818, 0.0
        %v4012 = vmax.f32 %v3889, 0.0
        %v4013 = vmax.f32 %v3891, 0.0
        %v4014 = vmax.f32 %v3962, 0.0
        %v4015 = vmax.f32 %v3964, 0.0
        %v4016 = vmax.f32 %v3455, 0.0
        %v4017 = vmax.f32 %v3457, 0.0
        %v4018 = vmax.f32 %v3528, 0.0
        %v4019 = vmax.f32 %v3530, 0.0
        %v4020 = vmax.f32 %v3601, 0.0
        %v4021 = vmax.f32 %v3603, 0.0
        %v4022 = vmax.f32 %v3674, 0.0
        %v4023 = vmax.f32 %v3676, 0.0
        %v4024 = vmax.f32 %v3747, 0.0
        %v4025 = vmax.f32 %v3749, 0.0
        %v4026 = vmax.f32 %v3820, 0.0
        %v4027 = vmax.f32 %v3822, 0.0
        %v4028 = vmax.f32 %v3893, 0.0
        %v4029 = vmax.f32 %v3895, 0.0
        %v4030 = vmax.f32 %v3966, 0.0
        %v4031 = vmax.f32 %v3968, 0.0
        %v4032 = vmax.f32 %v3461, 0.0
        %v4033 = vmax.f32 %v3463, 0.0
        %v4034 = vmax.f32 %v3534, 0.0
        %v4035 = vmax.f32 %v3536, 0.0
        %v4036 = vmax.f32 %v3607, 0.0
        %v4037 = vmax.f32 %v3609, 0.0
        %v4038 = vmax.f32 %v3680, 0.0
        %v4039 = vmax.f32 %v3682, 0.0
        %v4040 = vmax.f32 %v3753, 0.0
        %v4041 = vmax.f32 %v3755, 0.0
        %v4042 = vmax.f32 %v3826, 0.0
        %v4043 = vmax.f32 %v3828, 0.0
        %v4044 = vmax.f32 %v3899, 0.0
        %v4045 = vmax.f32 %v3901, 0.0
        %v4046 = vmax.f32 %v3972, 0.0
        %v4047 = vmax.f32 %v3974, 0.0
        %v4048 = vmax.f32 %v3465, 0.0
        %v4049 = vmax.f32 %v3467, 0.0
        %v4050 = vmax.f32 %v3538, 0.0
        %v4051 = vmax.f32 %v3540, 0.0
        %v4052 = vmax.f32 %v3611, 0.0
        %v4053 = vmax.f32 %v3613, 0.0
        %v4054 = vmax.f32 %v3684, 0.0
        %v4055 = vmax.f32 %v3686, 0.0
        %v4056 = vmax.f32 %v3757, 0.0
        %v4057 = vmax.f32 %v3759, 0.0
        %v4058 = vmax.f32 %v3830, 0.0
        %v4059 = vmax.f32 %v3832, 0.0
        %v4060 = vmax.f32 %v3903, 0.0
        %v4061 = vmax.f32 %v3905, 0.0
        %v4062 = vmax.f32 %v3976, 0.0
        %v4063 = vmax.f32 %v3978, 0.0
        %v4064 = vmax.f32 %v3471, 0.0
        %v4065 = vmax.f32 %v3473, 0.0
        %v4066 = vmax.f32 %v3544, 0.0
        %v4067 = vmax.f32 %v3546, 0.0
        %v4068 = vmax.f32 %v3617, 0.0
        %v4069 = vmax.f32 %v3619, 0.0
        %v4070 = vmax.f32 %v3690, 0.0
        %v4071 = vmax.f32 %v3692, 0.0
        %v4072 = vmax.f32 %v3763, 0.0
        %v4073 = vmax.f32 %v3765, 0.0
        %v4074 = vmax.f32 %v3836, 0.0
        %v4075 = vmax.f32 %v3838, 0.0
        %v4076 = vmax.f32 %v3909, 0.0
        %v4077 = vmax.f32 %v3911, 0.0
        %v4078 = vmax.f32 %v3982, 0.0
        %v4079 = vmax.f32 %v3984, 0.0
        %v4080 = vmax.f32 %v3475, 0.0
        %v4081 = vmax.f32 %v3477, 0.0
        %v4082 = vmax.f32 %v3548, 0.0
        %v4083 = vmax.f32 %v3550, 0.0
        %v4084 = vmax.f32 %v3621, 0.0
        %v4085 = vmax.f32 %v3623, 0.0
        %v4086 = vmax.f32 %v3694, 0.0
        %v4087 = vmax.f32 %v3696, 0.0
        %v4088 = vmax.f32 %v3767, 0.0
        %v4089 = vmax.f32 %v3769, 0.0
        %v4090 = vmax.f32 %v3840, 0.0
        %v4091 = vmax.f32 %v3842, 0.0
        %v4092 = vmax.f32 %v3913, 0.0
        %v4093 = vmax.f32 %v3915, 0.0
        %v4094 = vmax.f32 %v3986, 0.0
        %v4095 = vmax.f32 %v3988, 0.0
        %v4096 = vmax.f32 %v3481, 0.0
        %v4097 = vmax.f32 %v3483, 0.0
        %v4098 = vmax.f32 %v3554, 0.0
        %v4099 = vmax.f32 %v3556, 0.0
        %v4100 = vmax.f32 %v3627, 0.0
        %v4101 = vmax.f32 %v3629, 0.0
        %v4102 = vmax.f32 %v3700, 0.0
        %v4103 = vmax.f32 %v3702, 0.0
        %v4104 = vmax.f32 %v3773, 0.0
        %v4105 = vmax.f32 %v3775, 0.0
        %v4106 = vmax.f32 %v3846, 0.0
        %v4107 = vmax.f32 %v3848, 0.0
        %v4108 = vmax.f32 %v3919, 0.0
        %v4109 = vmax.f32 %v3921, 0.0
        %v4110 = vmax.f32 %v3992, 0.0
        %v4111 = vmax.f32 %v3994, 0.0
        %v4112 = vmax.f32 %v3485, 0.0
        %v4113 = vmax.f32 %v3487, 0.0
        %v4114 = vmax.f32 %v3558, 0.0
        %v4115 = vmax.f32 %v3560, 0.0
        %v4116 = vmax.f32 %v3631, 0.0
        %v4117 = vmax.f32 %v3633, 0.0
        %v4118 = vmax.f32 %v3704, 0.0
        %v4119 = vmax.f32 %v3706, 0.0
        %v4120 = vmax.f32 %v3777, 0.0
        %v4121 = vmax.f32 %v3779, 0.0
        %v4122 = vmax.f32 %v3850, 0.0
        %v4123 = vmax.f32 %v3852, 0.0
        %v4124 = vmax.f32 %v3923, 0.0
        %v4125 = vmax.f32 %v3925, 0.0
        %v4126 = vmax.f32 %v3996, 0.0
        %v4127 = vmax.f32 %v3998, 0.0
        %v4128 = vld [vmem:[#allocation7] sm:$0xf]
        %v4129 = vld [vmem:[#allocation7 + $0x4] sm:$0xf]
        %v4130 = vld [vmem:[#allocation7 + $0x8] sm:$0xf]
        %v4131 = vld [vmem:[#allocation7 + $0xc] sm:$0xf]
        %v4132 = vld [vmem:[#allocation7 + $0x10] sm:$0xf]
        %v4133 = vld [vmem:[#allocation7 + $0x14] sm:$0xf]
        %v4134 = vld [vmem:[#allocation7 + $0x18] sm:$0xf]
        %v4135 = vld [vmem:[#allocation7 + $0x1c] sm:$0xf]
        %v4136 = vpack.c.bf16 %v4016, %v4000
        %v4137 = vpack.c.bf16 %v4017, %v4001
        %v4138 = vpack.c.bf16 %v4018, %v4002
        %v4139 = vpack.c.bf16 %v4019, %v4003
        %v4140 = vpack.c.bf16 %v4020, %v4004
        %v4141 = vpack.c.bf16 %v4021, %v4005
        %v4142 = vpack.c.bf16 %v4022, %v4006
        %v4143 = vpack.c.bf16 %v4023, %v4007
        %v4144 = vpack.c.bf16 %v4024, %v4008
        %v4145 = vpack.c.bf16 %v4025, %v4009
        %v4146 = vpack.c.bf16 %v4026, %v4010
        %v4147 = vpack.c.bf16 %v4027, %v4011
        %v4148 = vpack.c.bf16 %v4028, %v4012
        %v4149 = vpack.c.bf16 %v4029, %v4013
        %v4150 = vpack.c.bf16 %v4030, %v4014
        %v4151 = vpack.c.bf16 %v4031, %v4015
        %v4152 = vpack.c.bf16 %v4048, %v4032
        %v4153 = vpack.c.bf16 %v4049, %v4033
        %v4154 = vpack.c.bf16 %v4050, %v4034
        %v4155 = vpack.c.bf16 %v4051, %v4035
        %v4156 = vpack.c.bf16 %v4052, %v4036
        %v4157 = vpack.c.bf16 %v4053, %v4037
        %v4158 = vpack.c.bf16 %v4054, %v4038
        %v4159 = vpack.c.bf16 %v4055, %v4039
        %v4160 = vpack.c.bf16 %v4056, %v4040
        %v4161 = vpack.c.bf16 %v4057, %v4041
        %v4162 = vpack.c.bf16 %v4058, %v4042
        %v4163 = vpack.c.bf16 %v4059, %v4043
        %v4164 = vpack.c.bf16 %v4060, %v4044
        %v4165 = vpack.c.bf16 %v4061, %v4045
        %v4166 = vpack.c.bf16 %v4062, %v4046
        %v4167 = vpack.c.bf16 %v4063, %v4047
        %v4168 = vpack.c.bf16 %v4080, %v4064
        %v4169 = vpack.c.bf16 %v4081, %v4065
        %v4170 = vpack.c.bf16 %v4082, %v4066
        %v4171 = vpack.c.bf16 %v4083, %v4067
        %v4172 = vpack.c.bf16 %v4084, %v4068
        %v4173 = vpack.c.bf16 %v4085, %v4069
        %v4174 = vpack.c.bf16 %v4086, %v4070
        %v4175 = vpack.c.bf16 %v4087, %v4071
        %v4176 = vpack.c.bf16 %v4088, %v4072
        %v4177 = vpack.c.bf16 %v4089, %v4073
        %v4178 = vpack.c.bf16 %v4090, %v4074
        %v4179 = vpack.c.bf16 %v4091, %v4075
        %v4180 = vpack.c.bf16 %v4092, %v4076
        %v4181 = vpack.c.bf16 %v4093, %v4077
        %v4182 = vpack.c.bf16 %v4094, %v4078
        %v4183 = vpack.c.bf16 %v4095, %v4079
        %v4184 = vpack.c.bf16 %v4112, %v4096
        %v4185 = vpack.c.bf16 %v4113, %v4097
        %v4186 = vpack.c.bf16 %v4114, %v4098
        %v4187 = vpack.c.bf16 %v4115, %v4099
        %v4188 = vpack.c.bf16 %v4116, %v4100
        %v4189 = vpack.c.bf16 %v4117, %v4101
        %v4190 = vpack.c.bf16 %v4118, %v4102
        %v4191 = vpack.c.bf16 %v4119, %v4103
        %v4192 = vpack.c.bf16 %v4120, %v4104
        %v4193 = vpack.c.bf16 %v4121, %v4105
        %v4194 = vpack.c.bf16 %v4122, %v4106
        %v4195 = vpack.c.bf16 %v4123, %v4107
        %v4196 = vpack.c.bf16 %v4124, %v4108
        %v4197 = vpack.c.bf16 %v4125, %v4109
        %v4198 = vpack.c.bf16 %v4126, %v4110
        %v4199 = vpack.c.bf16 %v4127, %v4111
        %v4208 = vunpack.c.l.b16 %v4128
        %v4209 = vunpack.c.l.b16 %v4129
        %v4210 = vunpack.c.l.b16 %v4130
        %v4211 = vunpack.c.l.b16 %v4131
        %v4212 = vunpack.c.l.b16 %v4132
        %v4213 = vunpack.c.l.b16 %v4133
        %v4214 = vunpack.c.l.b16 %v4134
        %v4215 = vunpack.c.l.b16 %v4135
        %v4216 = vpack.c.b16 %v4209, %v4208
        %v4217 = vpack.c.b16 %v4211, %v4210
        %v4218 = vpack.c.b16 %v4213, %v4212
        %v4219 = vpack.c.b16 %v4215, %v4214
        %v4221 = vsel %vm1643, %v4216, 0
        %v4224 = vsel %vm1643, %v4217, 0
        %v4227 = vsel %vm1643, %v4218, 0
        %v4230 = vsel %vm1643, %v4219, 0
        %4232 = vmatprep.subr.bf16.mxu0 %v4137
        %4233 = vmatpush1.bf16.msra.mxu0 %v4136
        %4234 = vmatprep.subr.bf16.mxu0 %v4153
        %4235 = vmatpush1.bf16.msra.mxu0 %v4152
        %4236 = vmatprep.subr.bf16.mxu0 %v4169
        %4237 = vmatpush1.bf16.msra.mxu0 %v4168
        %4238 = vmatprep.subr.bf16.mxu0 %v4185
        %4239 = vmatpush1.bf16.msra.mxu0 %v4184
        %4240 = vmatprep.subr.bf16.mxu0 0
        %4241 = vmatpush1.bf16.msra.mxu0 0
        %4242 = vmatprep.subr.bf16.mxu0 0
        %4243 = vmatpush1.bf16.msra.mxu0 0
        %4244 = vmatprep.subr.bf16.mxu0 0
        %4245 = vmatpush1.bf16.msra.mxu0 0
        %4246 = vmatprep.subr.bf16.mxu0 0
        %4247 = vmatpush1.bf16.msra.mxu0 0
        %4248 = vmatprep.subr.bf16.mxu0 0
        %4249 = vmatpush1.bf16.msra.mxu0 0
        %4250 = vmatprep.subr.bf16.mxu0 0
        %4251 = vmatpush1.bf16.msra.mxu0 0
        %4252 = vmatprep.subr.bf16.mxu0 0
        %4253 = vmatpush1.bf16.msra.mxu0 0
        %4254 = vmatprep.subr.bf16.mxu0 0
        %4255 = vmatpush1.bf16.msra.mxu0 0
        %4256 = vmatprep.subr.bf16.mxu0 0
        %4257 = vmatpush1.bf16.msra.mxu0 0
        %4258 = vmatprep.subr.bf16.mxu0 0
        %4259 = vmatpush1.bf16.msra.mxu0 0
        %4260 = vmatprep.subr.bf16.mxu0 0
        %4261 = vmatpush1.bf16.msra.mxu0 0
        %4262 = vmatprep.subr.bf16.mxu0 0
        %4263 = vmatpush1.bf16.msra.mxu0 0
        %4264 = vmatprep.mubr.bf16.mxu0 0
        %4265 = vmatmul.mubr.bf16.gmra.mrb[0].mxu0 %v4221
        %v4266 = vpop.f32.mrb[0].mxu0
        %v4267 = vadd.f32 0.0, %v4266
        %v4268 = vpop.f32.mrb[0].mxu0
        %v4269 = vadd.f32 0.0, %v4268
        %v4270 = vpop.f32.mrb[0].mxu0
        %v4271 = vadd.f32 0.0, %v4270
        %v4272 = vpop.f32.mrb[0].mxu0
        %v4273 = vadd.f32 0.0, %v4272
        %4274 = vmatprep.mubr.bf16.mxu0 0
        %4275 = vmatmul.mubr.bf16.gmra.mrb[0].mxu0 %v4224
        %v4276 = vpop.f32.mrb[0].mxu0
        %v4277 = vadd.f32 0.0, %v4276
        %v4278 = vpop.f32.mrb[0].mxu0
        %v4279 = vadd.f32 0.0, %v4278
        %v4280 = vpop.f32.mrb[0].mxu0
        %v4281 = vadd.f32 0.0, %v4280
        %v4282 = vpop.f32.mrb[0].mxu0
        %v4283 = vadd.f32 0.0, %v4282
        %4284 = vmatprep.mubr.bf16.mxu0 0
        %4285 = vmatmul.mubr.bf16.gmra.mrb[0].mxu0 %v4227
        %v4286 = vpop.f32.mrb[0].mxu0
        %v4287 = vadd.f32 0.0, %v4286
        %v4288 = vpop.f32.mrb[0].mxu0
        %v4289 = vadd.f32 0.0, %v4288
        %v4290 = vpop.f32.mrb[0].mxu0
        %v4291 = vadd.f32 0.0, %v4290
        %v4292 = vpop.f32.mrb[0].mxu0
        %v4293 = vadd.f32 0.0, %v4292
        %4294 = vmatprep.mubr.bf16.mxu0 0
        %4295 = vmatmul.mubr.bf16.gmra.mrb[0].mxu0 %v4230
        %v4296 = vpop.f32.mrb[0].mxu0
        %v4297 = vadd.f32 0.0, %v4296
        %v4298 = vpop.f32.mrb[0].mxu0
        %v4299 = vadd.f32 0.0, %v4298
        %v4300 = vpop.f32.mrb[0].mxu0
        %v4301 = vadd.f32 0.0, %v4300
        %v4302 = vpop.f32.mrb[0].mxu0
        %v4303 = vadd.f32 0.0, %v4302
        %4304 = vdwg.mxu0
        %4305 = vmatprep.subr.bf16.mxu0 %v4139
        %4306 = vmatpush1.bf16.msra.mxu0 %v4138
        %4307 = vmatprep.subr.bf16.mxu0 %v4155
        %4308 = vmatpush1.bf16.msra.mxu0 %v4154
        %4309 = vmatprep.subr.bf16.mxu0 %v4171
        %4310 = vmatpush1.bf16.msra.mxu0 %v4170
        %4311 = vmatprep.subr.bf16.mxu0 %v4187
        %4312 = vmatpush1.bf16.msra.mxu0 %v4186
        %4313 = vmatprep.subr.bf16.mxu0 0
        %4314 = vmatpush1.bf16.msra.mxu0 0
        %4315 = vmatprep.subr.bf16.mxu0 0
        %4316 = vmatpush1.bf16.msra.mxu0 0
        %4317 = vmatprep.subr.bf16.mxu0 0
        %4318 = vmatpush1.bf16.msra.mxu0 0
        %4319 = vmatprep.subr.bf16.mxu0 0
        %4320 = vmatpush1.bf16.msra.mxu0 0
        %4321 = vmatprep.subr.bf16.mxu0 0
        %4322 = vmatpush1.bf16.msra.mxu0 0
        %4323 = vmatprep.subr.bf16.mxu0 0
        %4324 = vmatpush1.bf16.msra.mxu0 0
        %4325 = vmatprep.subr.bf16.mxu0 0
        %4326 = vmatpush1.bf16.msra.mxu0 0
        %4327 = vmatprep.subr.bf16.mxu0 0
        %4328 = vmatpush1.bf16.msra.mxu0 0
        %4329 = vmatprep.subr.bf16.mxu0 0
        %4330 = vmatpush1.bf16.msra.mxu0 0
        %4331 = vmatprep.subr.bf16.mxu0 0
        %4332 = vmatpush1.bf16.msra.mxu0 0
        %4333 = vmatprep.subr.bf16.mxu0 0
        %4334 = vmatpush1.bf16.msra.mxu0 0
        %4335 = vmatprep.subr.bf16.mxu0 0
        %4336 = vmatpush1.bf16.msra.mxu0 0
        %4337 = vmatprep.mubr.bf16.mxu0 0
        %4338 = vmatmul.mubr.bf16.gmra.mrb[0].mxu0 %v4221
        %v4339 = vpop.f32.mrb[0].mxu0
        %v4340 = vadd.f32 0.0, %v4339
        %v4341 = vpop.f32.mrb[0].mxu0
        %v4342 = vadd.f32 0.0, %v4341
        %v4343 = vpop.f32.mrb[0].mxu0
        %v4344 = vadd.f32 0.0, %v4343
        %v4345 = vpop.f32.mrb[0].mxu0
        %v4346 = vadd.f32 0.0, %v4345
        %4347 = vmatprep.mubr.bf16.mxu0 0
        %4348 = vmatmul.mubr.bf16.gmra.mrb[0].mxu0 %v4224
        %v4349 = vpop.f32.mrb[0].mxu0
        %v4350 = vadd.f32 0.0, %v4349
        %v4351 = vpop.f32.mrb[0].mxu0
        %v4352 = vadd.f32 0.0, %v4351
        %v4353 = vpop.f32.mrb[0].mxu0
        %v4354 = vadd.f32 0.0, %v4353
        %v4355 = vpop.f32.mrb[0].mxu0
        %v4356 = vadd.f32 0.0, %v4355
        %4357 = vmatprep.mubr.bf16.mxu0 0
        %4358 = vmatmul.mubr.bf16.gmra.mrb[0].mxu0 %v4227
        %v4359 = vpop.f32.mrb[0].mxu0
        %v4360 = vadd.f32 0.0, %v4359
        %v4361 = vpop.f32.mrb[0].mxu0
        %v4362 = vadd.f32 0.0, %v4361
        %v4363 = vpop.f32.mrb[0].mxu0
        %v4364 = vadd.f32 0.0, %v4363
        %v4365 = vpop.f32.mrb[0].mxu0
        %v4366 = vadd.f32 0.0, %v4365
        %4367 = vmatprep.mubr.bf16.mxu0 0
        %4368 = vmatmul.mubr.bf16.gmra.mrb[0].mxu0 %v4230
        %v4369 = vpop.f32.mrb[0].mxu0
        %v4370 = vadd.f32 0.0, %v4369
        %v4371 = vpop.f32.mrb[0].mxu0
        %v4372 = vadd.f32 0.0, %v4371
        %v4373 = vpop.f32.mrb[0].mxu0
        %v4374 = vadd.f32 0.0, %v4373
        %v4375 = vpop.f32.mrb[0].mxu0
        %v4376 = vadd.f32 0.0, %v4375
        %4377 = vdwg.mxu0
        %4378 = vmatprep.subr.bf16.mxu0 %v4141
        %4379 = vmatpush1.bf16.msra.mxu0 %v4140
        %4380 = vmatprep.subr.bf16.mxu0 %v4157
        %4381 = vmatpush1.bf16.msra.mxu0 %v4156
        %4382 = vmatprep.subr.bf16.mxu0 %v4173
        %4383 = vmatpush1.bf16.msra.mxu0 %v4172
        %4384 = vmatprep.subr.bf16.mxu0 %v4189
        %4385 = vmatpush1.bf16.msra.mxu0 %v4188
        %4386 = vmatprep.subr.bf16.mxu0 0
        %4387 = vmatpush1.bf16.msra.mxu0 0
        %4388 = vmatprep.subr.bf16.mxu0 0
        %4389 = vmatpush1.bf16.msra.mxu0 0
        %4390 = vmatprep.subr.bf16.mxu0 0
        %4391 = vmatpush1.bf16.msra.mxu0 0
        %4392 = vmatprep.subr.bf16.mxu0 0
        %4393 = vmatpush1.bf16.msra.mxu0 0
        %4394 = vmatprep.subr.bf16.mxu0 0
        %4395 = vmatpush1.bf16.msra.mxu0 0
        %4396 = vmatprep.subr.bf16.mxu0 0
        %4397 = vmatpush1.bf16.msra.mxu0 0
        %4398 = vmatprep.subr.bf16.mxu0 0
        %4399 = vmatpush1.bf16.msra.mxu0 0
        %4400 = vmatprep.subr.bf16.mxu0 0
        %4401 = vmatpush1.bf16.msra.mxu0 0
        %4402 = vmatprep.subr.bf16.mxu0 0
        %4403 = vmatpush1.bf16.msra.mxu0 0
        %4404 = vmatprep.subr.bf16.mxu0 0
        %4405 = vmatpush1.bf16.msra.mxu0 0
        %4406 = vmatprep.subr.bf16.mxu0 0
        %4407 = vmatpush1.bf16.msra.mxu0 0
        %4408 = vmatprep.subr.bf16.mxu0 0
        %4409 = vmatpush1.bf16.msra.mxu0 0
        %4410 = vmatprep.mubr.bf16.mxu0 0
        %4411 = vmatmul.mubr.bf16.gmra.mrb[0].mxu0 %v4221
        %v4412 = vpop.f32.mrb[0].mxu0
        %v4413 = vadd.f32 0.0, %v4412
        %v4414 = vpop.f32.mrb[0].mxu0
        %v4415 = vadd.f32 0.0, %v4414
        %v4416 = vpop.f32.mrb[0].mxu0
        %v4417 = vadd.f32 0.0, %v4416
        %v4418 = vpop.f32.mrb[0].mxu0
        %v4419 = vadd.f32 0.0, %v4418
        %4420 = vmatprep.mubr.bf16.mxu0 0
        %4421 = vmatmul.mubr.bf16.gmra.mrb[0].mxu0 %v4224
        %v4422 = vpop.f32.mrb[0].mxu0
        %v4423 = vadd.f32 0.0, %v4422
        %v4424 = vpop.f32.mrb[0].mxu0
        %v4425 = vadd.f32 0.0, %v4424
        %v4426 = vpop.f32.mrb[0].mxu0
        %v4427 = vadd.f32 0.0, %v4426
        %v4428 = vpop.f32.mrb[0].mxu0
        %v4429 = vadd.f32 0.0, %v4428
        %4430 = vmatprep.mubr.bf16.mxu0 0
        %4431 = vmatmul.mubr.bf16.gmra.mrb[0].mxu0 %v4227
        %v4432 = vpop.f32.mrb[0].mxu0
        %v4433 = vadd.f32 0.0, %v4432
        %v4434 = vpop.f32.mrb[0].mxu0
        %v4435 = vadd.f32 0.0, %v4434
        %v4436 = vpop.f32.mrb[0].mxu0
        %v4437 = vadd.f32 0.0, %v4436
        %v4438 = vpop.f32.mrb[0].mxu0
        %v4439 = vadd.f32 0.0, %v4438
        %4440 = vmatprep.mubr.bf16.mxu0 0
        %4441 = vmatmul.mubr.bf16.gmra.mrb[0].mxu0 %v4230
        %v4442 = vpop.f32.mrb[0].mxu0
        %v4443 = vadd.f32 0.0, %v4442
        %v4444 = vpop.f32.mrb[0].mxu0
        %v4445 = vadd.f32 0.0, %v4444
        %v4446 = vpop.f32.mrb[0].mxu0
        %v4447 = vadd.f32 0.0, %v4446
        %v4448 = vpop.f32.mrb[0].mxu0
        %v4449 = vadd.f32 0.0, %v4448
        %4450 = vdwg.mxu0
        %4451 = vmatprep.subr.bf16.mxu0 %v4143
        %4452 = vmatpush1.bf16.msra.mxu0 %v4142
        %4453 = vmatprep.subr.bf16.mxu0 %v4159
        %4454 = vmatpush1.bf16.msra.mxu0 %v4158
        %4455 = vmatprep.subr.bf16.mxu0 %v4175
        %4456 = vmatpush1.bf16.msra.mxu0 %v4174
        %4457 = vmatprep.subr.bf16.mxu0 %v4191
        %4458 = vmatpush1.bf16.msra.mxu0 %v4190
        %4459 = vmatprep.subr.bf16.mxu0 0
        %4460 = vmatpush1.bf16.msra.mxu0 0
        %4461 = vmatprep.subr.bf16.mxu0 0
        %4462 = vmatpush1.bf16.msra.mxu0 0
        %4463 = vmatprep.subr.bf16.mxu0 0
        %4464 = vmatpush1.bf16.msra.mxu0 0
        %4465 = vmatprep.subr.bf16.mxu0 0
        %4466 = vmatpush1.bf16.msra.mxu0 0
        %4467 = vmatprep.subr.bf16.mxu0 0
        %4468 = vmatpush1.bf16.msra.mxu0 0
        %4469 = vmatprep.subr.bf16.mxu0 0
        %4470 = vmatpush1.bf16.msra.mxu0 0
        %4471 = vmatprep.subr.bf16.mxu0 0
        %4472 = vmatpush1.bf16.msra.mxu0 0
        %4473 = vmatprep.subr.bf16.mxu0 0
        %4474 = vmatpush1.bf16.msra.mxu0 0
        %4475 = vmatprep.subr.bf16.mxu0 0
        %4476 = vmatpush1.bf16.msra.mxu0 0
        %4477 = vmatprep.subr.bf16.mxu0 0
        %4478 = vmatpush1.bf16.msra.mxu0 0
        %4479 = vmatprep.subr.bf16.mxu0 0
        %4480 = vmatpush1.bf16.msra.mxu0 0
        %4481 = vmatprep.subr.bf16.mxu0 0
        %4482 = vmatpush1.bf16.msra.mxu0 0
        %4483 = vmatprep.mubr.bf16.mxu0 0
        %4484 = vmatmul.mubr.bf16.gmra.mrb[0].mxu0 %v4221
        %v4485 = vpop.f32.mrb[0].mxu0
        %v4486 = vadd.f32 0.0, %v4485
        %v4487 = vpop.f32.mrb[0].mxu0
        %v4488 = vadd.f32 0.0, %v4487
        %v4489 = vpop.f32.mrb[0].mxu0
        %v4490 = vadd.f32 0.0, %v4489
        %v4491 = vpop.f32.mrb[0].mxu0
        %v4492 = vadd.f32 0.0, %v4491
        %4493 = vmatprep.mubr.bf16.mxu0 0
        %4494 = vmatmul.mubr.bf16.gmra.mrb[0].mxu0 %v4224
        %v4495 = vpop.f32.mrb[0].mxu0
        %v4496 = vadd.f32 0.0, %v4495
        %v4497 = vpop.f32.mrb[0].mxu0
        %v4498 = vadd.f32 0.0, %v4497
        %v4499 = vpop.f32.mrb[0].mxu0
        %v4500 = vadd.f32 0.0, %v4499
        %v4501 = vpop.f32.mrb[0].mxu0
        %v4502 = vadd.f32 0.0, %v4501
        %4503 = vmatprep.mubr.bf16.mxu0 0
        %4504 = vmatmul.mubr.bf16.gmra.mrb[0].mxu0 %v4227
        %v4505 = vpop.f32.mrb[0].mxu0
        %v4506 = vadd.f32 0.0, %v4505
        %v4507 = vpop.f32.mrb[0].mxu0
        %v4508 = vadd.f32 0.0, %v4507
        %v4509 = vpop.f32.mrb[0].mxu0
        %v4510 = vadd.f32 0.0, %v4509
        %v4511 = vpop.f32.mrb[0].mxu0
        %v4512 = vadd.f32 0.0, %v4511
        %4513 = vmatprep.mubr.bf16.mxu0 0
        %4514 = vmatmul.mubr.bf16.gmra.mrb[0].mxu0 %v4230
        %v4515 = vpop.f32.mrb[0].mxu0
        %v4516 = vadd.f32 0.0, %v4515
        %v4517 = vpop.f32.mrb[0].mxu0
        %v4518 = vadd.f32 0.0, %v4517
        %v4519 = vpop.f32.mrb[0].mxu0
        %v4520 = vadd.f32 0.0, %v4519
        %v4521 = vpop.f32.mrb[0].mxu0
        %v4522 = vadd.f32 0.0, %v4521
        %4523 = vdwg.mxu0
        %4524 = vmatprep.subr.bf16.mxu0 %v4145
        %4525 = vmatpush1.bf16.msra.mxu0 %v4144
        %4526 = vmatprep.subr.bf16.mxu0 %v4161
        %4527 = vmatpush1.bf16.msra.mxu0 %v4160
        %4528 = vmatprep.subr.bf16.mxu0 %v4177
        %4529 = vmatpush1.bf16.msra.mxu0 %v4176
        %4530 = vmatprep.subr.bf16.mxu0 %v4193
        %4531 = vmatpush1.bf16.msra.mxu0 %v4192
        %4532 = vmatprep.subr.bf16.mxu0 0
        %4533 = vmatpush1.bf16.msra.mxu0 0
        %4534 = vmatprep.subr.bf16.mxu0 0
        %4535 = vmatpush1.bf16.msra.mxu0 0
        %4536 = vmatprep.subr.bf16.mxu0 0
        %4537 = vmatpush1.bf16.msra.mxu0 0
        %4538 = vmatprep.subr.bf16.mxu0 0
        %4539 = vmatpush1.bf16.msra.mxu0 0
        %4540 = vmatprep.subr.bf16.mxu0 0
        %4541 = vmatpush1.bf16.msra.mxu0 0
        %4542 = vmatprep.subr.bf16.mxu0 0
        %4543 = vmatpush1.bf16.msra.mxu0 0
        %4544 = vmatprep.subr.bf16.mxu0 0
        %4545 = vmatpush1.bf16.msra.mxu0 0
        %4546 = vmatprep.subr.bf16.mxu0 0
        %4547 = vmatpush1.bf16.msra.mxu0 0
        %4548 = vmatprep.subr.bf16.mxu0 0
        %4549 = vmatpush1.bf16.msra.mxu0 0
        %4550 = vmatprep.subr.bf16.mxu0 0
        %4551 = vmatpush1.bf16.msra.mxu0 0
        %4552 = vmatprep.subr.bf16.mxu0 0
        %4553 = vmatpush1.bf16.msra.mxu0 0
        %4554 = vmatprep.subr.bf16.mxu0 0
        %4555 = vmatpush1.bf16.msra.mxu0 0
        %4556 = vmatprep.mubr.bf16.mxu0 0
        %4557 = vmatmul.mubr.bf16.gmra.mrb[0].mxu0 %v4221
        %v4558 = vpop.f32.mrb[0].mxu0
        %v4559 = vadd.f32 0.0, %v4558
        %v4560 = vpop.f32.mrb[0].mxu0
        %v4561 = vadd.f32 0.0, %v4560
        %v4562 = vpop.f32.mrb[0].mxu0
        %v4563 = vadd.f32 0.0, %v4562
        %v4564 = vpop.f32.mrb[0].mxu0
        %v4565 = vadd.f32 0.0, %v4564
        %4566 = vmatprep.mubr.bf16.mxu0 0
        %4567 = vmatmul.mubr.bf16.gmra.mrb[0].mxu0 %v4224
        %v4568 = vpop.f32.mrb[0].mxu0
        %v4569 = vadd.f32 0.0, %v4568
        %v4570 = vpop.f32.mrb[0].mxu0
        %v4571 = vadd.f32 0.0, %v4570
        %v4572 = vpop.f32.mrb[0].mxu0
        %v4573 = vadd.f32 0.0, %v4572
        %v4574 = vpop.f32.mrb[0].mxu0
        %v4575 = vadd.f32 0.0, %v4574
        %4576 = vmatprep.mubr.bf16.mxu0 0
        %4577 = vmatmul.mubr.bf16.gmra.mrb[0].mxu0 %v4227
        %v4578 = vpop.f32.mrb[0].mxu0
        %v4579 = vadd.f32 0.0, %v4578
        %v4580 = vpop.f32.mrb[0].mxu0
        %v4581 = vadd.f32 0.0, %v4580
        %v4582 = vpop.f32.mrb[0].mxu0
        %v4583 = vadd.f32 0.0, %v4582
        %v4584 = vpop.f32.mrb[0].mxu0
        %v4585 = vadd.f32 0.0, %v4584
        %4586 = vmatprep.mubr.bf16.mxu0 0
        %4587 = vmatmul.mubr.bf16.gmra.mrb[0].mxu0 %v4230
        %v4588 = vpop.f32.mrb[0].mxu0
        %v4589 = vadd.f32 0.0, %v4588
        %v4590 = vpop.f32.mrb[0].mxu0
        %v4591 = vadd.f32 0.0, %v4590
        %v4592 = vpop.f32.mrb[0].mxu0
        %v4593 = vadd.f32 0.0, %v4592
        %v4594 = vpop.f32.mrb[0].mxu0
        %v4595 = vadd.f32 0.0, %v4594
        %4596 = vdwg.mxu0
        %4597 = vmatprep.subr.bf16.mxu0 %v4147
        %4598 = vmatpush1.bf16.msra.mxu0 %v4146
        %4599 = vmatprep.subr.bf16.mxu0 %v4163
        %4600 = vmatpush1.bf16.msra.mxu0 %v4162
        %4601 = vmatprep.subr.bf16.mxu0 %v4179
        %4602 = vmatpush1.bf16.msra.mxu0 %v4178
        %4603 = vmatprep.subr.bf16.mxu0 %v4195
        %4604 = vmatpush1.bf16.msra.mxu0 %v4194
        %4605 = vmatprep.subr.bf16.mxu0 0
        %4606 = vmatpush1.bf16.msra.mxu0 0
        %4607 = vmatprep.subr.bf16.mxu0 0
        %4608 = vmatpush1.bf16.msra.mxu0 0
        %4609 = vmatprep.subr.bf16.mxu0 0
        %4610 = vmatpush1.bf16.msra.mxu0 0
        %4611 = vmatprep.subr.bf16.mxu0 0
        %4612 = vmatpush1.bf16.msra.mxu0 0
        %4613 = vmatprep.subr.bf16.mxu0 0
        %4614 = vmatpush1.bf16.msra.mxu0 0
        %4615 = vmatprep.subr.bf16.mxu0 0
        %4616 = vmatpush1.bf16.msra.mxu0 0
        %4617 = vmatprep.subr.bf16.mxu0 0
        %4618 = vmatpush1.bf16.msra.mxu0 0
        %4619 = vmatprep.subr.bf16.mxu0 0
        %4620 = vmatpush1.bf16.msra.mxu0 0
        %4621 = vmatprep.subr.bf16.mxu0 0
        %4622 = vmatpush1.bf16.msra.mxu0 0
        %4623 = vmatprep.subr.bf16.mxu0 0
        %4624 = vmatpush1.bf16.msra.mxu0 0
        %4625 = vmatprep.subr.bf16.mxu0 0
        %4626 = vmatpush1.bf16.msra.mxu0 0
        %4627 = vmatprep.subr.bf16.mxu0 0
        %4628 = vmatpush1.bf16.msra.mxu0 0
        %4629 = vmatprep.mubr.bf16.mxu0 0
        %4630 = vmatmul.mubr.bf16.gmra.mrb[0].mxu0 %v4221
        %v4631 = vpop.f32.mrb[0].mxu0
        %v4632 = vadd.f32 0.0, %v4631
        %v4633 = vpop.f32.mrb[0].mxu0
        %v4634 = vadd.f32 0.0, %v4633
        %v4635 = vpop.f32.mrb[0].mxu0
        %v4636 = vadd.f32 0.0, %v4635
        %v4637 = vpop.f32.mrb[0].mxu0
        %v4638 = vadd.f32 0.0, %v4637
        %4639 = vmatprep.mubr.bf16.mxu0 0
        %4640 = vmatmul.mubr.bf16.gmra.mrb[0].mxu0 %v4224
        %v4641 = vpop.f32.mrb[0].mxu0
        %v4642 = vadd.f32 0.0, %v4641
        %v4643 = vpop.f32.mrb[0].mxu0
        %v4644 = vadd.f32 0.0, %v4643
        %v4645 = vpop.f32.mrb[0].mxu0
        %v4646 = vadd.f32 0.0, %v4645
        %v4647 = vpop.f32.mrb[0].mxu0
        %v4648 = vadd.f32 0.0, %v4647
        %4649 = vmatprep.mubr.bf16.mxu0 0
        %4650 = vmatmul.mubr.bf16.gmra.mrb[0].mxu0 %v4227
        %v4651 = vpop.f32.mrb[0].mxu0
        %v4652 = vadd.f32 0.0, %v4651
        %v4653 = vpop.f32.mrb[0].mxu0
        %v4654 = vadd.f32 0.0, %v4653
        %v4655 = vpop.f32.mrb[0].mxu0
        %v4656 = vadd.f32 0.0, %v4655
        %v4657 = vpop.f32.mrb[0].mxu0
        %v4658 = vadd.f32 0.0, %v4657
        %4659 = vmatprep.mubr.bf16.mxu0 0
        %4660 = vmatmul.mubr.bf16.gmra.mrb[0].mxu0 %v4230
        %v4661 = vpop.f32.mrb[0].mxu0
        %v4662 = vadd.f32 0.0, %v4661
        %v4663 = vpop.f32.mrb[0].mxu0
        %v4664 = vadd.f32 0.0, %v4663
        %v4665 = vpop.f32.mrb[0].mxu0
        %v4666 = vadd.f32 0.0, %v4665
        %v4667 = vpop.f32.mrb[0].mxu0
        %v4668 = vadd.f32 0.0, %v4667
        %4669 = vdwg.mxu0
        %4670 = vmatprep.subr.bf16.mxu0 %v4149
        %4671 = vmatpush1.bf16.msra.mxu0 %v4148
        %4672 = vmatprep.subr.bf16.mxu0 %v4165
        %4673 = vmatpush1.bf16.msra.mxu0 %v4164
        %4674 = vmatprep.subr.bf16.mxu0 %v4181
        %4675 = vmatpush1.bf16.msra.mxu0 %v4180
        %4676 = vmatprep.subr.bf16.mxu0 %v4197
        %4677 = vmatpush1.bf16.msra.mxu0 %v4196
        %4678 = vmatprep.subr.bf16.mxu0 0
        %4679 = vmatpush1.bf16.msra.mxu0 0
        %4680 = vmatprep.subr.bf16.mxu0 0
        %4681 = vmatpush1.bf16.msra.mxu0 0
        %4682 = vmatprep.subr.bf16.mxu0 0
        %4683 = vmatpush1.bf16.msra.mxu0 0
        %4684 = vmatprep.subr.bf16.mxu0 0
        %4685 = vmatpush1.bf16.msra.mxu0 0
        %4686 = vmatprep.subr.bf16.mxu0 0
        %4687 = vmatpush1.bf16.msra.mxu0 0
        %4688 = vmatprep.subr.bf16.mxu0 0
        %4689 = vmatpush1.bf16.msra.mxu0 0
        %4690 = vmatprep.subr.bf16.mxu0 0
        %4691 = vmatpush1.bf16.msra.mxu0 0
        %4692 = vmatprep.subr.bf16.mxu0 0
        %4693 = vmatpush1.bf16.msra.mxu0 0
        %4694 = vmatprep.subr.bf16.mxu0 0
        %4695 = vmatpush1.bf16.msra.mxu0 0
        %4696 = vmatprep.subr.bf16.mxu0 0
        %4697 = vmatpush1.bf16.msra.mxu0 0
        %4698 = vmatprep.subr.bf16.mxu0 0
        %4699 = vmatpush1.bf16.msra.mxu0 0
        %4700 = vmatprep.subr.bf16.mxu0 0
        %4701 = vmatpush1.bf16.msra.mxu0 0
        %4702 = vmatprep.mubr.bf16.mxu0 0
        %4703 = vmatmul.mubr.bf16.gmra.mrb[0].mxu0 %v4221
        %v4704 = vpop.f32.mrb[0].mxu0
        %v4705 = vadd.f32 0.0, %v4704
        %v4706 = vpop.f32.mrb[0].mxu0
        %v4707 = vadd.f32 0.0, %v4706
        %v4708 = vpop.f32.mrb[0].mxu0
        %v4709 = vadd.f32 0.0, %v4708
        %v4710 = vpop.f32.mrb[0].mxu0
        %v4711 = vadd.f32 0.0, %v4710
        %4712 = vmatprep.mubr.bf16.mxu0 0
        %4713 = vmatmul.mubr.bf16.gmra.mrb[0].mxu0 %v4224
        %v4714 = vpop.f32.mrb[0].mxu0
        %v4715 = vadd.f32 0.0, %v4714
        %v4716 = vpop.f32.mrb[0].mxu0
        %v4717 = vadd.f32 0.0, %v4716
        %v4718 = vpop.f32.mrb[0].mxu0
        %v4719 = vadd.f32 0.0, %v4718
        %v4720 = vpop.f32.mrb[0].mxu0
        %v4721 = vadd.f32 0.0, %v4720
        %4722 = vmatprep.mubr.bf16.mxu0 0
        %4723 = vmatmul.mubr.bf16.gmra.mrb[0].mxu0 %v4227
        %v4724 = vpop.f32.mrb[0].mxu0
        %v4725 = vadd.f32 0.0, %v4724
        %v4726 = vpop.f32.mrb[0].mxu0
        %v4727 = vadd.f32 0.0, %v4726
        %v4728 = vpop.f32.mrb[0].mxu0
        %v4729 = vadd.f32 0.0, %v4728
        %v4730 = vpop.f32.mrb[0].mxu0
        %v4731 = vadd.f32 0.0, %v4730
        %4732 = vmatprep.mubr.bf16.mxu0 0
        %4733 = vmatmul.mubr.bf16.gmra.mrb[0].mxu0 %v4230
        %v4734 = vpop.f32.mrb[0].mxu0
        %v4735 = vadd.f32 0.0, %v4734
        %v4736 = vpop.f32.mrb[0].mxu0
        %v4737 = vadd.f32 0.0, %v4736
        %v4738 = vpop.f32.mrb[0].mxu0
        %v4739 = vadd.f32 0.0, %v4738
        %v4740 = vpop.f32.mrb[0].mxu0
        %v4741 = vadd.f32 0.0, %v4740
        %4742 = vdwg.mxu0
        %4743 = vmatprep.subr.bf16.mxu0 %v4151
        %4744 = vmatpush1.bf16.msra.mxu0 %v4150
        %4745 = vmatprep.subr.bf16.mxu0 %v4167
        %4746 = vmatpush1.bf16.msra.mxu0 %v4166
        %4747 = vmatprep.subr.bf16.mxu0 %v4183
        %4748 = vmatpush1.bf16.msra.mxu0 %v4182
        %4749 = vmatprep.subr.bf16.mxu0 %v4199
        %4750 = vmatpush1.bf16.msra.mxu0 %v4198
        %4751 = vmatprep.subr.bf16.mxu0 0
        %4752 = vmatpush1.bf16.msra.mxu0 0
        %4753 = vmatprep.subr.bf16.mxu0 0
        %4754 = vmatpush1.bf16.msra.mxu0 0
        %4755 = vmatprep.subr.bf16.mxu0 0
        %4756 = vmatpush1.bf16.msra.mxu0 0
        %4757 = vmatprep.subr.bf16.mxu0 0
        %4758 = vmatpush1.bf16.msra.mxu0 0
        %4759 = vmatprep.subr.bf16.mxu0 0
        %4760 = vmatpush1.bf16.msra.mxu0 0
        %4761 = vmatprep.subr.bf16.mxu0 0
        %4762 = vmatpush1.bf16.msra.mxu0 0
        %4763 = vmatprep.subr.bf16.mxu0 0
        %4764 = vmatpush1.bf16.msra.mxu0 0
        %4765 = vmatprep.subr.bf16.mxu0 0
        %4766 = vmatpush1.bf16.msra.mxu0 0
        %4767 = vmatprep.subr.bf16.mxu0 0
        %4768 = vmatpush1.bf16.msra.mxu0 0
        %4769 = vmatprep.subr.bf16.mxu0 0
        %4770 = vmatpush1.bf16.msra.mxu0 0
        %4771 = vmatprep.subr.bf16.mxu0 0
        %4772 = vmatpush1.bf16.msra.mxu0 0
        %4773 = vmatprep.subr.bf16.mxu0 0
        %4774 = vmatpush1.bf16.msra.mxu0 0
        %4775 = vmatprep.mubr.bf16.mxu0 0
        %4776 = vmatmul.mubr.bf16.gmra.mrb[0].mxu0 %v4221
        %v4777 = vpop.f32.mrb[0].mxu0
        %v4778 = vadd.f32 0.0, %v4777
        %v4779 = vpop.f32.mrb[0].mxu0
        %v4780 = vadd.f32 0.0, %v4779
        %v4781 = vpop.f32.mrb[0].mxu0
        %v4782 = vadd.f32 0.0, %v4781
        %v4783 = vpop.f32.mrb[0].mxu0
        %v4784 = vadd.f32 0.0, %v4783
        %4785 = vmatprep.mubr.bf16.mxu0 0
        %4786 = vmatmul.mubr.bf16.gmra.mrb[0].mxu0 %v4224
        %v4787 = vpop.f32.mrb[0].mxu0
        %v4788 = vadd.f32 0.0, %v4787
        %v4789 = vpop.f32.mrb[0].mxu0
        %v4790 = vadd.f32 0.0, %v4789
        %v4791 = vpop.f32.mrb[0].mxu0
        %v4792 = vadd.f32 0.0, %v4791
        %v4793 = vpop.f32.mrb[0].mxu0
        %v4794 = vadd.f32 0.0, %v4793
        %4795 = vmatprep.mubr.bf16.mxu0 0
        %4796 = vmatmul.mubr.bf16.gmra.mrb[0].mxu0 %v4227
        %v4797 = vpop.f32.mrb[0].mxu0
        %v4798 = vadd.f32 0.0, %v4797
        %v4799 = vpop.f32.mrb[0].mxu0
        %v4800 = vadd.f32 0.0, %v4799
        %v4801 = vpop.f32.mrb[0].mxu0
        %v4802 = vadd.f32 0.0, %v4801
        %v4803 = vpop.f32.mrb[0].mxu0
        %v4804 = vadd.f32 0.0, %v4803
        %4805 = vmatprep.mubr.bf16.mxu0 0
        %4806 = vmatmul.mubr.bf16.gmra.mrb[0].mxu0 %v4230
        %v4807 = vpop.f32.mrb[0].mxu0
        %v4808 = vadd.f32 0.0, %v4807
        %v4809 = vpop.f32.mrb[0].mxu0
        %v4810 = vadd.f32 0.0, %v4809
        %v4811 = vpop.f32.mrb[0].mxu0
        %v4812 = vadd.f32 0.0, %v4811
        %v4813 = vpop.f32.mrb[0].mxu0
        %v4814 = vadd.f32 0.0, %v4813
        %4815 = vdwg.mxu0
        %v4816 = vmax.f32 %v4267, 0.0
        %v4817 = vmax.f32 %v4269, 0.0
        %v4818 = vmax.f32 %v4340, 0.0
        %v4819 = vmax.f32 %v4342, 0.0
        %v4820 = vmax.f32 %v4413, 0.0
        %v4821 = vmax.f32 %v4415, 0.0
        %v4822 = vmax.f32 %v4486, 0.0
        %v4823 = vmax.f32 %v4488, 0.0
        %v4824 = vmax.f32 %v4559, 0.0
        %v4825 = vmax.f32 %v4561, 0.0
        %v4826 = vmax.f32 %v4632, 0.0
        %v4827 = vmax.f32 %v4634, 0.0
        %v4828 = vmax.f32 %v4705, 0.0
        %v4829 = vmax.f32 %v4707, 0.0
        %v4830 = vmax.f32 %v4778, 0.0
        %v4831 = vmax.f32 %v4780, 0.0
        %v4832 = vmax.f32 %v4271, 0.0
        %v4833 = vmax.f32 %v4273, 0.0
        %v4834 = vmax.f32 %v4344, 0.0
        %v4835 = vmax.f32 %v4346, 0.0
        %v4836 = vmax.f32 %v4417, 0.0
        %v4837 = vmax.f32 %v4419, 0.0
        %v4838 = vmax.f32 %v4490, 0.0
        %v4839 = vmax.f32 %v4492, 0.0
        %v4840 = vmax.f32 %v4563, 0.0
        %v4841 = vmax.f32 %v4565, 0.0
        %v4842 = vmax.f32 %v4636, 0.0
        %v4843 = vmax.f32 %v4638, 0.0
        %v4844 = vmax.f32 %v4709, 0.0
        %v4845 = vmax.f32 %v4711, 0.0
        %v4846 = vmax.f32 %v4782, 0.0
        %v4847 = vmax.f32 %v4784, 0.0
        %v4848 = vmax.f32 %v4277, 0.0
        %v4849 = vmax.f32 %v4279, 0.0
        %v4850 = vmax.f32 %v4350, 0.0
        %v4851 = vmax.f32 %v4352, 0.0
        %v4852 = vmax.f32 %v4423, 0.0
        %v4853 = vmax.f32 %v4425, 0.0
        %v4854 = vmax.f32 %v4496, 0.0
        %v4855 = vmax.f32 %v4498, 0.0
        %v4856 = vmax.f32 %v4569, 0.0
        %v4857 = vmax.f32 %v4571, 0.0
        %v4858 = vmax.f32 %v4642, 0.0
        %v4859 = vmax.f32 %v4644, 0.0
        %v4860 = vmax.f32 %v4715, 0.0
        %v4861 = vmax.f32 %v4717, 0.0
        %v4862 = vmax.f32 %v4788, 0.0
        %v4863 = vmax.f32 %v4790, 0.0
        %v4864 = vmax.f32 %v4281, 0.0
        %v4865 = vmax.f32 %v4283, 0.0
        %v4866 = vmax.f32 %v4354, 0.0
        %v4867 = vmax.f32 %v4356, 0.0
        %v4868 = vmax.f32 %v4427, 0.0
        %v4869 = vmax.f32 %v4429, 0.0
        %v4870 = vmax.f32 %v4500, 0.0
        %v4871 = vmax.f32 %v4502, 0.0
        %v4872 = vmax.f32 %v4573, 0.0
        %v4873 = vmax.f32 %v4575, 0.0
        %v4874 = vmax.f32 %v4646, 0.0
        %v4875 = vmax.f32 %v4648, 0.0
        %v4876 = vmax.f32 %v4719, 0.0
        %v4877 = vmax.f32 %v4721, 0.0
        %v4878 = vmax.f32 %v4792, 0.0
        %v4879 = vmax.f32 %v4794, 0.0
        %v4880 = vmax.f32 %v4287, 0.0
        %v4881 = vmax.f32 %v4289, 0.0
        %v4882 = vmax.f32 %v4360, 0.0
        %v4883 = vmax.f32 %v4362, 0.0
        %v4884 = vmax.f32 %v4433, 0.0
        %v4885 = vmax.f32 %v4435, 0.0
        %v4886 = vmax.f32 %v4506, 0.0
        %v4887 = vmax.f32 %v4508, 0.0
        %v4888 = vmax.f32 %v4579, 0.0
        %v4889 = vmax.f32 %v4581, 0.0
        %v4890 = vmax.f32 %v4652, 0.0
        %v4891 = vmax.f32 %v4654, 0.0
        %v4892 = vmax.f32 %v4725, 0.0
        %v4893 = vmax.f32 %v4727, 0.0
        %v4894 = vmax.f32 %v4798, 0.0
        %v4895 = vmax.f32 %v4800, 0.0
        %v4896 = vmax.f32 %v4291, 0.0
        %v4897 = vmax.f32 %v4293, 0.0
        %v4898 = vmax.f32 %v4364, 0.0
        %v4899 = vmax.f32 %v4366, 0.0
        %v4900 = vmax.f32 %v4437, 0.0
        %v4901 = vmax.f32 %v4439, 0.0
        %v4902 = vmax.f32 %v4510, 0.0
        %v4903 = vmax.f32 %v4512, 0.0
        %v4904 = vmax.f32 %v4583, 0.0
        %v4905 = vmax.f32 %v4585, 0.0
        %v4906 = vmax.f32 %v4656, 0.0
        %v4907 = vmax.f32 %v4658, 0.0
        %v4908 = vmax.f32 %v4729, 0.0
        %v4909 = vmax.f32 %v4731, 0.0
        %v4910 = vmax.f32 %v4802, 0.0
        %v4911 = vmax.f32 %v4804, 0.0
        %v4912 = vmax.f32 %v4297, 0.0
        %v4913 = vmax.f32 %v4299, 0.0
        %v4914 = vmax.f32 %v4370, 0.0
        %v4915 = vmax.f32 %v4372, 0.0
        %v4916 = vmax.f32 %v4443, 0.0
        %v4917 = vmax.f32 %v4445, 0.0
        %v4918 = vmax.f32 %v4516, 0.0
        %v4919 = vmax.f32 %v4518, 0.0
        %v4920 = vmax.f32 %v4589, 0.0
        %v4921 = vmax.f32 %v4591, 0.0
        %v4922 = vmax.f32 %v4662, 0.0
        %v4923 = vmax.f32 %v4664, 0.0
        %v4924 = vmax.f32 %v4735, 0.0
        %v4925 = vmax.f32 %v4737, 0.0
        %v4926 = vmax.f32 %v4808, 0.0
        %v4927 = vmax.f32 %v4810, 0.0
        %v4928 = vmax.f32 %v4301, 0.0
        %v4929 = vmax.f32 %v4303, 0.0
        %v4930 = vmax.f32 %v4374, 0.0
        %v4931 = vmax.f32 %v4376, 0.0
        %v4932 = vmax.f32 %v4447, 0.0
        %v4933 = vmax.f32 %v4449, 0.0
        %v4934 = vmax.f32 %v4520, 0.0
        %v4935 = vmax.f32 %v4522, 0.0
        %v4936 = vmax.f32 %v4593, 0.0
        %v4937 = vmax.f32 %v4595, 0.0
        %v4938 = vmax.f32 %v4666, 0.0
        %v4939 = vmax.f32 %v4668, 0.0
        %v4940 = vmax.f32 %v4739, 0.0
        %v4941 = vmax.f32 %v4741, 0.0
        %v4942 = vmax.f32 %v4812, 0.0
        %v4943 = vmax.f32 %v4814, 0.0
        %v4944 = vpack.c.bf16 %v4832, %v4816
        %v4945 = vpack.c.bf16 %v4833, %v4817
        %v4946 = vpack.c.bf16 %v4834, %v4818
        %v4947 = vpack.c.bf16 %v4835, %v4819
        %v4948 = vpack.c.bf16 %v4836, %v4820
        %v4949 = vpack.c.bf16 %v4837, %v4821
        %v4950 = vpack.c.bf16 %v4838, %v4822
        %v4951 = vpack.c.bf16 %v4839, %v4823
        %v4952 = vpack.c.bf16 %v4840, %v4824
        %v4953 = vpack.c.bf16 %v4841, %v4825
        %v4954 = vpack.c.bf16 %v4842, %v4826
        %v4955 = vpack.c.bf16 %v4843, %v4827
        %v4956 = vpack.c.bf16 %v4844, %v4828
        %v4957 = vpack.c.bf16 %v4845, %v4829
        %v4958 = vpack.c.bf16 %v4846, %v4830
        %v4959 = vpack.c.bf16 %v4847, %v4831
        %v4960 = vpack.c.bf16 %v4864, %v4848
        %v4961 = vpack.c.bf16 %v4865, %v4849
        %v4962 = vpack.c.bf16 %v4866, %v4850
        %v4963 = vpack.c.bf16 %v4867, %v4851
        %v4964 = vpack.c.bf16 %v4868, %v4852
        %v4965 = vpack.c.bf16 %v4869, %v4853
        %v4966 = vpack.c.bf16 %v4870, %v4854
        %v4967 = vpack.c.bf16 %v4871, %v4855
        %v4968 = vpack.c.bf16 %v4872, %v4856
        %v4969 = vpack.c.bf16 %v4873, %v4857
        %v4970 = vpack.c.bf16 %v4874, %v4858
        %v4971 = vpack.c.bf16 %v4875, %v4859
        %v4972 = vpack.c.bf16 %v4876, %v4860
        %v4973 = vpack.c.bf16 %v4877, %v4861
        %v4974 = vpack.c.bf16 %v4878, %v4862
        %v4975 = vpack.c.bf16 %v4879, %v4863
        %v4976 = vpack.c.bf16 %v4896, %v4880
        %v4977 = vpack.c.bf16 %v4897, %v4881
        %v4978 = vpack.c.bf16 %v4898, %v4882
        %v4979 = vpack.c.bf16 %v4899, %v4883
        %v4980 = vpack.c.bf16 %v4900, %v4884
        %v4981 = vpack.c.bf16 %v4901, %v4885
        %v4982 = vpack.c.bf16 %v4902, %v4886
        %v4983 = vpack.c.bf16 %v4903, %v4887
        %v4984 = vpack.c.bf16 %v4904, %v4888
        %v4985 = vpack.c.bf16 %v4905, %v4889
        %v4986 = vpack.c.bf16 %v4906, %v4890
        %v4987 = vpack.c.bf16 %v4907, %v4891
        %v4988 = vpack.c.bf16 %v4908, %v4892
        %v4989 = vpack.c.bf16 %v4909, %v4893
        %v4990 = vpack.c.bf16 %v4910, %v4894
        %v4991 = vpack.c.bf16 %v4911, %v4895
        %v4992 = vpack.c.bf16 %v4928, %v4912
        %v4993 = vpack.c.bf16 %v4929, %v4913
        %v4994 = vpack.c.bf16 %v4930, %v4914
        %v4995 = vpack.c.bf16 %v4931, %v4915
        %v4996 = vpack.c.bf16 %v4932, %v4916
        %v4997 = vpack.c.bf16 %v4933, %v4917
        %v4998 = vpack.c.bf16 %v4934, %v4918
        %v4999 = vpack.c.bf16 %v4935, %v4919
        %v5000 = vpack.c.bf16 %v4936, %v4920
        %v5001 = vpack.c.bf16 %v4937, %v4921
        %v5002 = vpack.c.bf16 %v4938, %v4922
        %v5003 = vpack.c.bf16 %v4939, %v4923
        %v5004 = vpack.c.bf16 %v4940, %v4924
        %v5005 = vpack.c.bf16 %v4941, %v4925
        %v5006 = vpack.c.bf16 %v4942, %v4926
        %v5007 = vpack.c.bf16 %v4943, %v4927
        %v5008 = vld [vmem:[%s6] sm:$0xf]
        %5009 = vmatprep.subr.bf16.mxu0 %v4945
        %5010 = vmatpush1.bf16.msra.mxu0 %v4944
        %5011 = vmatprep.subr.bf16.mxu0 %v4961
        %5012 = vmatpush1.bf16.msra.mxu0 %v4960
        %5013 = vmatprep.subr.bf16.mxu0 %v4977
        %5014 = vmatpush1.bf16.msra.mxu0 %v4976
        %5015 = vmatprep.subr.bf16.mxu0 %v4993
        %5016 = vmatpush1.bf16.msra.mxu0 %v4992
        %5017 = vmatprep.subr.bf16.mxu0 %v2369
        %5018 = vmatpush1.bf16.msra.mxu0 %v2368
        %5019 = vmatprep.subr.bf16.mxu0 %v2385
        %5020 = vmatpush1.bf16.msra.mxu0 %v2384
        %5021 = vmatprep.subr.bf16.mxu0 %v2401
        %5022 = vmatpush1.bf16.msra.mxu0 %v2400
        %5023 = vmatprep.subr.bf16.mxu0 %v2417
        %5024 = vmatpush1.bf16.msra.mxu0 %v2416
        %5025 = vmatprep.subr.bf16.mxu0 0
        %5026 = vmatpush1.bf16.msra.mxu0 0
        %5027 = vmatprep.subr.bf16.mxu0 0
        %5028 = vmatpush1.bf16.msra.mxu0 0
        %5029 = vmatprep.subr.bf16.mxu0 0
        %5030 = vmatpush1.bf16.msra.mxu0 0
        %5031 = vmatprep.subr.bf16.mxu0 0
        %5032 = vmatpush1.bf16.msra.mxu0 0
        %5033 = vmatprep.subr.bf16.mxu0 0
        %5034 = vmatpush1.bf16.msra.mxu0 0
        %5035 = vmatprep.subr.bf16.mxu0 0
        %5036 = vmatpush1.bf16.msra.mxu0 0
        %5037 = vmatprep.subr.bf16.mxu0 0
        %5038 = vmatpush1.bf16.msra.mxu0 0
        %5039 = vmatprep.subr.bf16.mxu0 0
        %5040 = vmatpush1.bf16.msra.mxu0 0
        %5041 = vmatprep.mubr.bf16.mxu0 0
        %5042 = vmatmul.mubr.bf16.gmra.mrb[0].mxu0 %v5008
        %v5043 = vpop.f32.mrb[0].mxu0
        %v5044 = vadd.f32 0.0, %v5043
        %v5045 = vpop.f32.mrb[0].mxu0
        %v5046 = vadd.f32 0.0, %v5045
        %v5047 = vpop.f32.mrb[0].mxu0
        %v5048 = vpop.f32.mrb[0].mxu0
        %5049 = vdwg.mxu0
        %5050 = vmatprep.subr.bf16.mxu0 %v4947
        %5051 = vmatpush1.bf16.msra.mxu0 %v4946
        %5052 = vmatprep.subr.bf16.mxu0 %v4963
        %5053 = vmatpush1.bf16.msra.mxu0 %v4962
        %5054 = vmatprep.subr.bf16.mxu0 %v4979
        %5055 = vmatpush1.bf16.msra.mxu0 %v4978
        %5056 = vmatprep.subr.bf16.mxu0 %v4995
        %5057 = vmatpush1.bf16.msra.mxu0 %v4994
        %5058 = vmatprep.subr.bf16.mxu0 %v2371
        %5059 = vmatpush1.bf16.msra.mxu0 %v2370
        %5060 = vmatprep.subr.bf16.mxu0 %v2387
        %5061 = vmatpush1.bf16.msra.mxu0 %v2386
        %5062 = vmatprep.subr.bf16.mxu0 %v2403
        %5063 = vmatpush1.bf16.msra.mxu0 %v2402
        %5064 = vmatprep.subr.bf16.mxu0 %v2419
        %5065 = vmatpush1.bf16.msra.mxu0 %v2418
        %5066 = vmatprep.subr.bf16.mxu0 0
        %5067 = vmatpush1.bf16.msra.mxu0 0
        %5068 = vmatprep.subr.bf16.mxu0 0
        %5069 = vmatpush1.bf16.msra.mxu0 0
        %5070 = vmatprep.subr.bf16.mxu0 0
        %5071 = vmatpush1.bf16.msra.mxu0 0
        %5072 = vmatprep.subr.bf16.mxu0 0
        %5073 = vmatpush1.bf16.msra.mxu0 0
        %5074 = vmatprep.subr.bf16.mxu0 0
        %5075 = vmatpush1.bf16.msra.mxu0 0
        %5076 = vmatprep.subr.bf16.mxu0 0
        %5077 = vmatpush1.bf16.msra.mxu0 0
        %5078 = vmatprep.subr.bf16.mxu0 0
        %5079 = vmatpush1.bf16.msra.mxu0 0
        %5080 = vmatprep.subr.bf16.mxu0 0
        %5081 = vmatpush1.bf16.msra.mxu0 0
        %5082 = vmatprep.mubr.bf16.mxu0 0
        %5083 = vmatmul.mubr.bf16.gmra.mrb[0].mxu0 %v5008
        %v5084 = vpop.f32.mrb[0].mxu0
        %v5085 = vadd.f32 0.0, %v5084
        %v5086 = vpop.f32.mrb[0].mxu0
        %v5087 = vadd.f32 0.0, %v5086
        %v5088 = vpop.f32.mrb[0].mxu0
        %v5089 = vpop.f32.mrb[0].mxu0
        %5090 = vdwg.mxu0
        %5091 = vmatprep.subr.bf16.mxu0 %v4949
        %5092 = vmatpush1.bf16.msra.mxu0 %v4948
        %5093 = vmatprep.subr.bf16.mxu0 %v4965
        %5094 = vmatpush1.bf16.msra.mxu0 %v4964
        %5095 = vmatprep.subr.bf16.mxu0 %v4981
        %5096 = vmatpush1.bf16.msra.mxu0 %v4980
        %5097 = vmatprep.subr.bf16.mxu0 %v4997
        %5098 = vmatpush1.bf16.msra.mxu0 %v4996
        %5099 = vmatprep.subr.bf16.mxu0 %v2373
        %5100 = vmatpush1.bf16.msra.mxu0 %v2372
        %5101 = vmatprep.subr.bf16.mxu0 %v2389
        %5102 = vmatpush1.bf16.msra.mxu0 %v2388
        %5103 = vmatprep.subr.bf16.mxu0 %v2405
        %5104 = vmatpush1.bf16.msra.mxu0 %v2404
        %5105 = vmatprep.subr.bf16.mxu0 %v2421
        %5106 = vmatpush1.bf16.msra.mxu0 %v2420
        %5107 = vmatprep.subr.bf16.mxu0 0
        %5108 = vmatpush1.bf16.msra.mxu0 0
        %5109 = vmatprep.subr.bf16.mxu0 0
        %5110 = vmatpush1.bf16.msra.mxu0 0
        %5111 = vmatprep.subr.bf16.mxu0 0
        %5112 = vmatpush1.bf16.msra.mxu0 0
        %5113 = vmatprep.subr.bf16.mxu0 0
        %5114 = vmatpush1.bf16.msra.mxu0 0
        %5115 = vmatprep.subr.bf16.mxu0 0
        %5116 = vmatpush1.bf16.msra.mxu0 0
        %5117 = vmatprep.subr.bf16.mxu0 0
        %5118 = vmatpush1.bf16.msra.mxu0 0
        %5119 = vmatprep.subr.bf16.mxu0 0
        %5120 = vmatpush1.bf16.msra.mxu0 0
        %5121 = vmatprep.subr.bf16.mxu0 0
        %5122 = vmatpush1.bf16.msra.mxu0 0
        %5123 = vmatprep.mubr.bf16.mxu0 0
        %5124 = vmatmul.mubr.bf16.gmra.mrb[0].mxu0 %v5008
        %v5125 = vpop.f32.mrb[0].mxu0
        %v5126 = vadd.f32 0.0, %v5125
        %v5127 = vpop.f32.mrb[0].mxu0
        %v5128 = vadd.f32 0.0, %v5127
        %v5129 = vpop.f32.mrb[0].mxu0
        %v5130 = vpop.f32.mrb[0].mxu0
        %5131 = vdwg.mxu0
        %5132 = vmatprep.subr.bf16.mxu0 %v4951
        %5133 = vmatpush1.bf16.msra.mxu0 %v4950
        %5134 = vmatprep.subr.bf16.mxu0 %v4967
        %5135 = vmatpush1.bf16.msra.mxu0 %v4966
        %5136 = vmatprep.subr.bf16.mxu0 %v4983
        %5137 = vmatpush1.bf16.msra.mxu0 %v4982
        %5138 = vmatprep.subr.bf16.mxu0 %v4999
        %5139 = vmatpush1.bf16.msra.mxu0 %v4998
        %5140 = vmatprep.subr.bf16.mxu0 %v2375
        %5141 = vmatpush1.bf16.msra.mxu0 %v2374
        %5142 = vmatprep.subr.bf16.mxu0 %v2391
        %5143 = vmatpush1.bf16.msra.mxu0 %v2390
        %5144 = vmatprep.subr.bf16.mxu0 %v2407
        %5145 = vmatpush1.bf16.msra.mxu0 %v2406
        %5146 = vmatprep.subr.bf16.mxu0 %v2423
        %5147 = vmatpush1.bf16.msra.mxu0 %v2422
        %5148 = vmatprep.subr.bf16.mxu0 0
        %5149 = vmatpush1.bf16.msra.mxu0 0
        %5150 = vmatprep.subr.bf16.mxu0 0
        %5151 = vmatpush1.bf16.msra.mxu0 0
        %5152 = vmatprep.subr.bf16.mxu0 0
        %5153 = vmatpush1.bf16.msra.mxu0 0
        %5154 = vmatprep.subr.bf16.mxu0 0
        %5155 = vmatpush1.bf16.msra.mxu0 0
        %5156 = vmatprep.subr.bf16.mxu0 0
        %5157 = vmatpush1.bf16.msra.mxu0 0
        %5158 = vmatprep.subr.bf16.mxu0 0
        %5159 = vmatpush1.bf16.msra.mxu0 0
        %5160 = vmatprep.subr.bf16.mxu0 0
        %5161 = vmatpush1.bf16.msra.mxu0 0
        %5162 = vmatprep.subr.bf16.mxu0 0
        %5163 = vmatpush1.bf16.msra.mxu0 0
        %5164 = vmatprep.mubr.bf16.mxu0 0
        %5165 = vmatmul.mubr.bf16.gmra.mrb[0].mxu0 %v5008
        %v5166 = vpop.f32.mrb[0].mxu0
        %v5167 = vadd.f32 0.0, %v5166
        %v5168 = vpop.f32.mrb[0].mxu0
        %v5169 = vadd.f32 0.0, %v5168
        %v5170 = vpop.f32.mrb[0].mxu0
        %v5171 = vpop.f32.mrb[0].mxu0
        %5172 = vdwg.mxu0
        %5173 = vmatprep.subr.bf16.mxu0 %v4953
        %5174 = vmatpush1.bf16.msra.mxu0 %v4952
        %5175 = vmatprep.subr.bf16.mxu0 %v4969
        %5176 = vmatpush1.bf16.msra.mxu0 %v4968
        %5177 = vmatprep.subr.bf16.mxu0 %v4985
        %5178 = vmatpush1.bf16.msra.mxu0 %v4984
        %5179 = vmatprep.subr.bf16.mxu0 %v5001
        %5180 = vmatpush1.bf16.msra.mxu0 %v5000
        %5181 = vmatprep.subr.bf16.mxu0 %v2377
        %5182 = vmatpush1.bf16.msra.mxu0 %v2376
        %5183 = vmatprep.subr.bf16.mxu0 %v2393
        %5184 = vmatpush1.bf16.msra.mxu0 %v2392
        %5185 = vmatprep.subr.bf16.mxu0 %v2409
        %5186 = vmatpush1.bf16.msra.mxu0 %v2408
        %5187 = vmatprep.subr.bf16.mxu0 %v2425
        %5188 = vmatpush1.bf16.msra.mxu0 %v2424
        %5189 = vmatprep.subr.bf16.mxu0 0
        %5190 = vmatpush1.bf16.msra.mxu0 0
        %5191 = vmatprep.subr.bf16.mxu0 0
        %5192 = vmatpush1.bf16.msra.mxu0 0
        %5193 = vmatprep.subr.bf16.mxu0 0
        %5194 = vmatpush1.bf16.msra.mxu0 0
        %5195 = vmatprep.subr.bf16.mxu0 0
        %5196 = vmatpush1.bf16.msra.mxu0 0
        %5197 = vmatprep.subr.bf16.mxu0 0
        %5198 = vmatpush1.bf16.msra.mxu0 0
        %5199 = vmatprep.subr.bf16.mxu0 0
        %5200 = vmatpush1.bf16.msra.mxu0 0
        %5201 = vmatprep.subr.bf16.mxu0 0
        %5202 = vmatpush1.bf16.msra.mxu0 0
        %5203 = vmatprep.subr.bf16.mxu0 0
        %5204 = vmatpush1.bf16.msra.mxu0 0
        %5205 = vmatprep.mubr.bf16.mxu0 0
        %5206 = vmatmul.mubr.bf16.gmra.mrb[0].mxu0 %v5008
        %v5207 = vpop.f32.mrb[0].mxu0
        %v5208 = vadd.f32 0.0, %v5207
        %v5209 = vpop.f32.mrb[0].mxu0
        %v5210 = vadd.f32 0.0, %v5209
        %v5211 = vpop.f32.mrb[0].mxu0
        %v5212 = vpop.f32.mrb[0].mxu0
        %5213 = vdwg.mxu0
        %5214 = vmatprep.subr.bf16.mxu0 %v4955
        %5215 = vmatpush1.bf16.msra.mxu0 %v4954
        %5216 = vmatprep.subr.bf16.mxu0 %v4971
        %5217 = vmatpush1.bf16.msra.mxu0 %v4970
        %5218 = vmatprep.subr.bf16.mxu0 %v4987
        %5219 = vmatpush1.bf16.msra.mxu0 %v4986
        %5220 = vmatprep.subr.bf16.mxu0 %v5003
        %5221 = vmatpush1.bf16.msra.mxu0 %v5002
        %5222 = vmatprep.subr.bf16.mxu0 %v2379
        %5223 = vmatpush1.bf16.msra.mxu0 %v2378
        %5224 = vmatprep.subr.bf16.mxu0 %v2395
        %5225 = vmatpush1.bf16.msra.mxu0 %v2394
        %5226 = vmatprep.subr.bf16.mxu0 %v2411
        %5227 = vmatpush1.bf16.msra.mxu0 %v2410
        %5228 = vmatprep.subr.bf16.mxu0 %v2427
        %5229 = vmatpush1.bf16.msra.mxu0 %v2426
        %5230 = vmatprep.subr.bf16.mxu0 0
        %5231 = vmatpush1.bf16.msra.mxu0 0
        %5232 = vmatprep.subr.bf16.mxu0 0
        %5233 = vmatpush1.bf16.msra.mxu0 0
        %5234 = vmatprep.subr.bf16.mxu0 0
        %5235 = vmatpush1.bf16.msra.mxu0 0
        %5236 = vmatprep.subr.bf16.mxu0 0
        %5237 = vmatpush1.bf16.msra.mxu0 0
        %5238 = vmatprep.subr.bf16.mxu0 0
        %5239 = vmatpush1.bf16.msra.mxu0 0
        %5240 = vmatprep.subr.bf16.mxu0 0
        %5241 = vmatpush1.bf16.msra.mxu0 0
        %5242 = vmatprep.subr.bf16.mxu0 0
        %5243 = vmatpush1.bf16.msra.mxu0 0
        %5244 = vmatprep.subr.bf16.mxu0 0
        %5245 = vmatpush1.bf16.msra.mxu0 0
        %5246 = vmatprep.mubr.bf16.mxu0 0
        %5247 = vmatmul.mubr.bf16.gmra.mrb[0].mxu0 %v5008
        %v5248 = vpop.f32.mrb[0].mxu0
        %v5249 = vadd.f32 0.0, %v5248
        %v5250 = vpop.f32.mrb[0].mxu0
        %v5251 = vadd.f32 0.0, %v5250
        %v5252 = vpop.f32.mrb[0].mxu0
        %v5253 = vpop.f32.mrb[0].mxu0
        %5254 = vdwg.mxu0
        %5255 = vmatprep.subr.bf16.mxu0 %v4957
        %5256 = vmatpush1.bf16.msra.mxu0 %v4956
        %5257 = vmatprep.subr.bf16.mxu0 %v4973
        %5258 = vmatpush1.bf16.msra.mxu0 %v4972
        %5259 = vmatprep.subr.bf16.mxu0 %v4989
        %5260 = vmatpush1.bf16.msra.mxu0 %v4988
        %5261 = vmatprep.subr.bf16.mxu0 %v5005
        %5262 = vmatpush1.bf16.msra.mxu0 %v5004
        %5263 = vmatprep.subr.bf16.mxu0 %v2381
        %5264 = vmatpush1.bf16.msra.mxu0 %v2380
        %5265 = vmatprep.subr.bf16.mxu0 %v2397
        %5266 = vmatpush1.bf16.msra.mxu0 %v2396
        %5267 = vmatprep.subr.bf16.mxu0 %v2413
        %5268 = vmatpush1.bf16.msra.mxu0 %v2412
        %5269 = vmatprep.subr.bf16.mxu0 %v2429
        %5270 = vmatpush1.bf16.msra.mxu0 %v2428
        %5271 = vmatprep.subr.bf16.mxu0 0
        %5272 = vmatpush1.bf16.msra.mxu0 0
        %5273 = vmatprep.subr.bf16.mxu0 0
        %5274 = vmatpush1.bf16.msra.mxu0 0
        %5275 = vmatprep.subr.bf16.mxu0 0
        %5276 = vmatpush1.bf16.msra.mxu0 0
        %5277 = vmatprep.subr.bf16.mxu0 0
        %5278 = vmatpush1.bf16.msra.mxu0 0
        %5279 = vmatprep.subr.bf16.mxu0 0
        %5280 = vmatpush1.bf16.msra.mxu0 0
        %5281 = vmatprep.subr.bf16.mxu0 0
        %5282 = vmatpush1.bf16.msra.mxu0 0
        %5283 = vmatprep.subr.bf16.mxu0 0
        %5284 = vmatpush1.bf16.msra.mxu0 0
        %5285 = vmatprep.subr.bf16.mxu0 0
        %5286 = vmatpush1.bf16.msra.mxu0 0
        %5287 = vmatprep.mubr.bf16.mxu0 0
        %5288 = vmatmul.mubr.bf16.gmra.mrb[0].mxu0 %v5008
        %v5289 = vpop.f32.mrb[0].mxu0
        %v5290 = vadd.f32 0.0, %v5289
        %v5291 = vpop.f32.mrb[0].mxu0
        %v5292 = vadd.f32 0.0, %v5291
        %v5293 = vpop.f32.mrb[0].mxu0
        %v5294 = vpop.f32.mrb[0].mxu0
        %5295 = vdwg.mxu0
        %5296 = vmatprep.subr.bf16.mxu0 %v4959
        %5297 = vmatpush1.bf16.msra.mxu0 %v4958
        %5298 = vmatprep.subr.bf16.mxu0 %v4975
        %5299 = vmatpush1.bf16.msra.mxu0 %v4974
        %5300 = vmatprep.subr.bf16.mxu0 %v4991
        %5301 = vmatpush1.bf16.msra.mxu0 %v4990
        %5302 = vmatprep.subr.bf16.mxu0 %v5007
        %5303 = vmatpush1.bf16.msra.mxu0 %v5006
        %5304 = vmatprep.subr.bf16.mxu0 %v2383
        %5305 = vmatpush1.bf16.msra.mxu0 %v2382
        %5306 = vmatprep.subr.bf16.mxu0 %v2399
        %5307 = vmatpush1.bf16.msra.mxu0 %v2398
        %5308 = vmatprep.subr.bf16.mxu0 %v2415
        %5309 = vmatpush1.bf16.msra.mxu0 %v2414
        %5310 = vmatprep.subr.bf16.mxu0 %v2431
        %5311 = vmatpush1.bf16.msra.mxu0 %v2430
        %5312 = vmatprep.subr.bf16.mxu0 0
        %5313 = vmatpush1.bf16.msra.mxu0 0
        %5314 = vmatprep.subr.bf16.mxu0 0
        %5315 = vmatpush1.bf16.msra.mxu0 0
        %5316 = vmatprep.subr.bf16.mxu0 0
        %5317 = vmatpush1.bf16.msra.mxu0 0
        %5318 = vmatprep.subr.bf16.mxu0 0
        %5319 = vmatpush1.bf16.msra.mxu0 0
        %5320 = vmatprep.subr.bf16.mxu0 0
        %5321 = vmatpush1.bf16.msra.mxu0 0
        %5322 = vmatprep.subr.bf16.mxu0 0
        %5323 = vmatpush1.bf16.msra.mxu0 0
        %5324 = vmatprep.subr.bf16.mxu0 0
        %5325 = vmatpush1.bf16.msra.mxu0 0
        %5326 = vmatprep.subr.bf16.mxu0 0
        %5327 = vmatpush1.bf16.msra.mxu0 0
        %5328 = vmatprep.mubr.bf16.mxu0 0
        %5329 = vmatmul.mubr.bf16.gmra.mrb[0].mxu0 %v5008
        %v5330 = vpop.f32.mrb[0].mxu0
        %v5331 = vadd.f32 0.0, %v5330
        %v5332 = vpop.f32.mrb[0].mxu0
        %v5333 = vadd.f32 0.0, %v5332
        %v5334 = vpop.f32.mrb[0].mxu0
        %v5335 = vpop.f32.mrb[0].mxu0
        %5336 = vdwg.mxu0
        %5337 = vst [vmem:[%s329] sm:$0xff] %v5044
        %5338 = vst [vmem:[%s329 + $0x8] sm:$0xff] %v5046
        %5339 = vst [vmem:[%s329 + $0x10] sm:$0xff] %v5085
        %5340 = vst [vmem:[%s329 + $0x18] sm:$0xff] %v5087
        %5341 = vst [vmem:[%s329 + $0x20] sm:$0xff] %v5126
        %5342 = vst [vmem:[%s329 + $0x28] sm:$0xff] %v5128
        %5343 = vst [vmem:[%s329 + $0x30] sm:$0xff] %v5167
        %5344 = vst [vmem:[%s329 + $0x38] sm:$0xff] %v5169
        %5345 = vst [vmem:[%s329 + $0x40] sm:$0xff] %v5208
        %5346 = vst [vmem:[%s329 + $0x48] sm:$0xff] %v5210
        %5347 = vst [vmem:[%s329 + $0x50] sm:$0xff] %v5249
        %5348 = vst [vmem:[%s329 + $0x58] sm:$0xff] %v5251
        %5349 = vst [vmem:[%s329 + $0x60] sm:$0xff] %v5290
        %5350 = vst [vmem:[%s329 + $0x68] sm:$0xff] %v5292
        %5351 = vst [vmem:[%s329 + $0x70] sm:$0xff] %v5331
        %5352 = vst [vmem:[%s329 + $0x78] sm:$0xff] %v5333
        %s5353 = sand.u32 %s185, 1
        %s5354 = scalar_lea.sflag [#allocation4], %s5353
        %s5355 = sand.u32 %s185, 1
        %s5356 = smul.addr %s5355, 128
        %s5357 = scalar_lea.vmem [#allocation8], %s5356
        // Predicated region
        $region61: #{tpu_custom_call.1} parent=47 // pred_check
          %p5358 = pneg %p195
        $region62: #{tpu_custom_call.1} parent=47 // pred_check_branch
          %5360 = sbr.rel (%p5358) target = $region64
        $region63: #{tpu_custom_call.1} parent=47 // pred_region
          %s5361 = smul.u32 16, %s25
          %s5362 = ssub.s32 20, %s5361
          %p5363 = scmp.lt.s32.totalorder %s5362, 16
          %s5364 = scalar_select %p5363, %s5362, 16
          %s5365 = smul.u32 128, %s5364
          %s5367 = ssub.s32 2048, %s5365
          %5368 = vsyncadd %s5354, %s5367
          %p5369 = scmp.ne.s32.totalorder 0, %s5365
          %s5370 = smul.addr %s5361, 128
          %s5371 = scalar_lea.hbm %s7, %s5370
          %s5372 = smul.u32 %s5364, 8
          %s5373 = sshll.u32 %s5372, 4
          %s5374 = sshll.u32 %s5357, 4
          %s5375 = int_to_ptr.vmem [resolvable:$true] %s5374
          %5377 = dma.vmem_to_hbm [thread:$0]  (%p5369), %s5375, %s5373, %s5371, %s5354
        $region64: #{tpu_custom_call.1} parent=47 // pred_fallthru
          _
      $region48: #{tpu_custom_call.1} parent=5 // pred_fallthru
        _
      %p5378 = scmp.le.s32.totalorder 2, %s20
      // Predicated region
      $region65: #{tpu_custom_call.1} parent=5 // pred_check
        %p5379 = pneg %p5378
      $region66: #{tpu_custom_call.1} parent=5 // pred_check_branch
        %5381 = sbr.rel (%p5379) target = $region68
      $region67: #{tpu_custom_call.1} parent=5 // pred_region
        %s5382 = ssub.s32 %s20, 2
        // Predicated region
        $region69: #{tpu_custom_call.1} parent=67 // pred_check
          %p5383 = pneg %p201
        $region70: #{tpu_custom_call.1} parent=67 // pred_check_branch
          %5385 = sbr.rel (%p5383) target = $region72
        $region71: #{tpu_custom_call.1} parent=67 // pred_region
          %s5386 = sand.u32 %s186, 1
          %s5387 = scalar_lea.sflag [#allocation4], %s5386
          %s5388 = sand.u32 %s186, 1
          %s5389 = smul.addr %s5388, 128
          %s5390 = scalar_lea.vmem [#allocation8], %s5389
          %5391 = dma.done %s5387, 2048
        $region72: #{tpu_custom_call.1} parent=67 // pred_fallthru
          _
      $region68: #{tpu_custom_call.1} parent=5 // pred_fallthru
        _
    $region6: #{tpu_custom_call.1} parent=1 // loop_footer
      %s24 = sadd.s32 1, %s20
    $region7: #{tpu_custom_call.1} parent=1 // loop_footer_branch
      %19 = sbr.rel target = $region3
    $region8: #{tpu_custom_call.1} parent=1 // loop_exit
      _
    %5392 = vsyncpa [#allocation3], 1
    %s5393 = scalar_lea.sflag [#allocation3], 1
    %5394 = vsyncpa %s5393, 1
    %5395 = vsyncpa [#allocation6], 1
    %5396 = vsyncpa [#allocation4], 1
    %s5397 = scalar_lea.sflag [#allocation4], 1
    %5398 = vsyncpa %s5397, 1

</llo_original>
